<compile_context>
chip_gen: v7x
topology: tpu7x:2x2x1
jax: 0.10.0
libtpu: 0.0.40
codegen_flags: <defaults>
</compile_context>

<pallas_src>
import jax
import jax.numpy as jnp
from jax import lax
from jax.experimental import pallas as pl
from jax.experimental.pallas import tpu as pltpu

# ---- constants hard-coded in the PyTorch file -------------------------------
N_PRIME = 512          # n_prime
CONV_FILTERS = 256     # decoder_conv_filters
EMBEDDING_DIM = 256    # embedding_dim
HIDDEN_SIZE = 256      # hidden_size default (== n)
KERNEL_LOW, PAD_LOW = 11, 5
KERNEL_HIGH, PAD_HIGH = 7, 3


# =============================================================================
# Fused decoder-step kernel
# =============================================================================
def _sigmoid(x):
    return 1.0 / (1.0 + jnp.exp(-x))


def _gru_cell(x_gates, h_gates, h_prev):
    """PyTorch GRU cell; gate order (r | z | n), x_gates/h_gates include biases."""
    H = h_prev.shape[-1]
    r = _sigmoid(x_gates[:, :H] + h_gates[:, :H])
    z = _sigmoid(x_gates[:, H:2 * H] + h_gates[:, H:2 * H])
    n = jnp.tanh(x_gates[:, 2 * H:] + r * h_gates[:, 2 * H:])
    return (1.0 - z) * n + z * h_prev


def _decoder_step_kernel(
    tok_ref,                                                   # SMEM (B,) int32
    emb_ref, h0_ref,
    w_ih1_ref, w_hh1_ref, b_ih1_ref, b_hh1_ref,                # GRU1
    u_pred_t_ref,
    a_low_cl_ref, a_low_lc_ref, pat_low_ref,
    ua_low_ref, ufc_low_ref, bf_low_ref, nu_low_ref,           # coverage low
    a_high_cl_ref, a_high_lc_ref, pat_high_ref,
    ua_high_ref, ufc_high_ref, bf_high_ref, nu_high_ref,       # coverage high
    w_ih2l_ref, w_ih2h_ref, w_hh2_ref, b_ih2_ref, b_hh2_ref,   # GRU2
    w_s_ref, w_cl_ref, w_ch_ref, w_o_ref,                      # output head
    logits_ref, hid_ref, al_low_ref, al_high_ref):
    f32 = jnp.float32
    B, H = h0_ref.shape
    NC, E = emb_ref.shape

    # -- embedding lookup: one-hot (from SMEM token ids) x table -> MXU -------
    iota_nc = lax.broadcasted_iota(jnp.int32, (1, NC), 1)
    rows = [(iota_nc == tok_ref[b]).astype(f32) for b in range(B)]
    onehot = rows[0] if B == 1 else jnp.concatenate(rows, axis=0)          # (B,NC)
    embedded = jnp.dot(onehot, emb_ref[...], preferred_element_type=f32)   # (B,E) perm layout

    # -- GRU1 ------------------------------------------------------------------
    h0 = h0_ref[...]
    xg1 = jnp.dot(embedded, w_ih1_ref[...], preferred_element_type=f32) + b_ih1_ref[...]
    hg1 = jnp.dot(h0, w_hh1_ref[...], preferred_element_type=f32) + b_hh1_ref[...]
    pred = _gru_cell(xg1, hg1, h0)                                         # (B,H)

    u_pred = jnp.dot(pred, u_pred_t_ref[...], preferred_element_type=f32)  # (B,n')

    # -- coverage attention (shared helper) ------------------------------------
    def coverage(a_cl_ref, a_lc_ref, pat_ref, uaT_ref, ufc_ref, bf_ref, nu_ref):
        _, C, L = a_cl_ref.shape
        Np = uaT_ref.shape[1]
        u_a = jnp.dot(a_lc_ref[...], uaT_ref[...], preferred_element_type=f32)      # (B*L,n')
        u_f = jnp.dot(pat_ref[...], ufc_ref[...], preferred_element_type=f32) + bf_ref[...]
        pre = (u_a + u_f).reshape(B, L, Np) + u_pred[:, None, :]
        tan = jnp.tanh(pre)                                                          # (B,L,n')
        e = jnp.sum(tan * nu_ref[...][None], axis=-1)                                # (B,L)
        m = jnp.max(e, axis=-1, keepdims=True)
        p = jnp.exp(e - m)
        alpha = p / jnp.sum(p, axis=-1, keepdims=True)                               # (B,L)
        ctx = jnp.sum(a_cl_ref[...] * alpha[:, None, :], axis=-1)                    # (B,C)
        return ctx, alpha

    ctx_low, alpha_low = coverage(a_low_cl_ref, a_low_lc_ref, pat_low_ref,
                                  ua_low_ref, ufc_low_ref, bf_low_ref, nu_low_ref)
    ctx_high, alpha_high = coverage(a_high_cl_ref, a_high_lc_ref, pat_high_ref,
                                    ua_high_ref, ufc_high_ref, bf_high_ref, nu_high_ref)

    # -- GRU2 (context = [ctx_low | ctx_high]; weights pre-split, no concat) ---
    xg2 = (jnp.dot(ctx_low, w_ih2l_ref[...], preferred_element_type=f32)
           + jnp.dot(ctx_high, w_ih2h_ref[...], preferred_element_type=f32)
           + b_ih2_ref[...])
    hg2 = jnp.dot(pred, w_hh2_ref[...], preferred_element_type=f32) + b_hh2_ref[...]
    new_h = _gru_cell(xg2, hg2, pred)                                      # (B,H)

    # -- output head in the even|odd-permuted embedding layout -----------------
    w_s = jnp.dot(new_h, w_s_ref[...], preferred_element_type=f32)
    w_c = (jnp.dot(ctx_low, w_cl_ref[...], preferred_element_type=f32)
           + jnp.dot(ctx_high, w_ch_ref[...], preferred_element_type=f32))
    o = embedded + w_s + w_c                                               # (B,E) perm layout
    half = E // 2
    mx = jnp.maximum(o[:, :half], o[:, half:])                             # Maxout(pool=2)
    logits_ref[...] = jnp.dot(mx, w_o_ref[...], preferred_element_type=f32)
    hid_ref[...] = new_h
    al_low_ref[...] = alpha_low
    al_high_ref[...] = alpha_high


# =============================================================================
# Wrapper: layout plumbing (reshapes, im2col of the coverage state) + pallas_call
# =============================================================================
def _im2col_same(x, k, pad):
    """x: (B, W, H) -> (B, W*H, k*k) patches of the zero-padded image."""
    B, W, H = x.shape
    xp = jnp.pad(x, ((0, 0), (pad, pad), (pad, pad)))
    cols = []
    for ky in range(k):
        for kx in range(k):
            cols.append(lax.slice(xp, (0, ky, kx), (B, ky + W, kx + H)))
    return jnp.stack(cols, axis=-1).reshape(B, W * H, k * k)


def decoder_step_pallas(x_tok, hidden, low_res, high_res,
                        alpha_low_state, alpha_high_state, prep):
    B = x_tok.shape[0]
    tok = x_tok.reshape(B).astype(jnp.int32)
    Cl, Wl, Hl = low_res.shape[1:]
    Ch, Wh, Hh = high_res.shape[1:]
    Ll, Lh = Wl * Hl, Wh * Hh
    H = hidden.shape[-1]
    NC = prep["emb"].shape[0]

    # layout plumbing (tiny): channel-last copies for the matmuls + channel-first
    # copies for the alpha-weighted context reduction; im2col of the alpha state.
    a_low_cl = low_res.reshape(B, Cl, Ll)
    a_low_lc = jnp.swapaxes(a_low_cl, 1, 2).reshape(B * Ll, Cl)
    a_high_cl = high_res.reshape(B, Ch, Lh)
    a_high_lc = jnp.swapaxes(a_high_cl, 1, 2).reshape(B * Lh, Ch)
    pat_low = _im2col_same(alpha_low_state.sum(axis=1).reshape(B, Wl, Hl),
                           KERNEL_LOW, PAD_LOW).reshape(B * Ll, KERNEL_LOW ** 2)
    pat_high = _im2col_same(alpha_high_state.sum(axis=1).reshape(B, Wh, Hh),
                            KERNEL_HIGH, PAD_HIGH).reshape(B * Lh, KERNEL_HIGH ** 2)
    h0 = hidden.reshape(B, H)

    vmem = pl.BlockSpec(memory_space=pltpu.MemorySpace.VMEM)
    smem = pl.BlockSpec(memory_space=pltpu.MemorySpace.SMEM)

    inputs = (
        tok, prep["emb"], h0,
        prep["w_ih1"], prep["w_hh1"], prep["b_ih1"], prep["b_hh1"],
        prep["u_pred_t"],
        a_low_cl, a_low_lc, pat_low,
        prep["ua_low"], prep["ufc_low"], prep["bf_low"], prep["nu_low"],
        a_high_cl, a_high_lc, pat_high,
        prep["ua_high"], prep["ufc_high"], prep["bf_high"], prep["nu_high"],
        prep["w_ih2l"], prep["w_ih2h"], prep["w_hh2"], prep["b_ih2"], prep["b_hh2"],
        prep["w_s"], prep["w_cl"], prep["w_ch"], prep["w_o"],
    )
    in_specs = [smem] + [vmem] * (len(inputs) - 1)

    logits, new_h, al_l, al_h = pl.pallas_call(
        _decoder_step_kernel,
        out_shape=(
            jax.ShapeDtypeStruct((B, NC), jnp.float32),
            jax.ShapeDtypeStruct((B, H), jnp.float32),
            jax.ShapeDtypeStruct((B, Ll), jnp.float32),
            jax.ShapeDtypeStruct((B, Lh), jnp.float32),
        ),
        in_specs=in_specs,
        out_specs=(vmem, vmem, vmem, vmem),
        compiler_params=pltpu.CompilerParams(vmem_limit_bytes=32 * 1024 * 1024),
    )(*inputs)
    # match torch return: (out, new_hidden.transpose(0,1)) ; alphas are the state update
    return logits, new_h[None, :, :], al_l, al_h


# =============================================================================
# Parameters (deterministic, synthetic) + kernel-layout preparation
# =============================================================================
def init_decoder_params(key, num_classes, low_res_shape, high_res_shape):
    Cl, Ch = low_res_shape[0], high_res_shape[0]
    ctx = Cl + Ch
    H, E, Np, F = HIDDEN_SIZE, EMBEDDING_DIM, N_PRIME, CONV_FILTERS
    ks = iter(jax.random.split(key, 24))
    nrm = lambda shape, scale: scale * jax.random.normal(next(ks), shape, jnp.float32)
    return dict(
        embedding=nrm((num_classes, E), 0.1),
        gru1_w_ih=nrm((3 * H, E), E ** -0.5),
        gru1_w_hh=nrm((3 * H, H), H ** -0.5),
        gru1_b_ih=nrm((3 * H,), 0.1),
        gru1_b_hh=nrm((3 * H,), 0.1),
        gru2_w_ih=nrm((3 * H, ctx), ctx ** -0.5),
        gru2_w_hh=nrm((3 * H, H), H ** -0.5),
        gru2_b_ih=nrm((3 * H,), 0.1),
        gru2_b_hh=nrm((3 * H,), 0.1),
        U_pred=nrm((Np, H), H ** -0.5),
        conv_w_low=nrm((F, 1, KERNEL_LOW, KERNEL_LOW), 1.0 / KERNEL_LOW),
        conv_b_low=nrm((F,), 0.1),
        U_a_low=nrm((Np, Cl), Cl ** -0.5),
        U_f_low=nrm((Np, F), F ** -0.5),
        nu_low=nrm((Np,), Np ** -0.5),
        conv_w_high=nrm((F, 1, KERNEL_HIGH, KERNEL_HIGH), 1.0 / KERNEL_HIGH),
        conv_b_high=nrm((F,), 0.1),
        U_a_high=nrm((Np, Ch), Ch ** -0.5),
        U_f_high=nrm((Np, F), F ** -0.5),
        nu_high=nrm((Np,), Np ** -0.5),
        W_o=nrm((num_classes, E // 2), (E // 2) ** -0.5),
        W_s=nrm((E, H), H ** -0.5),
        W_c=nrm((E, ctx), ctx ** -0.5),
    )


def prepare_params(p, Cl, Ch):
    """Fold/transpose/permute parameters into the kernel layout (one-time cost)."""
    E, F = EMBEDDING_DIM, CONV_FILTERS
    perm = jnp.concatenate([jnp.arange(0, E, 2), jnp.arange(1, E, 2)])  # [even|odd]
    with jax.default_matmul_precision("float32"):
        wc_low = p["conv_w_low"].reshape(F, -1)    # (F, 121)
        wc_high = p["conv_w_high"].reshape(F, -1)  # (F, 49)
        return dict(
            emb=p["embedding"][:, perm],
            w_ih1=p["gru1_w_ih"].T[perm, :],
            w_hh1=p["gru1_w_hh"].T,
            b_ih1=p["gru1_b_ih"][None, :],
            b_hh1=p["gru1_b_hh"][None, :],
            u_pred_t=p["U_pred"].T,
            ua_low=p["U_a_low"].T,
            ufc_low=jnp.dot(wc_low.T, p["U_f_low"].T),                 # (121, n')
            bf_low=jnp.dot(p["U_f_low"], p["conv_b_low"])[None, :],    # (1, n')
            nu_low=p["nu_low"][None, :],
            ua_high=p["U_a_high"].T,
            ufc_high=jnp.dot(wc_high.T, p["U_f_high"].T),              # (49, n')
            bf_high=jnp.dot(p["U_f_high"], p["conv_b_high"])[None, :],
            nu_high=p["nu_high"][None, :],
            w_ih2l=p["gru2_w_ih"].T[:Cl, :],
            w_ih2h=p["gru2_w_ih"].T[Cl:, :],
            w_hh2=p["gru2_w_hh"].T,
            b_ih2=p["gru2_b_ih"][None, :],
            b_hh2=p["gru2_b_hh"][None, :],
            w_s=p["W_s"].T[:, perm],
            w_cl=p["W_c"].T[:Cl][:, perm],
            w_ch=p["W_c"].T[Cl:][:, perm],
            w_o=p["W_o"].T,
        )


# =============================================================================
# Pure-JAX reference (un-fused, un-permuted) for correctness checking
# =============================================================================
def _gru_cell_ref(x, h, w_ih, w_hh, b_ih, b_hh):
    gi = x @ w_ih.T + b_ih
    gh = h @ w_hh.T + b_hh
    H = h.shape[-1]
    r = jax.nn.sigmoid(gi[:, :H] + gh[:, :H])
    z = jax.nn.sigmoid(gi[:, H:2 * H] + gh[:, H:2 * H])
    n = jnp.tanh(gi[:, 2 * H:] + r * gh[:, 2 * H:])
    return (1.0 - z) * n + z * h


def _coverage_ref(x, u_pred, alpha_state, conv_w, conv_b, U_a, U_f, nu, pad):
    B, C, W, Hh = x.shape
    L = W * Hh
    F = conv_w.shape[0]
    alpha_sum = alpha_state.sum(axis=1).reshape(B, 1, W, Hh)
    conv_out = lax.conv_general_dilated(
        alpha_sum, conv_w, window_strides=(1, 1),
        padding=[(pad, pad), (pad, pad)],
        dimension_numbers=("NCHW", "OIHW", "NCHW"))
    conv_out = (conv_out + conv_b[None, :, None, None]).reshape(B, F, L)
    a = x.reshape(B, C, L)
    u_a = jnp.einsum("nc,bcl->bnl", U_a, a)
    u_f = jnp.einsum("nf,bfl->bnl", U_f, conv_out)
    tan = jnp.tanh(u_pred[:, :, None] + u_a + u_f)
    e = jnp.einsum("n,bnl->bl", nu, tan)
    alpha_t = jax.nn.softmax(e, axis=1)
    ctx = jnp.einsum("bl,bcl->bc", alpha_t, a)
    return ctx, alpha_t


def reference_forward(x_tok, hidden, low_res, high_res,
                      alpha_low_state, alpha_high_state, p):
    with jax.default_matmul_precision("float32"):
        B = x_tok.shape[0]
        emb = p["embedding"][x_tok.reshape(B)]
        h0 = hidden.reshape(B, -1)
        pred = _gru_cell_ref(emb, h0, p["gru1_w_ih"], p["gru1_w_hh"],
                             p["gru1_b_ih"], p["gru1_b_hh"])
        u_pred = pred @ p["U_pred"].T
        ctx_low, al_low = _coverage_ref(low_res, u_pred, alpha_low_state,
                                        p["conv_w_low"], p["conv_b_low"],
                                        p["U_a_low"], p["U_f_low"], p["nu_low"], PAD_LOW)
        ctx_high, al_high = _coverage_ref(high_res, u_pred, alpha_high_state,
                                          p["conv_w_high"], p["conv_b_high"],
                                          p["U_a_high"], p["U_f_high"], p["nu_high"], PAD_HIGH)
        context = jnp.concatenate([ctx_low, ctx_high], axis=1)
        new_h = _gru_cell_ref(context, pred, p["gru2_w_ih"], p["gru2_w_hh"],
                              p["gru2_b_ih"], p["gru2_b_hh"])
        w_s = new_h @ p["W_s"].T
        w_c = context @ p["W_c"].T
        out = emb + w_s + w_c
        out = out.reshape(B, out.shape[1] // 2, 2).max(axis=-1)      # Maxout(2)
        logits = out @ p["W_o"].T
        return logits, new_h[None, :, :], al_low, al_high


# =============================================================================
if __name__ == "__main__":
    key = jax.random.PRNGKey(0)
    k_par, k_tok, k_hid, k_low, k_high = jax.random.split(key, 5)

    B = 2
    NUM_CLASSES = 128                 # lane-dense logits
    low_res_shape = (8, 4, 4)         # (C,  W,  H)
    high_res_shape = (16, 8, 8)       # (C', 2W, 2H)

    params = init_decoder_params(k_par, NUM_CLASSES, low_res_shape, high_res_shape)
    prep = prepare_params(params, low_res_shape[0], high_res_shape[0])

    x_tok = jax.random.randint(k_tok, (B, 1), 0, NUM_CLASSES, dtype=jnp.int32)
    hidden = 0.1 * jax.random.normal(k_hid, (1, B, HIDDEN_SIZE), jnp.float32)
    low_res = jax.random.normal(k_low, (B,) + low_res_shape, jnp.float32)
    high_res = jax.random.normal(k_high, (B,) + high_res_shape, jnp.float32)
    # CoverageAttention state right after reset_alpha(): zeros (B, 1, attn_size).
    alpha_low = jnp.zeros((B, 1, low_res_shape[1] * low_res_shape[2]), jnp.float32)
    alpha_high = jnp.zeros((B, 1, high_res_shape[1] * high_res_shape[2]), jnp.float32)

    out = jax.block_until_ready(jax.jit(decoder_step_pallas)(
        x_tok, hidden, low_res, high_res, alpha_low, alpha_high, prep))
    ref = jax.block_until_ready(jax.jit(reference_forward)(
        x_tok, hidden, low_res, high_res, alpha_low, alpha_high, params))

    for name, a, b in zip(("logits", "new_hidden", "alpha_low", "alpha_high"), out, ref):
        assert a.shape == b.shape, (name, a.shape, b.shape)
        err = float(jnp.max(jnp.abs(a - b)))
        assert jnp.allclose(a, b, atol=2e-3, rtol=2e-3), (name, err)
    # TODO(synk): the PyTorch module's in-place alpha history (self.alpha cat) and
    # .detach() are training-loop state management; alpha_t is returned instead.
    print("KERNEL_OK")
</pallas_src>

<mosaic_0001>
module attributes {stable_mosaic.version = 11 : i64} {
  func.func @_decoder_step_kernel(%arg0: memref<2xi32, #tpu.memory_space<smem>>, %arg1: memref<128x256xf32, #tpu.memory_space<vmem>>, %arg2: memref<2x256xf32, #tpu.memory_space<vmem>>, %arg3: memref<256x768xf32, #tpu.memory_space<vmem>>, %arg4: memref<256x768xf32, #tpu.memory_space<vmem>>, %arg5: memref<1x768xf32, #tpu.memory_space<vmem>>, %arg6: memref<1x768xf32, #tpu.memory_space<vmem>>, %arg7: memref<256x512xf32, #tpu.memory_space<vmem>>, %arg8: memref<2x8x16xf32, #tpu.memory_space<vmem>>, %arg9: memref<32x8xf32, #tpu.memory_space<vmem>>, %arg10: memref<32x121xf32, #tpu.memory_space<vmem>>, %arg11: memref<8x512xf32, #tpu.memory_space<vmem>>, %arg12: memref<121x512xf32, #tpu.memory_space<vmem>>, %arg13: memref<1x512xf32, #tpu.memory_space<vmem>>, %arg14: memref<1x512xf32, #tpu.memory_space<vmem>>, %arg15: memref<2x16x64xf32, #tpu.memory_space<vmem>>, %arg16: memref<128x16xf32, #tpu.memory_space<vmem>>, %arg17: memref<128x49xf32, #tpu.memory_space<vmem>>, %arg18: memref<16x512xf32, #tpu.memory_space<vmem>>, %arg19: memref<49x512xf32, #tpu.memory_space<vmem>>, %arg20: memref<1x512xf32, #tpu.memory_space<vmem>>, %arg21: memref<1x512xf32, #tpu.memory_space<vmem>>, %arg22: memref<8x768xf32, #tpu.memory_space<vmem>>, %arg23: memref<16x768xf32, #tpu.memory_space<vmem>>, %arg24: memref<256x768xf32, #tpu.memory_space<vmem>>, %arg25: memref<1x768xf32, #tpu.memory_space<vmem>>, %arg26: memref<1x768xf32, #tpu.memory_space<vmem>>, %arg27: memref<256x256xf32, #tpu.memory_space<vmem>>, %arg28: memref<8x256xf32, #tpu.memory_space<vmem>>, %arg29: memref<16x256xf32, #tpu.memory_space<vmem>>, %arg30: memref<128x128xf32, #tpu.memory_space<vmem>>, %arg31: memref<2x128xf32, #tpu.memory_space<vmem>>, %arg32: memref<2x256xf32, #tpu.memory_space<vmem>>, %arg33: memref<2x16xf32, #tpu.memory_space<vmem>>, %arg34: memref<2x64xf32, #tpu.memory_space<vmem>>) attributes {dimension_semantics = [], scalar_prefetch = 0 : i64, scratch_operands = 0 : i64, tpu.core_type = #tpu.core_type<tc>} {
    %0 = tpu.iota {dimensions = array<i32: 1>} : vector<1x128xi32>
    %c0 = arith.constant 0 : index
    %1 = memref.load %arg0[%c0] : memref<2xi32, #tpu.memory_space<smem>>
    %2 = vector.broadcast %1 : i32 to vector<1x128xi32>
    %3 = arith.cmpi eq, %0, %2 : vector<1x128xi32>
    %4 = arith.extui %3 : vector<1x128xi1> to vector<1x128xi32>
    %5 = arith.sitofp %4 : vector<1x128xi32> to vector<1x128xf32>
    %c1 = arith.constant 1 : index
    %6 = memref.load %arg0[%c1] : memref<2xi32, #tpu.memory_space<smem>>
    %7 = vector.broadcast %6 : i32 to vector<1x128xi32>
    %8 = arith.cmpi eq, %0, %7 : vector<1x128xi32>
    %9 = arith.extui %8 : vector<1x128xi1> to vector<1x128xi32>
    %10 = arith.sitofp %9 : vector<1x128xi32> to vector<1x128xf32>
    %11 = tpu.concatenate %5, %10 in 0 : vector<1x128xf32>, vector<1x128xf32> -> vector<2x128xf32>
    %c0_0 = arith.constant 0 : index
    %c0_1 = arith.constant 0 : index
    %12 = vector.load %arg1[%c0_0, %c0_1] : memref<128x256xf32, #tpu.memory_space<vmem>>, vector<128x256xf32>
    %cst = arith.constant dense<0.000000e+00> : vector<2x256xf32>
    %13 = tpu.matmul %11, %12, %cst {dimension_numbers = #tpu.dot_dimension_numbers<[1], [0], [0], [1], [0, 0, 1, 1], [], []>} : vector<2x128xf32>, vector<128x256xf32>, vector<2x256xf32> -> vector<2x256xf32>
    %c0_2 = arith.constant 0 : index
    %c0_3 = arith.constant 0 : index
    %14 = vector.load %arg2[%c0_2, %c0_3] : memref<2x256xf32, #tpu.memory_space<vmem>>, vector<2x256xf32>
    %c0_4 = arith.constant 0 : index
    %c0_5 = arith.constant 0 : index
    %15 = vector.load %arg3[%c0_4, %c0_5] : memref<256x768xf32, #tpu.memory_space<vmem>>, vector<256x768xf32>
    %cst_6 = arith.constant dense<0.000000e+00> : vector<2x768xf32>
    %16 = tpu.matmul %13, %15, %cst_6 {dimension_numbers = #tpu.dot_dimension_numbers<[1], [0], [0], [1], [0, 0, 1, 1], [], []>} : vector<2x256xf32>, vector<256x768xf32>, vector<2x768xf32> -> vector<2x768xf32>
    %c0_7 = arith.constant 0 : index
    %c0_8 = arith.constant 0 : index
    %17 = vector.load %arg5[%c0_7, %c0_8] : memref<1x768xf32, #tpu.memory_space<vmem>>, vector<1x768xf32>
    %18 = vector.broadcast %17 : vector<1x768xf32> to vector<2x768xf32>
    %19 = arith.addf %16, %18 : vector<2x768xf32>
    %c0_9 = arith.constant 0 : index
    %c0_10 = arith.constant 0 : index
    %20 = vector.load %arg4[%c0_9, %c0_10] : memref<256x768xf32, #tpu.memory_space<vmem>>, vector<256x768xf32>
    %cst_11 = arith.constant dense<0.000000e+00> : vector<2x768xf32>
    %21 = tpu.matmul %14, %20, %cst_11 {dimension_numbers = #tpu.dot_dimension_numbers<[1], [0], [0], [1], [0, 0, 1, 1], [], []>} : vector<2x256xf32>, vector<256x768xf32>, vector<2x768xf32> -> vector<2x768xf32>
    %c0_12 = arith.constant 0 : index
    %c0_13 = arith.constant 0 : index
    %22 = vector.load %arg6[%c0_12, %c0_13] : memref<1x768xf32, #tpu.memory_space<vmem>>, vector<1x768xf32>
    %23 = vector.broadcast %22 : vector<1x768xf32> to vector<2x768xf32>
    %24 = arith.addf %21, %23 : vector<2x768xf32>
    %25 = vector.extract_strided_slice %19 {offsets = [0, 0], sizes = [2, 256], strides = [1, 1]} : vector<2x768xf32> to vector<2x256xf32>
    %26 = vector.extract_strided_slice %24 {offsets = [0, 0], sizes = [2, 256], strides = [1, 1]} : vector<2x768xf32> to vector<2x256xf32>
    %27 = arith.addf %25, %26 : vector<2x256xf32>
    %cst_14 = arith.constant 0.000000e+00 : f32
    %28 = vector.broadcast %cst_14 : f32 to vector<2x256xf32>
    %29 = arith.subf %28, %27 : vector<2x256xf32>
    %30 = math.exp %29 : vector<2x256xf32>
    %cst_15 = arith.constant 1.000000e+00 : f32
    %31 = vector.broadcast %cst_15 : f32 to vector<2x256xf32>
    %32 = arith.addf %31, %30 : vector<2x256xf32>
    %cst_16 = arith.constant 1.000000e+00 : f32
    %33 = vector.broadcast %cst_16 : f32 to vector<2x256xf32>
    %34 = arith.divf %33, %32 : vector<2x256xf32>
    %35 = vector.extract_strided_slice %19 {offsets = [0, 256], sizes = [2, 256], strides = [1, 1]} : vector<2x768xf32> to vector<2x256xf32>
    %36 = vector.extract_strided_slice %24 {offsets = [0, 256], sizes = [2, 256], strides = [1, 1]} : vector<2x768xf32> to vector<2x256xf32>
    %37 = arith.addf %35, %36 : vector<2x256xf32>
    %cst_17 = arith.constant 0.000000e+00 : f32
    %38 = vector.broadcast %cst_17 : f32 to vector<2x256xf32>
    %39 = arith.subf %38, %37 : vector<2x256xf32>
    %40 = math.exp %39 : vector<2x256xf32>
    %cst_18 = arith.constant 1.000000e+00 : f32
    %41 = vector.broadcast %cst_18 : f32 to vector<2x256xf32>
    %42 = arith.addf %41, %40 : vector<2x256xf32>
    %cst_19 = arith.constant 1.000000e+00 : f32
    %43 = vector.broadcast %cst_19 : f32 to vector<2x256xf32>
    %44 = arith.divf %43, %42 : vector<2x256xf32>
    %45 = vector.extract_strided_slice %19 {offsets = [0, 512], sizes = [2, 256], strides = [1, 1]} : vector<2x768xf32> to vector<2x256xf32>
    %46 = vector.extract_strided_slice %24 {offsets = [0, 512], sizes = [2, 256], strides = [1, 1]} : vector<2x768xf32> to vector<2x256xf32>
    %47 = arith.mulf %34, %46 : vector<2x256xf32>
    %48 = arith.addf %45, %47 : vector<2x256xf32>
    %49 = math.tanh %48 : vector<2x256xf32>
    %cst_20 = arith.constant 1.000000e+00 : f32
    %50 = vector.broadcast %cst_20 : f32 to vector<2x256xf32>
    %51 = arith.subf %50, %44 : vector<2x256xf32>
    %52 = arith.mulf %51, %49 : vector<2x256xf32>
    %53 = arith.mulf %44, %14 : vector<2x256xf32>
    %54 = arith.addf %52, %53 : vector<2x256xf32>
    %c0_21 = arith.constant 0 : index
    %c0_22 = arith.constant 0 : index
    %55 = vector.load %arg7[%c0_21, %c0_22] : memref<256x512xf32, #tpu.memory_space<vmem>>, vector<256x512xf32>
    %cst_23 = arith.constant dense<0.000000e+00> : vector<2x512xf32>
    %56 = tpu.matmul %54, %55, %cst_23 {dimension_numbers = #tpu.dot_dimension_numbers<[1], [0], [0], [1], [0, 0, 1, 1], [], []>} : vector<2x256xf32>, vector<256x512xf32>, vector<2x512xf32> -> vector<2x512xf32>
    %c0_24 = arith.constant 0 : index
    %c0_25 = arith.constant 0 : index
    %57 = vector.load %arg9[%c0_24, %c0_25] : memref<32x8xf32, #tpu.memory_space<vmem>>, vector<32x8xf32>
    %c0_26 = arith.constant 0 : index
    %c0_27 = arith.constant 0 : index
    %58 = vector.load %arg11[%c0_26, %c0_27] : memref<8x512xf32, #tpu.memory_space<vmem>>, vector<8x512xf32>
    %cst_28 = arith.constant dense<0.000000e+00> : vector<32x512xf32>
    %59 = tpu.matmul %57, %58, %cst_28 {dimension_numbers = #tpu.dot_dimension_numbers<[1], [0], [0], [1], [0, 0, 1, 1], [], []>} : vector<32x8xf32>, vector<8x512xf32>, vector<32x512xf32> -> vector<32x512xf32>
    %c0_29 = arith.constant 0 : index
    %c0_30 = arith.constant 0 : index
    %60 = vector.load %arg10[%c0_29, %c0_30] : memref<32x121xf32, #tpu.memory_space<vmem>>, vector<32x121xf32>
    %c0_31 = arith.constant 0 : index
    %c0_32 = arith.constant 0 : index
    %61 = vector.load %arg12[%c0_31, %c0_32] : memref<121x512xf32, #tpu.memory_space<vmem>>, vector<121x512xf32>
    %cst_33 = arith.constant dense<0.000000e+00> : vector<32x512xf32>
    %62 = tpu.matmul %60, %61, %cst_33 {dimension_numbers = #tpu.dot_dimension_numbers<[1], [0], [0], [1], [0, 0, 1, 1], [], []>} : vector<32x121xf32>, vector<121x512xf32>, vector<32x512xf32> -> vector<32x512xf32>
    %c0_34 = arith.constant 0 : index
    %c0_35 = arith.constant 0 : index
    %63 = vector.load %arg13[%c0_34, %c0_35] : memref<1x512xf32, #tpu.memory_space<vmem>>, vector<1x512xf32>
    %64 = vector.broadcast %63 : vector<1x512xf32> to vector<32x512xf32>
    %65 = arith.addf %62, %64 : vector<32x512xf32>
    %66 = arith.addf %59, %65 : vector<32x512xf32>
    %67 = vector.shape_cast %66 : vector<32x512xf32> to vector<2x16x512xf32>
    %68 = vector.shape_cast %56 : vector<2x512xf32> to vector<2x1x512xf32>
    %69 = vector.broadcast %68 : vector<2x1x512xf32> to vector<2x16x512xf32>
    %70 = arith.addf %67, %69 : vector<2x16x512xf32>
    %71 = math.tanh %70 : vector<2x16x512xf32>
    %c0_36 = arith.constant 0 : index
    %c0_37 = arith.constant 0 : index
    %72 = vector.load %arg14[%c0_36, %c0_37] : memref<1x512xf32, #tpu.memory_space<vmem>>, vector<1x512xf32>
    %73 = vector.shape_cast %72 : vector<1x512xf32> to vector<1x1x512xf32>
    %74 = vector.broadcast %73 : vector<1x1x512xf32> to vector<2x16x512xf32>
    %75 = arith.mulf %71, %74 : vector<2x16x512xf32>
    %cst_38 = arith.constant dense<0.000000e+00> : vector<2x16xf32>
    %76 = vector.multi_reduction <add>, %75, %cst_38 [2] : vector<2x16x512xf32> to vector<2x16xf32>
    %cst_39 = arith.constant dense<0xFF800000> : vector<2xf32>
    %77 = vector.multi_reduction <maximumf>, %76, %cst_39 [1] : vector<2x16xf32> to vector<2xf32>
    %78 = vector.shape_cast %77 : vector<2xf32> to vector<2x1xf32>
    %79 = vector.broadcast %78 : vector<2x1xf32> to vector<2x16xf32>
    %80 = arith.subf %76, %79 : vector<2x16xf32>
    %81 = math.exp %80 : vector<2x16xf32>
    %cst_40 = arith.constant dense<0.000000e+00> : vector<2xf32>
    %82 = vector.multi_reduction <add>, %81, %cst_40 [1] : vector<2x16xf32> to vector<2xf32>
    %83 = vector.shape_cast %82 : vector<2xf32> to vector<2x1xf32>
    %84 = vector.broadcast %83 : vector<2x1xf32> to vector<2x16xf32>
    %85 = arith.divf %81, %84 : vector<2x16xf32>
    %c0_41 = arith.constant 0 : index
    %c0_42 = arith.constant 0 : index
    %c0_43 = arith.constant 0 : index
    %86 = vector.load %arg8[%c0_41, %c0_42, %c0_43] : memref<2x8x16xf32, #tpu.memory_space<vmem>>, vector<2x8x16xf32>
    %87 = vector.shape_cast %85 : vector<2x16xf32> to vector<2x1x16xf32>
    %88 = vector.broadcast %87 : vector<2x1x16xf32> to vector<2x8x16xf32>
    %89 = arith.mulf %86, %88 : vector<2x8x16xf32>
    %cst_44 = arith.constant dense<0.000000e+00> : vector<2x8xf32>
    %90 = vector.multi_reduction <add>, %89, %cst_44 [2] : vector<2x8x16xf32> to vector<2x8xf32>
    %c0_45 = arith.constant 0 : index
    %c0_46 = arith.constant 0 : index
    %91 = vector.load %arg16[%c0_45, %c0_46] : memref<128x16xf32, #tpu.memory_space<vmem>>, vector<128x16xf32>
    %c0_47 = arith.constant 0 : index
    %c0_48 = arith.constant 0 : index
    %92 = vector.load %arg18[%c0_47, %c0_48] : memref<16x512xf32, #tpu.memory_space<vmem>>, vector<16x512xf32>
    %cst_49 = arith.constant dense<0.000000e+00> : vector<128x512xf32>
    %93 = tpu.matmul %91, %92, %cst_49 {dimension_numbers = #tpu.dot_dimension_numbers<[1], [0], [0], [1], [0, 0, 1, 1], [], []>} : vector<128x16xf32>, vector<16x512xf32>, vector<128x512xf32> -> vector<128x512xf32>
    %c0_50 = arith.constant 0 : index
    %c0_51 = arith.constant 0 : index
    %94 = vector.load %arg17[%c0_50, %c0_51] : memref<128x49xf32, #tpu.memory_space<vmem>>, vector<128x49xf32>
    %c0_52 = arith.constant 0 : index
    %c0_53 = arith.constant 0 : index
    %95 = vector.load %arg19[%c0_52, %c0_53] : memref<49x512xf32, #tpu.memory_space<vmem>>, vector<49x512xf32>
    %cst_54 = arith.constant dense<0.000000e+00> : vector<128x512xf32>
    %96 = tpu.matmul %94, %95, %cst_54 {dimension_numbers = #tpu.dot_dimension_numbers<[1], [0], [0], [1], [0, 0, 1, 1], [], []>} : vector<128x49xf32>, vector<49x512xf32>, vector<128x512xf32> -> vector<128x512xf32>
    %c0_55 = arith.constant 0 : index
    %c0_56 = arith.constant 0 : index
    %97 = vector.load %arg20[%c0_55, %c0_56] : memref<1x512xf32, #tpu.memory_space<vmem>>, vector<1x512xf32>
    %98 = vector.broadcast %97 : vector<1x512xf32> to vector<128x512xf32>
    %99 = arith.addf %96, %98 : vector<128x512xf32>
    %100 = arith.addf %93, %99 : vector<128x512xf32>
    %101 = vector.shape_cast %100 : vector<128x512xf32> to vector<2x64x512xf32>
    %102 = vector.shape_cast %56 : vector<2x512xf32> to vector<2x1x512xf32>
    %103 = vector.broadcast %102 : vector<2x1x512xf32> to vector<2x64x512xf32>
    %104 = arith.addf %101, %103 : vector<2x64x512xf32>
    %105 = math.tanh %104 : vector<2x64x512xf32>
    %c0_57 = arith.constant 0 : index
    %c0_58 = arith.constant 0 : index
    %106 = vector.load %arg21[%c0_57, %c0_58] : memref<1x512xf32, #tpu.memory_space<vmem>>, vector<1x512xf32>
    %107 = vector.shape_cast %106 : vector<1x512xf32> to vector<1x1x512xf32>
    %108 = vector.broadcast %107 : vector<1x1x512xf32> to vector<2x64x512xf32>
    %109 = arith.mulf %105, %108 : vector<2x64x512xf32>
    %cst_59 = arith.constant dense<0.000000e+00> : vector<2x64xf32>
    %110 = vector.multi_reduction <add>, %109, %cst_59 [2] : vector<2x64x512xf32> to vector<2x64xf32>
    %cst_60 = arith.constant dense<0xFF800000> : vector<2xf32>
    %111 = vector.multi_reduction <maximumf>, %110, %cst_60 [1] : vector<2x64xf32> to vector<2xf32>
    %112 = vector.shape_cast %111 : vector<2xf32> to vector<2x1xf32>
    %113 = vector.broadcast %112 : vector<2x1xf32> to vector<2x64xf32>
    %114 = arith.subf %110, %113 : vector<2x64xf32>
    %115 = math.exp %114 : vector<2x64xf32>
    %cst_61 = arith.constant dense<0.000000e+00> : vector<2xf32>
    %116 = vector.multi_reduction <add>, %115, %cst_61 [1] : vector<2x64xf32> to vector<2xf32>
    %117 = vector.shape_cast %116 : vector<2xf32> to vector<2x1xf32>
    %118 = vector.broadcast %117 : vector<2x1xf32> to vector<2x64xf32>
    %119 = arith.divf %115, %118 : vector<2x64xf32>
    %c0_62 = arith.constant 0 : index
    %c0_63 = arith.constant 0 : index
    %c0_64 = arith.constant 0 : index
    %120 = vector.load %arg15[%c0_62, %c0_63, %c0_64] : memref<2x16x64xf32, #tpu.memory_space<vmem>>, vector<2x16x64xf32>
    %121 = vector.shape_cast %119 : vector<2x64xf32> to vector<2x1x64xf32>
    %122 = vector.broadcast %121 : vector<2x1x64xf32> to vector<2x16x64xf32>
    %123 = arith.mulf %120, %122 : vector<2x16x64xf32>
    %cst_65 = arith.constant dense<0.000000e+00> : vector<2x16xf32>
    %124 = vector.multi_reduction <add>, %123, %cst_65 [2] : vector<2x16x64xf32> to vector<2x16xf32>
    %c0_66 = arith.constant 0 : index
    %c0_67 = arith.constant 0 : index
    %125 = vector.load %arg22[%c0_66, %c0_67] : memref<8x768xf32, #tpu.memory_space<vmem>>, vector<8x768xf32>
    %cst_68 = arith.constant dense<0.000000e+00> : vector<2x768xf32>
    %126 = tpu.matmul %90, %125, %cst_68 {dimension_numbers = #tpu.dot_dimension_numbers<[1], [0], [0], [1], [0, 0, 1, 1], [], []>} : vector<2x8xf32>, vector<8x768xf32>, vector<2x768xf32> -> vector<2x768xf32>
    %c0_69 = arith.constant 0 : index
    %c0_70 = arith.constant 0 : index
    %127 = vector.load %arg23[%c0_69, %c0_70] : memref<16x768xf32, #tpu.memory_space<vmem>>, vector<16x768xf32>
    %cst_71 = arith.constant dense<0.000000e+00> : vector<2x768xf32>
    %128 = tpu.matmul %124, %127, %cst_71 {dimension_numbers = #tpu.dot_dimension_numbers<[1], [0], [0], [1], [0, 0, 1, 1], [], []>} : vector<2x16xf32>, vector<16x768xf32>, vector<2x768xf32> -> vector<2x768xf32>
    %129 = arith.addf %126, %128 : vector<2x768xf32>
    %c0_72 = arith.constant 0 : index
    %c0_73 = arith.constant 0 : index
    %130 = vector.load %arg25[%c0_72, %c0_73] : memref<1x768xf32, #tpu.memory_space<vmem>>, vector<1x768xf32>
    %131 = vector.broadcast %130 : vector<1x768xf32> to vector<2x768xf32>
    %132 = arith.addf %129, %131 : vector<2x768xf32>
    %c0_74 = arith.constant 0 : index
    %c0_75 = arith.constant 0 : index
    %133 = vector.load %arg24[%c0_74, %c0_75] : memref<256x768xf32, #tpu.memory_space<vmem>>, vector<256x768xf32>
    %cst_76 = arith.constant dense<0.000000e+00> : vector<2x768xf32>
    %134 = tpu.matmul %54, %133, %cst_76 {dimension_numbers = #tpu.dot_dimension_numbers<[1], [0], [0], [1], [0, 0, 1, 1], [], []>} : vector<2x256xf32>, vector<256x768xf32>, vector<2x768xf32> -> vector<2x768xf32>
    %c0_77 = arith.constant 0 : index
    %c0_78 = arith.constant 0 : index
    %135 = vector.load %arg26[%c0_77, %c0_78] : memref<1x768xf32, #tpu.memory_space<vmem>>, vector<1x768xf32>
    %136 = vector.broadcast %135 : vector<1x768xf32> to vector<2x768xf32>
    %137 = arith.addf %134, %136 : vector<2x768xf32>
    %138 = vector.extract_strided_slice %132 {offsets = [0, 0], sizes = [2, 256], strides = [1, 1]} : vector<2x768xf32> to vector<2x256xf32>
    %139 = vector.extract_strided_slice %137 {offsets = [0, 0], sizes = [2, 256], strides = [1, 1]} : vector<2x768xf32> to vector<2x256xf32>
    %140 = arith.addf %138, %139 : vector<2x256xf32>
    %cst_79 = arith.constant 0.000000e+00 : f32
    %141 = vector.broadcast %cst_79 : f32 to vector<2x256xf32>
    %142 = arith.subf %141, %140 : vector<2x256xf32>
    %143 = math.exp %142 : vector<2x256xf32>
    %cst_80 = arith.constant 1.000000e+00 : f32
    %144 = vector.broadcast %cst_80 : f32 to vector<2x256xf32>
    %145 = arith.addf %144, %143 : vector<2x256xf32>
    %cst_81 = arith.constant 1.000000e+00 : f32
    %146 = vector.broadcast %cst_81 : f32 to vector<2x256xf32>
    %147 = arith.divf %146, %145 : vector<2x256xf32>
    %148 = vector.extract_strided_slice %132 {offsets = [0, 256], sizes = [2, 256], strides = [1, 1]} : vector<2x768xf32> to vector<2x256xf32>
    %149 = vector.extract_strided_slice %137 {offsets = [0, 256], sizes = [2, 256], strides = [1, 1]} : vector<2x768xf32> to vector<2x256xf32>
    %150 = arith.addf %148, %149 : vector<2x256xf32>
    %cst_82 = arith.constant 0.000000e+00 : f32
    %151 = vector.broadcast %cst_82 : f32 to vector<2x256xf32>
    %152 = arith.subf %151, %150 : vector<2x256xf32>
    %153 = math.exp %152 : vector<2x256xf32>
    %cst_83 = arith.constant 1.000000e+00 : f32
    %154 = vector.broadcast %cst_83 : f32 to vector<2x256xf32>
    %155 = arith.addf %154, %153 : vector<2x256xf32>
    %cst_84 = arith.constant 1.000000e+00 : f32
    %156 = vector.broadcast %cst_84 : f32 to vector<2x256xf32>
    %157 = arith.divf %156, %155 : vector<2x256xf32>
    %158 = vector.extract_strided_slice %132 {offsets = [0, 512], sizes = [2, 256], strides = [1, 1]} : vector<2x768xf32> to vector<2x256xf32>
    %159 = vector.extract_strided_slice %137 {offsets = [0, 512], sizes = [2, 256], strides = [1, 1]} : vector<2x768xf32> to vector<2x256xf32>
    %160 = arith.mulf %147, %159 : vector<2x256xf32>
    %161 = arith.addf %158, %160 : vector<2x256xf32>
    %162 = math.tanh %161 : vector<2x256xf32>
    %cst_85 = arith.constant 1.000000e+00 : f32
    %163 = vector.broadcast %cst_85 : f32 to vector<2x256xf32>
    %164 = arith.subf %163, %157 : vector<2x256xf32>
    %165 = arith.mulf %164, %162 : vector<2x256xf32>
    %166 = arith.mulf %157, %54 : vector<2x256xf32>
    %167 = arith.addf %165, %166 : vector<2x256xf32>
    %c0_86 = arith.constant 0 : index
    %c0_87 = arith.constant 0 : index
    %168 = vector.load %arg27[%c0_86, %c0_87] : memref<256x256xf32, #tpu.memory_space<vmem>>, vector<256x256xf32>
    %cst_88 = arith.constant dense<0.000000e+00> : vector<2x256xf32>
    %169 = tpu.matmul %167, %168, %cst_88 {dimension_numbers = #tpu.dot_dimension_numbers<[1], [0], [0], [1], [0, 0, 1, 1], [], []>} : vector<2x256xf32>, vector<256x256xf32>, vector<2x256xf32> -> vector<2x256xf32>
    %c0_89 = arith.constant 0 : index
    %c0_90 = arith.constant 0 : index
    %170 = vector.load %arg28[%c0_89, %c0_90] : memref<8x256xf32, #tpu.memory_space<vmem>>, vector<8x256xf32>
    %cst_91 = arith.constant dense<0.000000e+00> : vector<2x256xf32>
    %171 = tpu.matmul %90, %170, %cst_91 {dimension_numbers = #tpu.dot_dimension_numbers<[1], [0], [0], [1], [0, 0, 1, 1], [], []>} : vector<2x8xf32>, vector<8x256xf32>, vector<2x256xf32> -> vector<2x256xf32>
    %c0_92 = arith.constant 0 : index
    %c0_93 = arith.constant 0 : index
    %172 = vector.load %arg29[%c0_92, %c0_93] : memref<16x256xf32, #tpu.memory_space<vmem>>, vector<16x256xf32>
    %cst_94 = arith.constant dense<0.000000e+00> : vector<2x256xf32>
    %173 = tpu.matmul %124, %172, %cst_94 {dimension_numbers = #tpu.dot_dimension_numbers<[1], [0], [0], [1], [0, 0, 1, 1], [], []>} : vector<2x16xf32>, vector<16x256xf32>, vector<2x256xf32> -> vector<2x256xf32>
    %174 = arith.addf %171, %173 : vector<2x256xf32>
    %175 = arith.addf %13, %169 : vector<2x256xf32>
    %176 = arith.addf %175, %174 : vector<2x256xf32>
    %177 = vector.extract_strided_slice %176 {offsets = [0, 0], sizes = [2, 128], strides = [1, 1]} : vector<2x256xf32> to vector<2x128xf32>
    %178 = vector.extract_strided_slice %176 {offsets = [0, 128], sizes = [2, 128], strides = [1, 1]} : vector<2x256xf32> to vector<2x128xf32>
    %179 = arith.maximumf %177, %178 : vector<2x128xf32>
    %c0_95 = arith.constant 0 : index
    %c0_96 = arith.constant 0 : index
    %180 = vector.load %arg30[%c0_95, %c0_96] : memref<128x128xf32, #tpu.memory_space<vmem>>, vector<128x128xf32>
    %cst_97 = arith.constant dense<0.000000e+00> : vector<2x128xf32>
    %181 = tpu.matmul %179, %180, %cst_97 {dimension_numbers = #tpu.dot_dimension_numbers<[1], [0], [0], [1], [0, 0, 1, 1], [], []>} : vector<2x128xf32>, vector<128x128xf32>, vector<2x128xf32> -> vector<2x128xf32>
    %c0_98 = arith.constant 0 : index
    %c0_99 = arith.constant 0 : index
    %182 = vector.load %arg31[%c0_98, %c0_99] : memref<2x128xf32, #tpu.memory_space<vmem>>, vector<2x128xf32>
    tpu.vector_store %arg31[%c0_98, %c0_99], %181 {strides = array<i32>} : memref<2x128xf32, #tpu.memory_space<vmem>>, vector<2x128xf32>,
    %c0_100 = arith.constant 0 : index
    %c0_101 = arith.constant 0 : index
    %183 = vector.load %arg32[%c0_100, %c0_101] : memref<2x256xf32, #tpu.memory_space<vmem>>, vector<2x256xf32>
    tpu.vector_store %arg32[%c0_100, %c0_101], %167 {strides = array<i32>} : memref<2x256xf32, #tpu.memory_space<vmem>>, vector<2x256xf32>,
    %c0_102 = arith.constant 0 : index
    %c0_103 = arith.constant 0 : index
    %184 = vector.load %arg33[%c0_102, %c0_103] : memref<2x16xf32, #tpu.memory_space<vmem>>, vector<2x16xf32>
    tpu.vector_store %arg33[%c0_102, %c0_103], %85 {strides = array<i32>} : memref<2x16xf32, #tpu.memory_space<vmem>>, vector<2x16xf32>,
    %c0_104 = arith.constant 0 : index
    %c0_105 = arith.constant 0 : index
    %185 = vector.load %arg34[%c0_104, %c0_105] : memref<2x64xf32, #tpu.memory_space<vmem>>, vector<2x64xf32>
    tpu.vector_store %arg34[%c0_104, %c0_105], %119 {strides = array<i32>} : memref<2x64xf32, #tpu.memory_space<vmem>>, vector<2x64xf32>,
    return
  }
}

</mosaic_0001>

<llo_original>
// kernel: decoder_step_pallas.1
$region0: #{decoder_step_pallas.1}
  #allocation0 [shape = 'u32[]', space=smem, size = 0x4, offset = 0x4, fixed_abs, tag = 'smem constant byte address 0x4 - core index']
  #allocation1 [shape = 'u32[144,128]{1,0:T(1,128)}', space=vmem, size = 0x12000, scoped, tag = 'internal scratch']
  %s0 = inlined_call_operand.smem [shape: u32[35], index: -1, kind: input, shape index: {}]
  %s1 = sld [smem:[%s0]]
  %s2 = scalar_lea.smem %s0, 1
  %s3 = sld [smem:[%s2]]
  %s4 = scalar_lea.smem %s0, 2
  %s5 = sld [smem:[%s4]]
  %s6 = scalar_lea.smem %s0, 3
  %s7 = sld [smem:[%s6]]
  %s8 = scalar_lea.smem %s0, 4
  %s9 = sld [smem:[%s8]]
  %s10 = scalar_lea.smem %s0, 5
  %s11 = sld [smem:[%s10]]
  %s12 = scalar_lea.smem %s0, 6
  %s13 = sld [smem:[%s12]]
  %s14 = scalar_lea.smem %s0, 7
  %s15 = sld [smem:[%s14]]
  %s16 = scalar_lea.smem %s0, 8
  %s17 = sld [smem:[%s16]]
  %s18 = scalar_lea.smem %s0, 9
  %s19 = sld [smem:[%s18]]
  %s20 = scalar_lea.smem %s0, 10
  %s21 = sld [smem:[%s20]]
  %s22 = scalar_lea.smem %s0, 11
  %s23 = sld [smem:[%s22]]
  %s24 = scalar_lea.smem %s0, 12
  %s25 = sld [smem:[%s24]]
  %s26 = scalar_lea.smem %s0, 13
  %s27 = sld [smem:[%s26]]
  %s28 = scalar_lea.smem %s0, 14
  %s29 = sld [smem:[%s28]]
  %s30 = scalar_lea.smem %s0, 15
  %s31 = sld [smem:[%s30]]
  %s32 = scalar_lea.smem %s0, 16
  %s33 = sld [smem:[%s32]]
  %s34 = scalar_lea.smem %s0, 17
  %s35 = sld [smem:[%s34]]
  %s36 = scalar_lea.smem %s0, 18
  %s37 = sld [smem:[%s36]]
  %s38 = scalar_lea.smem %s0, 19
  %s39 = sld [smem:[%s38]]
  %s40 = scalar_lea.smem %s0, 20
  %s41 = sld [smem:[%s40]]
  %s42 = scalar_lea.smem %s0, 21
  %s43 = sld [smem:[%s42]]
  %s44 = scalar_lea.smem %s0, 22
  %s45 = sld [smem:[%s44]]
  %s46 = scalar_lea.smem %s0, 23
  %s47 = sld [smem:[%s46]]
  %s48 = scalar_lea.smem %s0, 24
  %s49 = sld [smem:[%s48]]
  %s50 = scalar_lea.smem %s0, 25
  %s51 = sld [smem:[%s50]]
  %s52 = scalar_lea.smem %s0, 26
  %s53 = sld [smem:[%s52]]
  %s54 = scalar_lea.smem %s0, 27
  %s55 = sld [smem:[%s54]]
  %s56 = scalar_lea.smem %s0, 28
  %s57 = sld [smem:[%s56]]
  %s58 = scalar_lea.smem %s0, 29
  %s59 = sld [smem:[%s58]]
  %s60 = scalar_lea.smem %s0, 30
  %s61 = sld [smem:[%s60]]
  %s62 = scalar_lea.smem %s0, 31
  %s63 = sld [smem:[%s62]]
  %s64 = scalar_lea.smem %s0, 32
  %s65 = sld [smem:[%s64]]
  %s66 = scalar_lea.smem %s0, 33
  %s67 = sld [smem:[%s66]]
  %s68 = scalar_lea.smem %s0, 34
  %s69 = sld [smem:[%s68]]
  %70 = xla_tuple %s63, %s65, %s67, %s69
  %s71 = sld [smem:[#allocation0]]
  $region162: #{decoder_step_pallas.1} parent=0
    _
  %s73 = ssub.s32 1, %s71
  %s74 = scalar_select 0, %s73, %s71
  $region1: #{decoder_step_pallas.1} parent=0
    #allocation2 [shape = 'u8[512]{0}', space=smem, size = 0x200, scoped, tag = 'input window, operand 0, single buffered']
    #allocation3 [shape = 's32[1]{0}', space=sflag, size = 0x4, scoped, tag = 'scoped memory for decoder_step_pallas.1']
    #allocation4 [shape = 's32[1]{0}', space=sflag, size = 0x4, scoped, tag = 'scoped memory for decoder_step_pallas.1']
    #allocation5 [shape = 'u8[1024]{0}', space=vmem, size = 0x400, scoped, tag = 'output window, operand 0, single buffered']
    #allocation6 [shape = 'u8[2048]{0}', space=vmem, size = 0x800, scoped, tag = 'output window, operand 1, single buffered']
    #allocation7 [shape = 's32[1]{0}', space=sflag, size = 0x4, scoped, tag = 'scoped memory for decoder_step_pallas.1']
    #allocation8 [shape = 'u8[1024]{0}', space=vmem, size = 0x400, scoped, tag = 'output window, operand 2, single buffered']
    #allocation9 [shape = 'u8[1024]{0}', space=vmem, size = 0x400, scoped, tag = 'output window, operand 3, single buffered']
    #allocation10 [shape = 's32[1]{0}', space=sflag, size = 0x4, scoped, tag = 'scoped memory for decoder_step_pallas.1']
    %75 = vsyncpa [#allocation4], 0
    %76 = vsyncpa [#allocation3], 0
    %77 = vsyncpa [#allocation7], 0
    %78 = vsyncpa [#allocation10], 0
    // Predicated region
    $region2: #{decoder_step_pallas.1} parent=1 // pred_check
      _
    $region3: #{decoder_step_pallas.1} parent=1 // pred_check_branch
      %80 = sbr.rel (0) target = $region5
    $region4: #{decoder_step_pallas.1} parent=1 // pred_region
      %s82 = ssub.s32 16, 16
      %83 = vsyncadd [#allocation4], %s82
      %s85 = sshll.u32 %s1, 4
      %s86 = int_to_ptr.vmem [resolvable:$true] %s85
      %88 = dma.vmem_to_smem %s86, 16, [#allocation2], [#allocation4]
    $region5: #{decoder_step_pallas.1} parent=1 // pred_fallthru
      _
    // Predicated region
    $region6: #{decoder_step_pallas.1} parent=1 // pred_check
      _
    $region7: #{decoder_step_pallas.1} parent=1 // pred_check_branch
      %90 = sbr.rel (0) target = $region9
    $region8: #{decoder_step_pallas.1} parent=1 // pred_region
      _
    $region9: #{decoder_step_pallas.1} parent=1 // pred_fallthru
      _
    // Predicated region
    $region10: #{decoder_step_pallas.1} parent=1 // pred_check
      _
    $region11: #{decoder_step_pallas.1} parent=1 // pred_check_branch
      %92 = sbr.rel (0) target = $region13
    $region12: #{decoder_step_pallas.1} parent=1 // pred_region
      _
    $region13: #{decoder_step_pallas.1} parent=1 // pred_fallthru
      _
    // Predicated region
    $region14: #{decoder_step_pallas.1} parent=1 // pred_check
      _
    $region15: #{decoder_step_pallas.1} parent=1 // pred_check_branch
      %94 = sbr.rel (0) target = $region17
    $region16: #{decoder_step_pallas.1} parent=1 // pred_region
      _
    $region17: #{decoder_step_pallas.1} parent=1 // pred_fallthru
      _
    // Predicated region
    $region18: #{decoder_step_pallas.1} parent=1 // pred_check
      _
    $region19: #{decoder_step_pallas.1} parent=1 // pred_check_branch
      %96 = sbr.rel (0) target = $region21
    $region20: #{decoder_step_pallas.1} parent=1 // pred_region
      _
    $region21: #{decoder_step_pallas.1} parent=1 // pred_fallthru
      _
    // Predicated region
    $region22: #{decoder_step_pallas.1} parent=1 // pred_check
      _
    $region23: #{decoder_step_pallas.1} parent=1 // pred_check_branch
      %98 = sbr.rel (0) target = $region25
    $region24: #{decoder_step_pallas.1} parent=1 // pred_region
      _
    $region25: #{decoder_step_pallas.1} parent=1 // pred_fallthru
      _
    // Predicated region
    $region26: #{decoder_step_pallas.1} parent=1 // pred_check
      _
    $region27: #{decoder_step_pallas.1} parent=1 // pred_check_branch
      %100 = sbr.rel (0) target = $region29
    $region28: #{decoder_step_pallas.1} parent=1 // pred_region
      _
    $region29: #{decoder_step_pallas.1} parent=1 // pred_fallthru
      _
    // Predicated region
    $region30: #{decoder_step_pallas.1} parent=1 // pred_check
      _
    $region31: #{decoder_step_pallas.1} parent=1 // pred_check_branch
      %102 = sbr.rel (0) target = $region33
    $region32: #{decoder_step_pallas.1} parent=1 // pred_region
      _
    $region33: #{decoder_step_pallas.1} parent=1 // pred_fallthru
      _
    // Predicated region
    $region34: #{decoder_step_pallas.1} parent=1 // pred_check
      _
    $region35: #{decoder_step_pallas.1} parent=1 // pred_check_branch
      %104 = sbr.rel (0) target = $region37
    $region36: #{decoder_step_pallas.1} parent=1 // pred_region
      _
    $region37: #{decoder_step_pallas.1} parent=1 // pred_fallthru
      _
    // Predicated region
    $region38: #{decoder_step_pallas.1} parent=1 // pred_check
      _
    $region39: #{decoder_step_pallas.1} parent=1 // pred_check_branch
      %106 = sbr.rel (0) target = $region41
    $region40: #{decoder_step_pallas.1} parent=1 // pred_region
      _
    $region41: #{decoder_step_pallas.1} parent=1 // pred_fallthru
      _
    // Predicated region
    $region42: #{decoder_step_pallas.1} parent=1 // pred_check
      _
    $region43: #{decoder_step_pallas.1} parent=1 // pred_check_branch
      %108 = sbr.rel (0) target = $region45
    $region44: #{decoder_step_pallas.1} parent=1 // pred_region
      _
    $region45: #{decoder_step_pallas.1} parent=1 // pred_fallthru
      _
    // Predicated region
    $region46: #{decoder_step_pallas.1} parent=1 // pred_check
      _
    $region47: #{decoder_step_pallas.1} parent=1 // pred_check_branch
      %110 = sbr.rel (0) target = $region49
    $region48: #{decoder_step_pallas.1} parent=1 // pred_region
      _
    $region49: #{decoder_step_pallas.1} parent=1 // pred_fallthru
      _
    // Predicated region
    $region50: #{decoder_step_pallas.1} parent=1 // pred_check
      _
    $region51: #{decoder_step_pallas.1} parent=1 // pred_check_branch
      %112 = sbr.rel (0) target = $region53
    $region52: #{decoder_step_pallas.1} parent=1 // pred_region
      _
    $region53: #{decoder_step_pallas.1} parent=1 // pred_fallthru
      _
    // Predicated region
    $region54: #{decoder_step_pallas.1} parent=1 // pred_check
      _
    $region55: #{decoder_step_pallas.1} parent=1 // pred_check_branch
      %114 = sbr.rel (0) target = $region57
    $region56: #{decoder_step_pallas.1} parent=1 // pred_region
      _
    $region57: #{decoder_step_pallas.1} parent=1 // pred_fallthru
      _
    // Predicated region
    $region58: #{decoder_step_pallas.1} parent=1 // pred_check
      _
    $region59: #{decoder_step_pallas.1} parent=1 // pred_check_branch
      %116 = sbr.rel (0) target = $region61
    $region60: #{decoder_step_pallas.1} parent=1 // pred_region
      _
    $region61: #{decoder_step_pallas.1} parent=1 // pred_fallthru
      _
    // Predicated region
    $region62: #{decoder_step_pallas.1} parent=1 // pred_check
      _
    $region63: #{decoder_step_pallas.1} parent=1 // pred_check_branch
      %118 = sbr.rel (0) target = $region65
    $region64: #{decoder_step_pallas.1} parent=1 // pred_region
      _
    $region65: #{decoder_step_pallas.1} parent=1 // pred_fallthru
      _
    // Predicated region
    $region66: #{decoder_step_pallas.1} parent=1 // pred_check
      _
    $region67: #{decoder_step_pallas.1} parent=1 // pred_check_branch
      %120 = sbr.rel (0) target = $region69
    $region68: #{decoder_step_pallas.1} parent=1 // pred_region
      _
    $region69: #{decoder_step_pallas.1} parent=1 // pred_fallthru
      _
    // Predicated region
    $region70: #{decoder_step_pallas.1} parent=1 // pred_check
      _
    $region71: #{decoder_step_pallas.1} parent=1 // pred_check_branch
      %122 = sbr.rel (0) target = $region73
    $region72: #{decoder_step_pallas.1} parent=1 // pred_region
      _
    $region73: #{decoder_step_pallas.1} parent=1 // pred_fallthru
      _
    // Predicated region
    $region74: #{decoder_step_pallas.1} parent=1 // pred_check
      _
    $region75: #{decoder_step_pallas.1} parent=1 // pred_check_branch
      %124 = sbr.rel (0) target = $region77
    $region76: #{decoder_step_pallas.1} parent=1 // pred_region
      _
    $region77: #{decoder_step_pallas.1} parent=1 // pred_fallthru
      _
    // Predicated region
    $region78: #{decoder_step_pallas.1} parent=1 // pred_check
      _
    $region79: #{decoder_step_pallas.1} parent=1 // pred_check_branch
      %126 = sbr.rel (0) target = $region81
    $region80: #{decoder_step_pallas.1} parent=1 // pred_region
      _
    $region81: #{decoder_step_pallas.1} parent=1 // pred_fallthru
      _
    // Predicated region
    $region82: #{decoder_step_pallas.1} parent=1 // pred_check
      _
    $region83: #{decoder_step_pallas.1} parent=1 // pred_check_branch
      %128 = sbr.rel (0) target = $region85
    $region84: #{decoder_step_pallas.1} parent=1 // pred_region
      _
    $region85: #{decoder_step_pallas.1} parent=1 // pred_fallthru
      _
    // Predicated region
    $region86: #{decoder_step_pallas.1} parent=1 // pred_check
      _
    $region87: #{decoder_step_pallas.1} parent=1 // pred_check_branch
      %130 = sbr.rel (0) target = $region89
    $region88: #{decoder_step_pallas.1} parent=1 // pred_region
      _
    $region89: #{decoder_step_pallas.1} parent=1 // pred_fallthru
      _
    // Predicated region
    $region90: #{decoder_step_pallas.1} parent=1 // pred_check
      _
    $region91: #{decoder_step_pallas.1} parent=1 // pred_check_branch
      %132 = sbr.rel (0) target = $region93
    $region92: #{decoder_step_pallas.1} parent=1 // pred_region
      _
    $region93: #{decoder_step_pallas.1} parent=1 // pred_fallthru
      _
    // Predicated region
    $region94: #{decoder_step_pallas.1} parent=1 // pred_check
      _
    $region95: #{decoder_step_pallas.1} parent=1 // pred_check_branch
      %134 = sbr.rel (0) target = $region97
    $region96: #{decoder_step_pallas.1} parent=1 // pred_region
      _
    $region97: #{decoder_step_pallas.1} parent=1 // pred_fallthru
      _
    // Predicated region
    $region98: #{decoder_step_pallas.1} parent=1 // pred_check
      _
    $region99: #{decoder_step_pallas.1} parent=1 // pred_check_branch
      %136 = sbr.rel (0) target = $region101
    $region100: #{decoder_step_pallas.1} parent=1 // pred_region
      _
    $region101: #{decoder_step_pallas.1} parent=1 // pred_fallthru
      _
    // Predicated region
    $region102: #{decoder_step_pallas.1} parent=1 // pred_check
      _
    $region103: #{decoder_step_pallas.1} parent=1 // pred_check_branch
      %138 = sbr.rel (0) target = $region105
    $region104: #{decoder_step_pallas.1} parent=1 // pred_region
      _
    $region105: #{decoder_step_pallas.1} parent=1 // pred_fallthru
      _
    // Predicated region
    $region106: #{decoder_step_pallas.1} parent=1 // pred_check
      _
    $region107: #{decoder_step_pallas.1} parent=1 // pred_check_branch
      %140 = sbr.rel (0) target = $region109
    $region108: #{decoder_step_pallas.1} parent=1 // pred_region
      _
    $region109: #{decoder_step_pallas.1} parent=1 // pred_fallthru
      _
    // Predicated region
    $region110: #{decoder_step_pallas.1} parent=1 // pred_check
      _
    $region111: #{decoder_step_pallas.1} parent=1 // pred_check_branch
      %142 = sbr.rel (0) target = $region113
    $region112: #{decoder_step_pallas.1} parent=1 // pred_region
      _
    $region113: #{decoder_step_pallas.1} parent=1 // pred_fallthru
      _
    // Predicated region
    $region114: #{decoder_step_pallas.1} parent=1 // pred_check
      _
    $region115: #{decoder_step_pallas.1} parent=1 // pred_check_branch
      %144 = sbr.rel (0) target = $region117
    $region116: #{decoder_step_pallas.1} parent=1 // pred_region
      _
    $region117: #{decoder_step_pallas.1} parent=1 // pred_fallthru
      _
    // Predicated region
    $region118: #{decoder_step_pallas.1} parent=1 // pred_check
      _
    $region119: #{decoder_step_pallas.1} parent=1 // pred_check_branch
      %146 = sbr.rel (0) target = $region121
    $region120: #{decoder_step_pallas.1} parent=1 // pred_region
      _
    $region121: #{decoder_step_pallas.1} parent=1 // pred_fallthru
      _
    // Predicated region
    $region122: #{decoder_step_pallas.1} parent=1 // pred_check
      _
    $region123: #{decoder_step_pallas.1} parent=1 // pred_check_branch
      %148 = sbr.rel (0) target = $region125
    $region124: #{decoder_step_pallas.1} parent=1 // pred_region
      _
    $region125: #{decoder_step_pallas.1} parent=1 // pred_fallthru
      _
    // Predicated region
    $region126: #{decoder_step_pallas.1} parent=1 // pred_check
      _
    $region127: #{decoder_step_pallas.1} parent=1 // pred_check_branch
      %150 = sbr.rel (0) target = $region129
    $region128: #{decoder_step_pallas.1} parent=1 // pred_region
      %151 = dma.done [#allocation4], 16
    $region129: #{decoder_step_pallas.1} parent=1 // pred_fallthru
      _
    %152 = sfence
    %v153 = vlaneseq
    %v154 = vand.u32 %v153, 127
    %s155 = sld [smem:[#allocation2]]
    %v156 = vstv %s155
    %vm157 = vcmp.eq.s32.totalorder %v154, %v156
    %v158 = vsel %vm157, 1, 0
    %v159 = vcvt.s32.f32 %v158
    %s160 = sld [smem:[#allocation2 + $0x1]]
    %v161 = vstv %s160
    %vm162 = vcmp.eq.s32.totalorder %v154, %v161
    %v163 = vsel %vm162, 1, 0
    %v164 = vcvt.s32.f32 %v163
    %vm165 = vcmask 1040384
    %v166 = vsel %vm165, %v159, %v164
    %v167 = vld [vmem:[%s3] sm:$0xff]
    %v168 = vld [vmem:[%s3 + $0x8] sm:$0xff]
    %v169 = vld [vmem:[%s3 + $0x10] sm:$0xff]
    %v170 = vld [vmem:[%s3 + $0x18] sm:$0xff]
    %v171 = vld [vmem:[%s3 + $0x20] sm:$0xff]
    %v172 = vld [vmem:[%s3 + $0x28] sm:$0xff]
    %v173 = vld [vmem:[%s3 + $0x30] sm:$0xff]
    %v174 = vld [vmem:[%s3 + $0x38] sm:$0xff]
    %v175 = vld [vmem:[%s3 + $0x40] sm:$0xff]
    %v176 = vld [vmem:[%s3 + $0x48] sm:$0xff]
    %v177 = vld [vmem:[%s3 + $0x50] sm:$0xff]
    %v178 = vld [vmem:[%s3 + $0x58] sm:$0xff]
    %v179 = vld [vmem:[%s3 + $0x60] sm:$0xff]
    %v180 = vld [vmem:[%s3 + $0x68] sm:$0xff]
    %v181 = vld [vmem:[%s3 + $0x70] sm:$0xff]
    %v182 = vld [vmem:[%s3 + $0x78] sm:$0xff]
    %v183 = vld [vmem:[%s3 + $0x80] sm:$0xff]
    %v184 = vld [vmem:[%s3 + $0x88] sm:$0xff]
    %v185 = vld [vmem:[%s3 + $0x90] sm:$0xff]
    %v186 = vld [vmem:[%s3 + $0x98] sm:$0xff]
    %v187 = vld [vmem:[%s3 + $0xa0] sm:$0xff]
    %v188 = vld [vmem:[%s3 + $0xa8] sm:$0xff]
    %v189 = vld [vmem:[%s3 + $0xb0] sm:$0xff]
    %v190 = vld [vmem:[%s3 + $0xb8] sm:$0xff]
    %v191 = vld [vmem:[%s3 + $0xc0] sm:$0xff]
    %v192 = vld [vmem:[%s3 + $0xc8] sm:$0xff]
    %v193 = vld [vmem:[%s3 + $0xd0] sm:$0xff]
    %v194 = vld [vmem:[%s3 + $0xd8] sm:$0xff]
    %v195 = vld [vmem:[%s3 + $0xe0] sm:$0xff]
    %v196 = vld [vmem:[%s3 + $0xe8] sm:$0xff]
    %v197 = vld [vmem:[%s3 + $0xf0] sm:$0xff]
    %v198 = vld [vmem:[%s3 + $0xf8] sm:$0xff]
    %199 = vmatprep.subr.mxu0 %v168
    %200 = vmatpush1.msra.mxu0 %v167
    %201 = vmatprep.subr.mxu0 %v170
    %202 = vmatpush1.msra.mxu0 %v169
    %203 = vmatprep.subr.mxu0 %v172
    %204 = vmatpush1.msra.mxu0 %v171
    %205 = vmatprep.subr.mxu0 %v174
    %206 = vmatpush1.msra.mxu0 %v173
    %207 = vmatprep.subr.mxu0 %v176
    %208 = vmatpush1.msra.mxu0 %v175
    %209 = vmatprep.subr.mxu0 %v178
    %210 = vmatpush1.msra.mxu0 %v177
    %211 = vmatprep.subr.mxu0 %v180
    %212 = vmatpush1.msra.mxu0 %v179
    %213 = vmatprep.subr.mxu0 %v182
    %214 = vmatpush1.msra.mxu0 %v181
    %215 = vmatprep.subr.mxu0 %v184
    %216 = vmatpush1.msra.mxu0 %v183
    %217 = vmatprep.subr.mxu0 %v186
    %218 = vmatpush1.msra.mxu0 %v185
    %219 = vmatprep.subr.mxu0 %v188
    %220 = vmatpush1.msra.mxu0 %v187
    %221 = vmatprep.subr.mxu0 %v190
    %222 = vmatpush1.msra.mxu0 %v189
    %223 = vmatprep.subr.mxu0 %v192
    %224 = vmatpush1.msra.mxu0 %v191
    %225 = vmatprep.subr.mxu0 %v194
    %226 = vmatpush1.msra.mxu0 %v193
    %227 = vmatprep.subr.mxu0 %v196
    %228 = vmatpush1.msra.mxu0 %v195
    %229 = vmatprep.subr.mxu0 %v198
    %230 = vmatpush1.msra.mxu0 %v197
    %231 = vmatprep.subr.mxu0 0.0
    %232 = vmatpush1.msra.mxu0 0.0
    %233 = vmatprep.subr.mxu0 0.0
    %234 = vmatpush1.msra.mxu0 0.0
    %235 = vmatprep.subr.mxu0 0.0
    %236 = vmatpush1.msra.mxu0 0.0
    %237 = vmatprep.subr.mxu0 0.0
    %238 = vmatpush1.msra.mxu0 0.0
    %239 = vmatprep.subr.mxu0 0.0
    %240 = vmatpush1.msra.mxu0 0.0
    %241 = vmatprep.subr.mxu0 0.0
    %242 = vmatpush1.msra.mxu0 0.0
    %243 = vmatprep.subr.mxu0 0.0
    %244 = vmatpush1.msra.mxu0 0.0
    %245 = vmatprep.subr.mxu0 0.0
    %246 = vmatpush1.msra.mxu0 0.0
    %247 = vmatprep.subr.mxu0 0.0
    %248 = vmatpush1.msra.mxu0 0.0
    %249 = vmatprep.subr.mxu0 0.0
    %250 = vmatpush1.msra.mxu0 0.0
    %251 = vmatprep.subr.mxu0 0.0
    %252 = vmatpush1.msra.mxu0 0.0
    %253 = vmatprep.subr.mxu0 0.0
    %254 = vmatpush1.msra.mxu0 0.0
    %255 = vmatprep.subr.mxu0 0.0
    %256 = vmatpush1.msra.mxu0 0.0
    %257 = vmatprep.subr.mxu0 0.0
    %258 = vmatpush1.msra.mxu0 0.0
    %259 = vmatprep.subr.mxu0 0.0
    %260 = vmatpush1.msra.mxu0 0.0
    %261 = vmatprep.subr.mxu0 0.0
    %262 = vmatpush1.msra.mxu0 0.0
    %263 = vmatprep.mubr.f32.mxu0 0.0
    %264 = vmatmul.mubr.f32.gmra.mrb[0].mxu0 %v166
    %v265 = vpop.f32.mrb[0].mxu0
    %v266 = vadd.f32 0.0, %v265
    %v267 = vpop.f32.mrb[0].mxu0
    %v268 = vadd.f32 0.0, %v267
    %269 = vdwg.mxu0
    %v270 = vld [vmem:[%s5] sm:$0xf]
    %v271 = vld [vmem:[%s7] sm:$0xff]
    %v272 = vld [vmem:[%s7 + $0x8] sm:$0xff]
    %v273 = vld [vmem:[%s7 + $0x10] sm:$0xff]
    %v274 = vld [vmem:[%s7 + $0x18] sm:$0xff]
    %v275 = vld [vmem:[%s7 + $0x20] sm:$0xff]
    %v276 = vld [vmem:[%s7 + $0x28] sm:$0xff]
    %v277 = vld [vmem:[%s7 + $0x30] sm:$0xff]
    %v278 = vld [vmem:[%s7 + $0x38] sm:$0xff]
    %v279 = vld [vmem:[%s7 + $0x40] sm:$0xff]
    %v280 = vld [vmem:[%s7 + $0x48] sm:$0xff]
    %v281 = vld [vmem:[%s7 + $0x50] sm:$0xff]
    %v282 = vld [vmem:[%s7 + $0x58] sm:$0xff]
    %v283 = vld [vmem:[%s7 + $0x60] sm:$0xff]
    %v284 = vld [vmem:[%s7 + $0x68] sm:$0xff]
    %v285 = vld [vmem:[%s7 + $0x70] sm:$0xff]
    %v286 = vld [vmem:[%s7 + $0x78] sm:$0xff]
    %v287 = vld [vmem:[%s7 + $0x80] sm:$0xff]
    %v288 = vld [vmem:[%s7 + $0x88] sm:$0xff]
    %v289 = vld [vmem:[%s7 + $0x90] sm:$0xff]
    %v290 = vld [vmem:[%s7 + $0x98] sm:$0xff]
    %v291 = vld [vmem:[%s7 + $0xa0] sm:$0xff]
    %v292 = vld [vmem:[%s7 + $0xa8] sm:$0xff]
    %v293 = vld [vmem:[%s7 + $0xb0] sm:$0xff]
    %v294 = vld [vmem:[%s7 + $0xb8] sm:$0xff]
    %v295 = vld [vmem:[%s7 + $0xc0] sm:$0xff]
    %v296 = vld [vmem:[%s7 + $0xc8] sm:$0xff]
    %v297 = vld [vmem:[%s7 + $0xd0] sm:$0xff]
    %v298 = vld [vmem:[%s7 + $0xd8] sm:$0xff]
    %v299 = vld [vmem:[%s7 + $0xe0] sm:$0xff]
    %v300 = vld [vmem:[%s7 + $0xe8] sm:$0xff]
    %v301 = vld [vmem:[%s7 + $0xf0] sm:$0xff]
    %v302 = vld [vmem:[%s7 + $0xf8] sm:$0xff]
    %v303 = vld [vmem:[%s7 + $0x100] sm:$0xff]
    %v304 = vld [vmem:[%s7 + $0x108] sm:$0xff]
    %v305 = vld [vmem:[%s7 + $0x110] sm:$0xff]
    %v306 = vld [vmem:[%s7 + $0x118] sm:$0xff]
    %v307 = vld [vmem:[%s7 + $0x120] sm:$0xff]
    %v308 = vld [vmem:[%s7 + $0x128] sm:$0xff]
    %v309 = vld [vmem:[%s7 + $0x130] sm:$0xff]
    %v310 = vld [vmem:[%s7 + $0x138] sm:$0xff]
    %v311 = vld [vmem:[%s7 + $0x140] sm:$0xff]
    %v312 = vld [vmem:[%s7 + $0x148] sm:$0xff]
    %v313 = vld [vmem:[%s7 + $0x150] sm:$0xff]
    %v314 = vld [vmem:[%s7 + $0x158] sm:$0xff]
    %v315 = vld [vmem:[%s7 + $0x160] sm:$0xff]
    %v316 = vld [vmem:[%s7 + $0x168] sm:$0xff]
    %v317 = vld [vmem:[%s7 + $0x170] sm:$0xff]
    %v318 = vld [vmem:[%s7 + $0x178] sm:$0xff]
    %v319 = vld [vmem:[%s7 + $0x180] sm:$0xff]
    %v320 = vld [vmem:[%s7 + $0x188] sm:$0xff]
    %v321 = vld [vmem:[%s7 + $0x190] sm:$0xff]
    %v322 = vld [vmem:[%s7 + $0x198] sm:$0xff]
    %v323 = vld [vmem:[%s7 + $0x1a0] sm:$0xff]
    %v324 = vld [vmem:[%s7 + $0x1a8] sm:$0xff]
    %v325 = vld [vmem:[%s7 + $0x1b0] sm:$0xff]
    %v326 = vld [vmem:[%s7 + $0x1b8] sm:$0xff]
    %v327 = vld [vmem:[%s7 + $0x1c0] sm:$0xff]
    %v328 = vld [vmem:[%s7 + $0x1c8] sm:$0xff]
    %v329 = vld [vmem:[%s7 + $0x1d0] sm:$0xff]
    %v330 = vld [vmem:[%s7 + $0x1d8] sm:$0xff]
    %v331 = vld [vmem:[%s7 + $0x1e0] sm:$0xff]
    %v332 = vld [vmem:[%s7 + $0x1e8] sm:$0xff]
    %v333 = vld [vmem:[%s7 + $0x1f0] sm:$0xff]
    %v334 = vld [vmem:[%s7 + $0x1f8] sm:$0xff]
    %v335 = vld [vmem:[%s7 + $0x200] sm:$0xff]
    %v336 = vld [vmem:[%s7 + $0x208] sm:$0xff]
    %v337 = vld [vmem:[%s7 + $0x210] sm:$0xff]
    %v338 = vld [vmem:[%s7 + $0x218] sm:$0xff]
    %v339 = vld [vmem:[%s7 + $0x220] sm:$0xff]
    %v340 = vld [vmem:[%s7 + $0x228] sm:$0xff]
    %v341 = vld [vmem:[%s7 + $0x230] sm:$0xff]
    %v342 = vld [vmem:[%s7 + $0x238] sm:$0xff]
    %v343 = vld [vmem:[%s7 + $0x240] sm:$0xff]
    %v344 = vld [vmem:[%s7 + $0x248] sm:$0xff]
    %v345 = vld [vmem:[%s7 + $0x250] sm:$0xff]
    %v346 = vld [vmem:[%s7 + $0x258] sm:$0xff]
    %v347 = vld [vmem:[%s7 + $0x260] sm:$0xff]
    %v348 = vld [vmem:[%s7 + $0x268] sm:$0xff]
    %v349 = vld [vmem:[%s7 + $0x270] sm:$0xff]
    %v350 = vld [vmem:[%s7 + $0x278] sm:$0xff]
    %v351 = vld [vmem:[%s7 + $0x280] sm:$0xff]
    %v352 = vld [vmem:[%s7 + $0x288] sm:$0xff]
    %v353 = vld [vmem:[%s7 + $0x290] sm:$0xff]
    %v354 = vld [vmem:[%s7 + $0x298] sm:$0xff]
    %v355 = vld [vmem:[%s7 + $0x2a0] sm:$0xff]
    %v356 = vld [vmem:[%s7 + $0x2a8] sm:$0xff]
    %v357 = vld [vmem:[%s7 + $0x2b0] sm:$0xff]
    %v358 = vld [vmem:[%s7 + $0x2b8] sm:$0xff]
    %v359 = vld [vmem:[%s7 + $0x2c0] sm:$0xff]
    %v360 = vld [vmem:[%s7 + $0x2c8] sm:$0xff]
    %v361 = vld [vmem:[%s7 + $0x2d0] sm:$0xff]
    %v362 = vld [vmem:[%s7 + $0x2d8] sm:$0xff]
    %v363 = vld [vmem:[%s7 + $0x2e0] sm:$0xff]
    %v364 = vld [vmem:[%s7 + $0x2e8] sm:$0xff]
    %v365 = vld [vmem:[%s7 + $0x2f0] sm:$0xff]
    %v366 = vld [vmem:[%s7 + $0x2f8] sm:$0xff]
    %v367 = vld [vmem:[%s7 + $0x300] sm:$0xff]
    %v368 = vld [vmem:[%s7 + $0x308] sm:$0xff]
    %v369 = vld [vmem:[%s7 + $0x310] sm:$0xff]
    %v370 = vld [vmem:[%s7 + $0x318] sm:$0xff]
    %v371 = vld [vmem:[%s7 + $0x320] sm:$0xff]
    %v372 = vld [vmem:[%s7 + $0x328] sm:$0xff]
    %v373 = vld [vmem:[%s7 + $0x330] sm:$0xff]
    %v374 = vld [vmem:[%s7 + $0x338] sm:$0xff]
    %v375 = vld [vmem:[%s7 + $0x340] sm:$0xff]
    %v376 = vld [vmem:[%s7 + $0x348] sm:$0xff]
    %v377 = vld [vmem:[%s7 + $0x350] sm:$0xff]
    %v378 = vld [vmem:[%s7 + $0x358] sm:$0xff]
    %v379 = vld [vmem:[%s7 + $0x360] sm:$0xff]
    %v380 = vld [vmem:[%s7 + $0x368] sm:$0xff]
    %v381 = vld [vmem:[%s7 + $0x370] sm:$0xff]
    %v382 = vld [vmem:[%s7 + $0x378] sm:$0xff]
    %v383 = vld [vmem:[%s7 + $0x380] sm:$0xff]
    %v384 = vld [vmem:[%s7 + $0x388] sm:$0xff]
    %v385 = vld [vmem:[%s7 + $0x390] sm:$0xff]
    %v386 = vld [vmem:[%s7 + $0x398] sm:$0xff]
    %v387 = vld [vmem:[%s7 + $0x3a0] sm:$0xff]
    %v388 = vld [vmem:[%s7 + $0x3a8] sm:$0xff]
    %v389 = vld [vmem:[%s7 + $0x3b0] sm:$0xff]
    %v390 = vld [vmem:[%s7 + $0x3b8] sm:$0xff]
    %v391 = vld [vmem:[%s7 + $0x3c0] sm:$0xff]
    %v392 = vld [vmem:[%s7 + $0x3c8] sm:$0xff]
    %v393 = vld [vmem:[%s7 + $0x3d0] sm:$0xff]
    %v394 = vld [vmem:[%s7 + $0x3d8] sm:$0xff]
    %v395 = vld [vmem:[%s7 + $0x3e0] sm:$0xff]
    %v396 = vld [vmem:[%s7 + $0x3e8] sm:$0xff]
    %v397 = vld [vmem:[%s7 + $0x3f0] sm:$0xff]
    %v398 = vld [vmem:[%s7 + $0x3f8] sm:$0xff]
    %v399 = vld [vmem:[%s7 + $0x400] sm:$0xff]
    %v400 = vld [vmem:[%s7 + $0x408] sm:$0xff]
    %v401 = vld [vmem:[%s7 + $0x410] sm:$0xff]
    %v402 = vld [vmem:[%s7 + $0x418] sm:$0xff]
    %v403 = vld [vmem:[%s7 + $0x420] sm:$0xff]
    %v404 = vld [vmem:[%s7 + $0x428] sm:$0xff]
    %v405 = vld [vmem:[%s7 + $0x430] sm:$0xff]
    %v406 = vld [vmem:[%s7 + $0x438] sm:$0xff]
    %v407 = vld [vmem:[%s7 + $0x440] sm:$0xff]
    %v408 = vld [vmem:[%s7 + $0x448] sm:$0xff]
    %v409 = vld [vmem:[%s7 + $0x450] sm:$0xff]
    %v410 = vld [vmem:[%s7 + $0x458] sm:$0xff]
    %v411 = vld [vmem:[%s7 + $0x460] sm:$0xff]
    %v412 = vld [vmem:[%s7 + $0x468] sm:$0xff]
    %v413 = vld [vmem:[%s7 + $0x470] sm:$0xff]
    %v414 = vld [vmem:[%s7 + $0x478] sm:$0xff]
    %v415 = vld [vmem:[%s7 + $0x480] sm:$0xff]
    %v416 = vld [vmem:[%s7 + $0x488] sm:$0xff]
    %v417 = vld [vmem:[%s7 + $0x490] sm:$0xff]
    %v418 = vld [vmem:[%s7 + $0x498] sm:$0xff]
    %v419 = vld [vmem:[%s7 + $0x4a0] sm:$0xff]
    %v420 = vld [vmem:[%s7 + $0x4a8] sm:$0xff]
    %v421 = vld [vmem:[%s7 + $0x4b0] sm:$0xff]
    %v422 = vld [vmem:[%s7 + $0x4b8] sm:$0xff]
    %v423 = vld [vmem:[%s7 + $0x4c0] sm:$0xff]
    %v424 = vld [vmem:[%s7 + $0x4c8] sm:$0xff]
    %v425 = vld [vmem:[%s7 + $0x4d0] sm:$0xff]
    %v426 = vld [vmem:[%s7 + $0x4d8] sm:$0xff]
    %v427 = vld [vmem:[%s7 + $0x4e0] sm:$0xff]
    %v428 = vld [vmem:[%s7 + $0x4e8] sm:$0xff]
    %v429 = vld [vmem:[%s7 + $0x4f0] sm:$0xff]
    %v430 = vld [vmem:[%s7 + $0x4f8] sm:$0xff]
    %v431 = vld [vmem:[%s7 + $0x500] sm:$0xff]
    %v432 = vld [vmem:[%s7 + $0x508] sm:$0xff]
    %v433 = vld [vmem:[%s7 + $0x510] sm:$0xff]
    %v434 = vld [vmem:[%s7 + $0x518] sm:$0xff]
    %v435 = vld [vmem:[%s7 + $0x520] sm:$0xff]
    %v436 = vld [vmem:[%s7 + $0x528] sm:$0xff]
    %v437 = vld [vmem:[%s7 + $0x530] sm:$0xff]
    %v438 = vld [vmem:[%s7 + $0x538] sm:$0xff]
    %v439 = vld [vmem:[%s7 + $0x540] sm:$0xff]
    %v440 = vld [vmem:[%s7 + $0x548] sm:$0xff]
    %v441 = vld [vmem:[%s7 + $0x550] sm:$0xff]
    %v442 = vld [vmem:[%s7 + $0x558] sm:$0xff]
    %v443 = vld [vmem:[%s7 + $0x560] sm:$0xff]
    %v444 = vld [vmem:[%s7 + $0x568] sm:$0xff]
    %v445 = vld [vmem:[%s7 + $0x570] sm:$0xff]
    %v446 = vld [vmem:[%s7 + $0x578] sm:$0xff]
    %v447 = vld [vmem:[%s7 + $0x580] sm:$0xff]
    %v448 = vld [vmem:[%s7 + $0x588] sm:$0xff]
    %v449 = vld [vmem:[%s7 + $0x590] sm:$0xff]
    %v450 = vld [vmem:[%s7 + $0x598] sm:$0xff]
    %v451 = vld [vmem:[%s7 + $0x5a0] sm:$0xff]
    %v452 = vld [vmem:[%s7 + $0x5a8] sm:$0xff]
    %v453 = vld [vmem:[%s7 + $0x5b0] sm:$0xff]
    %v454 = vld [vmem:[%s7 + $0x5b8] sm:$0xff]
    %v455 = vld [vmem:[%s7 + $0x5c0] sm:$0xff]
    %v456 = vld [vmem:[%s7 + $0x5c8] sm:$0xff]
    %v457 = vld [vmem:[%s7 + $0x5d0] sm:$0xff]
    %v458 = vld [vmem:[%s7 + $0x5d8] sm:$0xff]
    %v459 = vld [vmem:[%s7 + $0x5e0] sm:$0xff]
    %v460 = vld [vmem:[%s7 + $0x5e8] sm:$0xff]
    %v461 = vld [vmem:[%s7 + $0x5f0] sm:$0xff]
    %v462 = vld [vmem:[%s7 + $0x5f8] sm:$0xff]
    %v463 = vld [vmem:[%s11] sm:$0x3f]
    %v465 = vlaneseq
    %v466 = vshrl.u32 %v465, 7
    %v467 = vsub.s32 0, %v466
    %v468 = vrot.slane %v463, %v467
    %v469 = vlaneseq
    %v470 = vshrl.u32 %v469, 7
    %v471 = vsub.s32 1, %v470
    %v472 = vrot.slane %v463, %v471
    %v473 = vlaneseq
    %v474 = vshrl.u32 %v473, 7
    %v475 = vsub.s32 2, %v474
    %v476 = vrot.slane %v463, %v475
    %v477 = vlaneseq
    %v478 = vshrl.u32 %v477, 7
    %v479 = vsub.s32 3, %v478
    %v480 = vrot.slane %v463, %v479
    %v481 = vlaneseq
    %v482 = vshrl.u32 %v481, 7
    %v483 = vsub.s32 4, %v482
    %v484 = vrot.slane %v463, %v483
    %v485 = vlaneseq
    %v486 = vshrl.u32 %v485, 7
    %v487 = vsub.s32 5, %v486
    %v488 = vrot.slane %v463, %v487
    %495 = vmatprep.subr.mxu0 %v272
    %496 = vmatpush1.msra.mxu0 %v271
    %497 = vmatprep.subr.mxu0 %v278
    %498 = vmatpush1.msra.mxu0 %v277
    %499 = vmatprep.subr.mxu0 %v284
    %500 = vmatpush1.msra.mxu0 %v283
    %501 = vmatprep.subr.mxu0 %v290
    %502 = vmatpush1.msra.mxu0 %v289
    %503 = vmatprep.subr.mxu0 %v296
    %504 = vmatpush1.msra.mxu0 %v295
    %505 = vmatprep.subr.mxu0 %v302
    %506 = vmatpush1.msra.mxu0 %v301
    %507 = vmatprep.subr.mxu0 %v308
    %508 = vmatpush1.msra.mxu0 %v307
    %509 = vmatprep.subr.mxu0 %v314
    %510 = vmatpush1.msra.mxu0 %v313
    %511 = vmatprep.subr.mxu0 %v320
    %512 = vmatpush1.msra.mxu0 %v319
    %513 = vmatprep.subr.mxu0 %v326
    %514 = vmatpush1.msra.mxu0 %v325
    %515 = vmatprep.subr.mxu0 %v332
    %516 = vmatpush1.msra.mxu0 %v331
    %517 = vmatprep.subr.mxu0 %v338
    %518 = vmatpush1.msra.mxu0 %v337
    %519 = vmatprep.subr.mxu0 %v344
    %520 = vmatpush1.msra.mxu0 %v343
    %521 = vmatprep.subr.mxu0 %v350
    %522 = vmatpush1.msra.mxu0 %v349
    %523 = vmatprep.subr.mxu0 %v356
    %524 = vmatpush1.msra.mxu0 %v355
    %525 = vmatprep.subr.mxu0 %v362
    %526 = vmatpush1.msra.mxu0 %v361
    %527 = vmatprep.subr.mxu0 %v368
    %528 = vmatpush1.msra.mxu0 %v367
    %529 = vmatprep.subr.mxu0 %v374
    %530 = vmatpush1.msra.mxu0 %v373
    %531 = vmatprep.subr.mxu0 %v380
    %532 = vmatpush1.msra.mxu0 %v379
    %533 = vmatprep.subr.mxu0 %v386
    %534 = vmatpush1.msra.mxu0 %v385
    %535 = vmatprep.subr.mxu0 %v392
    %536 = vmatpush1.msra.mxu0 %v391
    %537 = vmatprep.subr.mxu0 %v398
    %538 = vmatpush1.msra.mxu0 %v397
    %539 = vmatprep.subr.mxu0 %v404
    %540 = vmatpush1.msra.mxu0 %v403
    %541 = vmatprep.subr.mxu0 %v410
    %542 = vmatpush1.msra.mxu0 %v409
    %543 = vmatprep.subr.mxu0 %v416
    %544 = vmatpush1.msra.mxu0 %v415
    %545 = vmatprep.subr.mxu0 %v422
    %546 = vmatpush1.msra.mxu0 %v421
    %547 = vmatprep.subr.mxu0 %v428
    %548 = vmatpush1.msra.mxu0 %v427
    %549 = vmatprep.subr.mxu0 %v434
    %550 = vmatpush1.msra.mxu0 %v433
    %551 = vmatprep.subr.mxu0 %v440
    %552 = vmatpush1.msra.mxu0 %v439
    %553 = vmatprep.subr.mxu0 %v446
    %554 = vmatpush1.msra.mxu0 %v445
    %555 = vmatprep.subr.mxu0 %v452
    %556 = vmatpush1.msra.mxu0 %v451
    %557 = vmatprep.subr.mxu0 %v458
    %558 = vmatpush1.msra.mxu0 %v457
    %559 = vmatprep.mubr.f32.mxu0 %v268
    %560 = vmatmul.mubr.f32.gmra.mrb[0].mxu0 %v266
    %v561 = vpop.f32.mrb[0].mxu0
    %v562 = vadd.f32 %v468, %v561
    %v563 = vpop.f32.mrb[0].mxu0
    %v564 = vadd.f32 %v472, %v563
    %565 = vdwg.mxu0
    %566 = vmatprep.subr.mxu0 %v274
    %567 = vmatpush1.msra.mxu0 %v273
    %568 = vmatprep.subr.mxu0 %v280
    %569 = vmatpush1.msra.mxu0 %v279
    %570 = vmatprep.subr.mxu0 %v286
    %571 = vmatpush1.msra.mxu0 %v285
    %572 = vmatprep.subr.mxu0 %v292
    %573 = vmatpush1.msra.mxu0 %v291
    %574 = vmatprep.subr.mxu0 %v298
    %575 = vmatpush1.msra.mxu0 %v297
    %576 = vmatprep.subr.mxu0 %v304
    %577 = vmatpush1.msra.mxu0 %v303
    %578 = vmatprep.subr.mxu0 %v310
    %579 = vmatpush1.msra.mxu0 %v309
    %580 = vmatprep.subr.mxu0 %v316
    %581 = vmatpush1.msra.mxu0 %v315
    %582 = vmatprep.subr.mxu0 %v322
    %583 = vmatpush1.msra.mxu0 %v321
    %584 = vmatprep.subr.mxu0 %v328
    %585 = vmatpush1.msra.mxu0 %v327
    %586 = vmatprep.subr.mxu0 %v334
    %587 = vmatpush1.msra.mxu0 %v333
    %588 = vmatprep.subr.mxu0 %v340
    %589 = vmatpush1.msra.mxu0 %v339
    %590 = vmatprep.subr.mxu0 %v346
    %591 = vmatpush1.msra.mxu0 %v345
    %592 = vmatprep.subr.mxu0 %v352
    %593 = vmatpush1.msra.mxu0 %v351
    %594 = vmatprep.subr.mxu0 %v358
    %595 = vmatpush1.msra.mxu0 %v357
    %596 = vmatprep.subr.mxu0 %v364
    %597 = vmatpush1.msra.mxu0 %v363
    %598 = vmatprep.subr.mxu0 %v370
    %599 = vmatpush1.msra.mxu0 %v369
    %600 = vmatprep.subr.mxu0 %v376
    %601 = vmatpush1.msra.mxu0 %v375
    %602 = vmatprep.subr.mxu0 %v382
    %603 = vmatpush1.msra.mxu0 %v381
    %604 = vmatprep.subr.mxu0 %v388
    %605 = vmatpush1.msra.mxu0 %v387
    %606 = vmatprep.subr.mxu0 %v394
    %607 = vmatpush1.msra.mxu0 %v393
    %608 = vmatprep.subr.mxu0 %v400
    %609 = vmatpush1.msra.mxu0 %v399
    %610 = vmatprep.subr.mxu0 %v406
    %611 = vmatpush1.msra.mxu0 %v405
    %612 = vmatprep.subr.mxu0 %v412
    %613 = vmatpush1.msra.mxu0 %v411
    %614 = vmatprep.subr.mxu0 %v418
    %615 = vmatpush1.msra.mxu0 %v417
    %616 = vmatprep.subr.mxu0 %v424
    %617 = vmatpush1.msra.mxu0 %v423
    %618 = vmatprep.subr.mxu0 %v430
    %619 = vmatpush1.msra.mxu0 %v429
    %620 = vmatprep.subr.mxu0 %v436
    %621 = vmatpush1.msra.mxu0 %v435
    %622 = vmatprep.subr.mxu0 %v442
    %623 = vmatpush1.msra.mxu0 %v441
    %624 = vmatprep.subr.mxu0 %v448
    %625 = vmatpush1.msra.mxu0 %v447
    %626 = vmatprep.subr.mxu0 %v454
    %627 = vmatpush1.msra.mxu0 %v453
    %628 = vmatprep.subr.mxu0 %v460
    %629 = vmatpush1.msra.mxu0 %v459
    %630 = vmatprep.mubr.f32.mxu0 %v268
    %631 = vmatmul.mubr.f32.gmra.mrb[0].mxu0 %v266
    %v632 = vpop.f32.mrb[0].mxu0
    %v633 = vadd.f32 %v476, %v632
    %v634 = vpop.f32.mrb[0].mxu0
    %v635 = vadd.f32 %v480, %v634
    %636 = vdwg.mxu0
    %637 = vmatprep.subr.mxu0 %v276
    %638 = vmatpush1.msra.mxu0 %v275
    %639 = vmatprep.subr.mxu0 %v282
    %640 = vmatpush1.msra.mxu0 %v281
    %641 = vmatprep.subr.mxu0 %v288
    %642 = vmatpush1.msra.mxu0 %v287
    %643 = vmatprep.subr.mxu0 %v294
    %644 = vmatpush1.msra.mxu0 %v293
    %645 = vmatprep.subr.mxu0 %v300
    %646 = vmatpush1.msra.mxu0 %v299
    %647 = vmatprep.subr.mxu0 %v306
    %648 = vmatpush1.msra.mxu0 %v305
    %649 = vmatprep.subr.mxu0 %v312
    %650 = vmatpush1.msra.mxu0 %v311
    %651 = vmatprep.subr.mxu0 %v318
    %652 = vmatpush1.msra.mxu0 %v317
    %653 = vmatprep.subr.mxu0 %v324
    %654 = vmatpush1.msra.mxu0 %v323
    %655 = vmatprep.subr.mxu0 %v330
    %656 = vmatpush1.msra.mxu0 %v329
    %657 = vmatprep.subr.mxu0 %v336
    %658 = vmatpush1.msra.mxu0 %v335
    %659 = vmatprep.subr.mxu0 %v342
    %660 = vmatpush1.msra.mxu0 %v341
    %661 = vmatprep.subr.mxu0 %v348
    %662 = vmatpush1.msra.mxu0 %v347
    %663 = vmatprep.subr.mxu0 %v354
    %664 = vmatpush1.msra.mxu0 %v353
    %665 = vmatprep.subr.mxu0 %v360
    %666 = vmatpush1.msra.mxu0 %v359
    %667 = vmatprep.subr.mxu0 %v366
    %668 = vmatpush1.msra.mxu0 %v365
    %669 = vmatprep.subr.mxu0 %v372
    %670 = vmatpush1.msra.mxu0 %v371
    %671 = vmatprep.subr.mxu0 %v378
    %672 = vmatpush1.msra.mxu0 %v377
    %673 = vmatprep.subr.mxu0 %v384
    %674 = vmatpush1.msra.mxu0 %v383
    %675 = vmatprep.subr.mxu0 %v390
    %676 = vmatpush1.msra.mxu0 %v389
    %677 = vmatprep.subr.mxu0 %v396
    %678 = vmatpush1.msra.mxu0 %v395
    %679 = vmatprep.subr.mxu0 %v402
    %680 = vmatpush1.msra.mxu0 %v401
    %681 = vmatprep.subr.mxu0 %v408
    %682 = vmatpush1.msra.mxu0 %v407
    %683 = vmatprep.subr.mxu0 %v414
    %684 = vmatpush1.msra.mxu0 %v413
    %685 = vmatprep.subr.mxu0 %v420
    %686 = vmatpush1.msra.mxu0 %v419
    %687 = vmatprep.subr.mxu0 %v426
    %688 = vmatpush1.msra.mxu0 %v425
    %689 = vmatprep.subr.mxu0 %v432
    %690 = vmatpush1.msra.mxu0 %v431
    %691 = vmatprep.subr.mxu0 %v438
    %692 = vmatpush1.msra.mxu0 %v437
    %693 = vmatprep.subr.mxu0 %v444
    %694 = vmatpush1.msra.mxu0 %v443
    %695 = vmatprep.subr.mxu0 %v450
    %696 = vmatpush1.msra.mxu0 %v449
    %697 = vmatprep.subr.mxu0 %v456
    %698 = vmatpush1.msra.mxu0 %v455
    %699 = vmatprep.subr.mxu0 %v462
    %700 = vmatpush1.msra.mxu0 %v461
    %701 = vmatprep.mubr.f32.mxu0 %v268
    %702 = vmatmul.mubr.f32.gmra.mrb[0].mxu0 %v266
    %v703 = vpop.f32.mrb[0].mxu0
    %v704 = vadd.f32 %v484, %v703
    %v705 = vpop.f32.mrb[0].mxu0
    %v706 = vadd.f32 %v488, %v705
    %707 = vdwg.mxu0
    %v708 = vld [vmem:[%s9] sm:$0xff]
    %v709 = vld [vmem:[%s9 + $0x8] sm:$0xff]
    %v710 = vld [vmem:[%s9 + $0x10] sm:$0xff]
    %v711 = vld [vmem:[%s9 + $0x18] sm:$0xff]
    %v712 = vld [vmem:[%s9 + $0x20] sm:$0xff]
    %v713 = vld [vmem:[%s9 + $0x28] sm:$0xff]
    %v714 = vld [vmem:[%s9 + $0x30] sm:$0xff]
    %v715 = vld [vmem:[%s9 + $0x38] sm:$0xff]
    %v716 = vld [vmem:[%s9 + $0x40] sm:$0xff]
    %v717 = vld [vmem:[%s9 + $0x48] sm:$0xff]
    %v718 = vld [vmem:[%s9 + $0x50] sm:$0xff]
    %v719 = vld [vmem:[%s9 + $0x58] sm:$0xff]
    %v720 = vld [vmem:[%s9 + $0x60] sm:$0xff]
    %v721 = vld [vmem:[%s9 + $0x68] sm:$0xff]
    %v722 = vld [vmem:[%s9 + $0x70] sm:$0xff]
    %v723 = vld [vmem:[%s9 + $0x78] sm:$0xff]
    %v724 = vld [vmem:[%s9 + $0x80] sm:$0xff]
    %v725 = vld [vmem:[%s9 + $0x88] sm:$0xff]
    %v726 = vld [vmem:[%s9 + $0x90] sm:$0xff]
    %v727 = vld [vmem:[%s9 + $0x98] sm:$0xff]
    %v728 = vld [vmem:[%s9 + $0xa0] sm:$0xff]
    %v729 = vld [vmem:[%s9 + $0xa8] sm:$0xff]
    %v730 = vld [vmem:[%s9 + $0xb0] sm:$0xff]
    %v731 = vld [vmem:[%s9 + $0xb8] sm:$0xff]
    %v732 = vld [vmem:[%s9 + $0xc0] sm:$0xff]
    %v733 = vld [vmem:[%s9 + $0xc8] sm:$0xff]
    %v734 = vld [vmem:[%s9 + $0xd0] sm:$0xff]
    %v735 = vld [vmem:[%s9 + $0xd8] sm:$0xff]
    %v736 = vld [vmem:[%s9 + $0xe0] sm:$0xff]
    %v737 = vld [vmem:[%s9 + $0xe8] sm:$0xff]
    %v738 = vld [vmem:[%s9 + $0xf0] sm:$0xff]
    %v739 = vld [vmem:[%s9 + $0xf8] sm:$0xff]
    %v740 = vld [vmem:[%s9 + $0x100] sm:$0xff]
    %v741 = vld [vmem:[%s9 + $0x108] sm:$0xff]
    %v742 = vld [vmem:[%s9 + $0x110] sm:$0xff]
    %v743 = vld [vmem:[%s9 + $0x118] sm:$0xff]
    %v744 = vld [vmem:[%s9 + $0x120] sm:$0xff]
    %v745 = vld [vmem:[%s9 + $0x128] sm:$0xff]
    %v746 = vld [vmem:[%s9 + $0x130] sm:$0xff]
    %v747 = vld [vmem:[%s9 + $0x138] sm:$0xff]
    %v748 = vld [vmem:[%s9 + $0x140] sm:$0xff]
    %v749 = vld [vmem:[%s9 + $0x148] sm:$0xff]
    %v750 = vld [vmem:[%s9 + $0x150] sm:$0xff]
    %v751 = vld [vmem:[%s9 + $0x158] sm:$0xff]
    %v752 = vld [vmem:[%s9 + $0x160] sm:$0xff]
    %v753 = vld [vmem:[%s9 + $0x168] sm:$0xff]
    %v754 = vld [vmem:[%s9 + $0x170] sm:$0xff]
    %v755 = vld [vmem:[%s9 + $0x178] sm:$0xff]
    %v756 = vld [vmem:[%s9 + $0x180] sm:$0xff]
    %v757 = vld [vmem:[%s9 + $0x188] sm:$0xff]
    %v758 = vld [vmem:[%s9 + $0x190] sm:$0xff]
    %v759 = vld [vmem:[%s9 + $0x198] sm:$0xff]
    %v760 = vld [vmem:[%s9 + $0x1a0] sm:$0xff]
    %v761 = vld [vmem:[%s9 + $0x1a8] sm:$0xff]
    %v762 = vld [vmem:[%s9 + $0x1b0] sm:$0xff]
    %v763 = vld [vmem:[%s9 + $0x1b8] sm:$0xff]
    %v764 = vld [vmem:[%s9 + $0x1c0] sm:$0xff]
    %v765 = vld [vmem:[%s9 + $0x1c8] sm:$0xff]
    %v766 = vld [vmem:[%s9 + $0x1d0] sm:$0xff]
    %v767 = vld [vmem:[%s9 + $0x1d8] sm:$0xff]
    %v768 = vld [vmem:[%s9 + $0x1e0] sm:$0xff]
    %v769 = vld [vmem:[%s9 + $0x1e8] sm:$0xff]
    %v770 = vld [vmem:[%s9 + $0x1f0] sm:$0xff]
    %v771 = vld [vmem:[%s9 + $0x1f8] sm:$0xff]
    %v772 = vld [vmem:[%s9 + $0x200] sm:$0xff]
    %v773 = vld [vmem:[%s9 + $0x208] sm:$0xff]
    %v774 = vld [vmem:[%s9 + $0x210] sm:$0xff]
    %v775 = vld [vmem:[%s9 + $0x218] sm:$0xff]
    %v776 = vld [vmem:[%s9 + $0x220] sm:$0xff]
    %v777 = vld [vmem:[%s9 + $0x228] sm:$0xff]
    %v778 = vld [vmem:[%s9 + $0x230] sm:$0xff]
    %v779 = vld [vmem:[%s9 + $0x238] sm:$0xff]
    %v780 = vld [vmem:[%s9 + $0x240] sm:$0xff]
    %v781 = vld [vmem:[%s9 + $0x248] sm:$0xff]
    %v782 = vld [vmem:[%s9 + $0x250] sm:$0xff]
    %v783 = vld [vmem:[%s9 + $0x258] sm:$0xff]
    %v784 = vld [vmem:[%s9 + $0x260] sm:$0xff]
    %v785 = vld [vmem:[%s9 + $0x268] sm:$0xff]
    %v786 = vld [vmem:[%s9 + $0x270] sm:$0xff]
    %v787 = vld [vmem:[%s9 + $0x278] sm:$0xff]
    %v788 = vld [vmem:[%s9 + $0x280] sm:$0xff]
    %v789 = vld [vmem:[%s9 + $0x288] sm:$0xff]
    %v790 = vld [vmem:[%s9 + $0x290] sm:$0xff]
    %v791 = vld [vmem:[%s9 + $0x298] sm:$0xff]
    %v792 = vld [vmem:[%s9 + $0x2a0] sm:$0xff]
    %v793 = vld [vmem:[%s9 + $0x2a8] sm:$0xff]
    %v794 = vld [vmem:[%s9 + $0x2b0] sm:$0xff]
    %v795 = vld [vmem:[%s9 + $0x2b8] sm:$0xff]
    %v796 = vld [vmem:[%s9 + $0x2c0] sm:$0xff]
    %v797 = vld [vmem:[%s9 + $0x2c8] sm:$0xff]
    %v798 = vld [vmem:[%s9 + $0x2d0] sm:$0xff]
    %v799 = vld [vmem:[%s9 + $0x2d8] sm:$0xff]
    %v800 = vld [vmem:[%s9 + $0x2e0] sm:$0xff]
    %v801 = vld [vmem:[%s9 + $0x2e8] sm:$0xff]
    %v802 = vld [vmem:[%s9 + $0x2f0] sm:$0xff]
    %v803 = vld [vmem:[%s9 + $0x2f8] sm:$0xff]
    %v804 = vld [vmem:[%s9 + $0x300] sm:$0xff]
    %v805 = vld [vmem:[%s9 + $0x308] sm:$0xff]
    %v806 = vld [vmem:[%s9 + $0x310] sm:$0xff]
    %v807 = vld [vmem:[%s9 + $0x318] sm:$0xff]
    %v808 = vld [vmem:[%s9 + $0x320] sm:$0xff]
    %v809 = vld [vmem:[%s9 + $0x328] sm:$0xff]
    %v810 = vld [vmem:[%s9 + $0x330] sm:$0xff]
    %v811 = vld [vmem:[%s9 + $0x338] sm:$0xff]
    %v812 = vld [vmem:[%s9 + $0x340] sm:$0xff]
    %v813 = vld [vmem:[%s9 + $0x348] sm:$0xff]
    %v814 = vld [vmem:[%s9 + $0x350] sm:$0xff]
    %v815 = vld [vmem:[%s9 + $0x358] sm:$0xff]
    %v816 = vld [vmem:[%s9 + $0x360] sm:$0xff]
    %v817 = vld [vmem:[%s9 + $0x368] sm:$0xff]
    %v818 = vld [vmem:[%s9 + $0x370] sm:$0xff]
    %v819 = vld [vmem:[%s9 + $0x378] sm:$0xff]
    %v820 = vld [vmem:[%s9 + $0x380] sm:$0xff]
    %v821 = vld [vmem:[%s9 + $0x388] sm:$0xff]
    %v822 = vld [vmem:[%s9 + $0x390] sm:$0xff]
    %v823 = vld [vmem:[%s9 + $0x398] sm:$0xff]
    %v824 = vld [vmem:[%s9 + $0x3a0] sm:$0xff]
    %v825 = vld [vmem:[%s9 + $0x3a8] sm:$0xff]
    %v826 = vld [vmem:[%s9 + $0x3b0] sm:$0xff]
    %v827 = vld [vmem:[%s9 + $0x3b8] sm:$0xff]
    %v828 = vld [vmem:[%s9 + $0x3c0] sm:$0xff]
    %v829 = vld [vmem:[%s9 + $0x3c8] sm:$0xff]
    %v830 = vld [vmem:[%s9 + $0x3d0] sm:$0xff]
    %v831 = vld [vmem:[%s9 + $0x3d8] sm:$0xff]
    %v832 = vld [vmem:[%s9 + $0x3e0] sm:$0xff]
    %v833 = vld [vmem:[%s9 + $0x3e8] sm:$0xff]
    %v834 = vld [vmem:[%s9 + $0x3f0] sm:$0xff]
    %v835 = vld [vmem:[%s9 + $0x3f8] sm:$0xff]
    %v836 = vld [vmem:[%s9 + $0x400] sm:$0xff]
    %v837 = vld [vmem:[%s9 + $0x408] sm:$0xff]
    %v838 = vld [vmem:[%s9 + $0x410] sm:$0xff]
    %v839 = vld [vmem:[%s9 + $0x418] sm:$0xff]
    %v840 = vld [vmem:[%s9 + $0x420] sm:$0xff]
    %v841 = vld [vmem:[%s9 + $0x428] sm:$0xff]
    %v842 = vld [vmem:[%s9 + $0x430] sm:$0xff]
    %v843 = vld [vmem:[%s9 + $0x438] sm:$0xff]
    %v844 = vld [vmem:[%s9 + $0x440] sm:$0xff]
    %v845 = vld [vmem:[%s9 + $0x448] sm:$0xff]
    %v846 = vld [vmem:[%s9 + $0x450] sm:$0xff]
    %v847 = vld [vmem:[%s9 + $0x458] sm:$0xff]
    %v848 = vld [vmem:[%s9 + $0x460] sm:$0xff]
    %v849 = vld [vmem:[%s9 + $0x468] sm:$0xff]
    %v850 = vld [vmem:[%s9 + $0x470] sm:$0xff]
    %v851 = vld [vmem:[%s9 + $0x478] sm:$0xff]
    %v852 = vld [vmem:[%s9 + $0x480] sm:$0xff]
    %v853 = vld [vmem:[%s9 + $0x488] sm:$0xff]
    %v854 = vld [vmem:[%s9 + $0x490] sm:$0xff]
    %v855 = vld [vmem:[%s9 + $0x498] sm:$0xff]
    %v856 = vld [vmem:[%s9 + $0x4a0] sm:$0xff]
    %v857 = vld [vmem:[%s9 + $0x4a8] sm:$0xff]
    %v858 = vld [vmem:[%s9 + $0x4b0] sm:$0xff]
    %v859 = vld [vmem:[%s9 + $0x4b8] sm:$0xff]
    %v860 = vld [vmem:[%s9 + $0x4c0] sm:$0xff]
    %v861 = vld [vmem:[%s9 + $0x4c8] sm:$0xff]
    %v862 = vld [vmem:[%s9 + $0x4d0] sm:$0xff]
    %v863 = vld [vmem:[%s9 + $0x4d8] sm:$0xff]
    %v864 = vld [vmem:[%s9 + $0x4e0] sm:$0xff]
    %v865 = vld [vmem:[%s9 + $0x4e8] sm:$0xff]
    %v866 = vld [vmem:[%s9 + $0x4f0] sm:$0xff]
    %v867 = vld [vmem:[%s9 + $0x4f8] sm:$0xff]
    %v868 = vld [vmem:[%s9 + $0x500] sm:$0xff]
    %v869 = vld [vmem:[%s9 + $0x508] sm:$0xff]
    %v870 = vld [vmem:[%s9 + $0x510] sm:$0xff]
    %v871 = vld [vmem:[%s9 + $0x518] sm:$0xff]
    %v872 = vld [vmem:[%s9 + $0x520] sm:$0xff]
    %v873 = vld [vmem:[%s9 + $0x528] sm:$0xff]
    %v874 = vld [vmem:[%s9 + $0x530] sm:$0xff]
    %v875 = vld [vmem:[%s9 + $0x538] sm:$0xff]
    %v876 = vld [vmem:[%s9 + $0x540] sm:$0xff]
    %v877 = vld [vmem:[%s9 + $0x548] sm:$0xff]
    %v878 = vld [vmem:[%s9 + $0x550] sm:$0xff]
    %v879 = vld [vmem:[%s9 + $0x558] sm:$0xff]
    %v880 = vld [vmem:[%s9 + $0x560] sm:$0xff]
    %v881 = vld [vmem:[%s9 + $0x568] sm:$0xff]
    %v882 = vld [vmem:[%s9 + $0x570] sm:$0xff]
    %v883 = vld [vmem:[%s9 + $0x578] sm:$0xff]
    %v884 = vld [vmem:[%s9 + $0x580] sm:$0xff]
    %v885 = vld [vmem:[%s9 + $0x588] sm:$0xff]
    %v886 = vld [vmem:[%s9 + $0x590] sm:$0xff]
    %v887 = vld [vmem:[%s9 + $0x598] sm:$0xff]
    %v888 = vld [vmem:[%s9 + $0x5a0] sm:$0xff]
    %v889 = vld [vmem:[%s9 + $0x5a8] sm:$0xff]
    %v890 = vld [vmem:[%s9 + $0x5b0] sm:$0xff]
    %v891 = vld [vmem:[%s9 + $0x5b8] sm:$0xff]
    %v892 = vld [vmem:[%s9 + $0x5c0] sm:$0xff]
    %v893 = vld [vmem:[%s9 + $0x5c8] sm:$0xff]
    %v894 = vld [vmem:[%s9 + $0x5d0] sm:$0xff]
    %v895 = vld [vmem:[%s9 + $0x5d8] sm:$0xff]
    %v896 = vld [vmem:[%s9 + $0x5e0] sm:$0xff]
    %v897 = vld [vmem:[%s9 + $0x5e8] sm:$0xff]
    %v898 = vld [vmem:[%s9 + $0x5f0] sm:$0xff]
    %v899 = vld [vmem:[%s9 + $0x5f8] sm:$0xff]
    %v900 = vld [vmem:[%s13] sm:$0x3f]
    %v902 = vlaneseq
    %v903 = vshrl.u32 %v902, 7
    %v904 = vsub.s32 0, %v903
    %v905 = vrot.slane %v900, %v904
    %v906 = vlaneseq
    %v907 = vshrl.u32 %v906, 7
    %v908 = vsub.s32 1, %v907
    %v909 = vrot.slane %v900, %v908
    %v910 = vlaneseq
    %v911 = vshrl.u32 %v910, 7
    %v912 = vsub.s32 2, %v911
    %v913 = vrot.slane %v900, %v912
    %v914 = vlaneseq
    %v915 = vshrl.u32 %v914, 7
    %v916 = vsub.s32 3, %v915
    %v917 = vrot.slane %v900, %v916
    %v918 = vlaneseq
    %v919 = vshrl.u32 %v918, 7
    %v920 = vsub.s32 4, %v919
    %v921 = vrot.slane %v900, %v920
    %v922 = vlaneseq
    %v923 = vshrl.u32 %v922, 7
    %v924 = vsub.s32 5, %v923
    %v925 = vrot.slane %v900, %v924
    %v934 = vunpack.c.l.s4 1983009808
    %v935 = vunpack.c.0.s8 %v934
    %v936 = vlaneseq
    %v937 = vshrl.u32 %v936, 7
    %v938 = vsub.s32 %v935, %v937
    %v939 = vrot.slane %v270, %v938
    %v940 = vcombine.high %v939, %v939
    %943 = vmatprep.subr.mxu0 %v709
    %944 = vmatpush1.msra.mxu0 %v708
    %945 = vmatprep.subr.mxu0 %v715
    %946 = vmatpush1.msra.mxu0 %v714
    %947 = vmatprep.subr.mxu0 %v721
    %948 = vmatpush1.msra.mxu0 %v720
    %949 = vmatprep.subr.mxu0 %v727
    %950 = vmatpush1.msra.mxu0 %v726
    %951 = vmatprep.subr.mxu0 %v733
    %952 = vmatpush1.msra.mxu0 %v732
    %953 = vmatprep.subr.mxu0 %v739
    %954 = vmatpush1.msra.mxu0 %v738
    %955 = vmatprep.subr.mxu0 %v745
    %956 = vmatpush1.msra.mxu0 %v744
    %957 = vmatprep.subr.mxu0 %v751
    %958 = vmatpush1.msra.mxu0 %v750
    %959 = vmatprep.subr.mxu0 %v757
    %960 = vmatpush1.msra.mxu0 %v756
    %961 = vmatprep.subr.mxu0 %v763
    %962 = vmatpush1.msra.mxu0 %v762
    %963 = vmatprep.subr.mxu0 %v769
    %964 = vmatpush1.msra.mxu0 %v768
    %965 = vmatprep.subr.mxu0 %v775
    %966 = vmatpush1.msra.mxu0 %v774
    %967 = vmatprep.subr.mxu0 %v781
    %968 = vmatpush1.msra.mxu0 %v780
    %969 = vmatprep.subr.mxu0 %v787
    %970 = vmatpush1.msra.mxu0 %v786
    %971 = vmatprep.subr.mxu0 %v793
    %972 = vmatpush1.msra.mxu0 %v792
    %973 = vmatprep.subr.mxu0 %v799
    %974 = vmatpush1.msra.mxu0 %v798
    %975 = vmatprep.subr.mxu0 %v805
    %976 = vmatpush1.msra.mxu0 %v804
    %977 = vmatprep.subr.mxu0 %v811
    %978 = vmatpush1.msra.mxu0 %v810
    %979 = vmatprep.subr.mxu0 %v817
    %980 = vmatpush1.msra.mxu0 %v816
    %981 = vmatprep.subr.mxu0 %v823
    %982 = vmatpush1.msra.mxu0 %v822
    %983 = vmatprep.subr.mxu0 %v829
    %984 = vmatpush1.msra.mxu0 %v828
    %985 = vmatprep.subr.mxu0 %v835
    %986 = vmatpush1.msra.mxu0 %v834
    %987 = vmatprep.subr.mxu0 %v841
    %988 = vmatpush1.msra.mxu0 %v840
    %989 = vmatprep.subr.mxu0 %v847
    %990 = vmatpush1.msra.mxu0 %v846
    %991 = vmatprep.subr.mxu0 %v853
    %992 = vmatpush1.msra.mxu0 %v852
    %993 = vmatprep.subr.mxu0 %v859
    %994 = vmatpush1.msra.mxu0 %v858
    %995 = vmatprep.subr.mxu0 %v865
    %996 = vmatpush1.msra.mxu0 %v864
    %997 = vmatprep.subr.mxu0 %v871
    %998 = vmatpush1.msra.mxu0 %v870
    %999 = vmatprep.subr.mxu0 %v877
    %1000 = vmatpush1.msra.mxu0 %v876
    %1001 = vmatprep.subr.mxu0 %v883
    %1002 = vmatpush1.msra.mxu0 %v882
    %1003 = vmatprep.subr.mxu0 %v889
    %1004 = vmatpush1.msra.mxu0 %v888
    %1005 = vmatprep.subr.mxu0 %v895
    %1006 = vmatpush1.msra.mxu0 %v894
    %1007 = vmatprep.mubr.f32.mxu0 %v940
    %1008 = vmatmul.mubr.f32.gmra.mrb[0].mxu0 %v939
    %v1009 = vpop.f32.mrb[0].mxu0
    %v1010 = vadd.f32 %v905, %v1009
    %v1011 = vpop.f32.mrb[0].mxu0
    %v1012 = vadd.f32 %v909, %v1011
    %1013 = vdwg.mxu0
    %1014 = vmatprep.subr.mxu0 %v711
    %1015 = vmatpush1.msra.mxu0 %v710
    %1016 = vmatprep.subr.mxu0 %v717
    %1017 = vmatpush1.msra.mxu0 %v716
    %1018 = vmatprep.subr.mxu0 %v723
    %1019 = vmatpush1.msra.mxu0 %v722
    %1020 = vmatprep.subr.mxu0 %v729
    %1021 = vmatpush1.msra.mxu0 %v728
    %1022 = vmatprep.subr.mxu0 %v735
    %1023 = vmatpush1.msra.mxu0 %v734
    %1024 = vmatprep.subr.mxu0 %v741
    %1025 = vmatpush1.msra.mxu0 %v740
    %1026 = vmatprep.subr.mxu0 %v747
    %1027 = vmatpush1.msra.mxu0 %v746
    %1028 = vmatprep.subr.mxu0 %v753
    %1029 = vmatpush1.msra.mxu0 %v752
    %1030 = vmatprep.subr.mxu0 %v759
    %1031 = vmatpush1.msra.mxu0 %v758
    %1032 = vmatprep.subr.mxu0 %v765
    %1033 = vmatpush1.msra.mxu0 %v764
    %1034 = vmatprep.subr.mxu0 %v771
    %1035 = vmatpush1.msra.mxu0 %v770
    %1036 = vmatprep.subr.mxu0 %v777
    %1037 = vmatpush1.msra.mxu0 %v776
    %1038 = vmatprep.subr.mxu0 %v783
    %1039 = vmatpush1.msra.mxu0 %v782
    %1040 = vmatprep.subr.mxu0 %v789
    %1041 = vmatpush1.msra.mxu0 %v788
    %1042 = vmatprep.subr.mxu0 %v795
    %1043 = vmatpush1.msra.mxu0 %v794
    %1044 = vmatprep.subr.mxu0 %v801
    %1045 = vmatpush1.msra.mxu0 %v800
    %1046 = vmatprep.subr.mxu0 %v807
    %1047 = vmatpush1.msra.mxu0 %v806
    %1048 = vmatprep.subr.mxu0 %v813
    %1049 = vmatpush1.msra.mxu0 %v812
    %1050 = vmatprep.subr.mxu0 %v819
    %1051 = vmatpush1.msra.mxu0 %v818
    %1052 = vmatprep.subr.mxu0 %v825
    %1053 = vmatpush1.msra.mxu0 %v824
    %1054 = vmatprep.subr.mxu0 %v831
    %1055 = vmatpush1.msra.mxu0 %v830
    %1056 = vmatprep.subr.mxu0 %v837
    %1057 = vmatpush1.msra.mxu0 %v836
    %1058 = vmatprep.subr.mxu0 %v843
    %1059 = vmatpush1.msra.mxu0 %v842
    %1060 = vmatprep.subr.mxu0 %v849
    %1061 = vmatpush1.msra.mxu0 %v848
    %1062 = vmatprep.subr.mxu0 %v855
    %1063 = vmatpush1.msra.mxu0 %v854
    %1064 = vmatprep.subr.mxu0 %v861
    %1065 = vmatpush1.msra.mxu0 %v860
    %1066 = vmatprep.subr.mxu0 %v867
    %1067 = vmatpush1.msra.mxu0 %v866
    %1068 = vmatprep.subr.mxu0 %v873
    %1069 = vmatpush1.msra.mxu0 %v872
    %1070 = vmatprep.subr.mxu0 %v879
    %1071 = vmatpush1.msra.mxu0 %v878
    %1072 = vmatprep.subr.mxu0 %v885
    %1073 = vmatpush1.msra.mxu0 %v884
    %1074 = vmatprep.subr.mxu0 %v891
    %1075 = vmatpush1.msra.mxu0 %v890
    %1076 = vmatprep.subr.mxu0 %v897
    %1077 = vmatpush1.msra.mxu0 %v896
    %1078 = vmatprep.mubr.f32.mxu0 %v940
    %1079 = vmatmul.mubr.f32.gmra.mrb[0].mxu0 %v939
    %v1080 = vpop.f32.mrb[0].mxu0
    %v1081 = vadd.f32 %v913, %v1080
    %v1082 = vpop.f32.mrb[0].mxu0
    %v1083 = vadd.f32 %v917, %v1082
    %1084 = vdwg.mxu0
    %1085 = vmatprep.subr.mxu0 %v713
    %1086 = vmatpush1.msra.mxu0 %v712
    %1087 = vmatprep.subr.mxu0 %v719
    %1088 = vmatpush1.msra.mxu0 %v718
    %1089 = vmatprep.subr.mxu0 %v725
    %1090 = vmatpush1.msra.mxu0 %v724
    %1091 = vmatprep.subr.mxu0 %v731
    %1092 = vmatpush1.msra.mxu0 %v730
    %1093 = vmatprep.subr.mxu0 %v737
    %1094 = vmatpush1.msra.mxu0 %v736
    %1095 = vmatprep.subr.mxu0 %v743
    %1096 = vmatpush1.msra.mxu0 %v742
    %1097 = vmatprep.subr.mxu0 %v749
    %1098 = vmatpush1.msra.mxu0 %v748
    %1099 = vmatprep.subr.mxu0 %v755
    %1100 = vmatpush1.msra.mxu0 %v754
    %1101 = vmatprep.subr.mxu0 %v761
    %1102 = vmatpush1.msra.mxu0 %v760
    %1103 = vmatprep.subr.mxu0 %v767
    %1104 = vmatpush1.msra.mxu0 %v766
    %1105 = vmatprep.subr.mxu0 %v773
    %1106 = vmatpush1.msra.mxu0 %v772
    %1107 = vmatprep.subr.mxu0 %v779
    %1108 = vmatpush1.msra.mxu0 %v778
    %1109 = vmatprep.subr.mxu0 %v785
    %1110 = vmatpush1.msra.mxu0 %v784
    %1111 = vmatprep.subr.mxu0 %v791
    %1112 = vmatpush1.msra.mxu0 %v790
    %1113 = vmatprep.subr.mxu0 %v797
    %1114 = vmatpush1.msra.mxu0 %v796
    %1115 = vmatprep.subr.mxu0 %v803
    %1116 = vmatpush1.msra.mxu0 %v802
    %1117 = vmatprep.subr.mxu0 %v809
    %1118 = vmatpush1.msra.mxu0 %v808
    %1119 = vmatprep.subr.mxu0 %v815
    %1120 = vmatpush1.msra.mxu0 %v814
    %1121 = vmatprep.subr.mxu0 %v821
    %1122 = vmatpush1.msra.mxu0 %v820
    %1123 = vmatprep.subr.mxu0 %v827
    %1124 = vmatpush1.msra.mxu0 %v826
    %1125 = vmatprep.subr.mxu0 %v833
    %1126 = vmatpush1.msra.mxu0 %v832
    %1127 = vmatprep.subr.mxu0 %v839
    %1128 = vmatpush1.msra.mxu0 %v838
    %1129 = vmatprep.subr.mxu0 %v845
    %1130 = vmatpush1.msra.mxu0 %v844
    %1131 = vmatprep.subr.mxu0 %v851
    %1132 = vmatpush1.msra.mxu0 %v850
    %1133 = vmatprep.subr.mxu0 %v857
    %1134 = vmatpush1.msra.mxu0 %v856
    %1135 = vmatprep.subr.mxu0 %v863
    %1136 = vmatpush1.msra.mxu0 %v862
    %1137 = vmatprep.subr.mxu0 %v869
    %1138 = vmatpush1.msra.mxu0 %v868
    %1139 = vmatprep.subr.mxu0 %v875
    %1140 = vmatpush1.msra.mxu0 %v874
    %1141 = vmatprep.subr.mxu0 %v881
    %1142 = vmatpush1.msra.mxu0 %v880
    %1143 = vmatprep.subr.mxu0 %v887
    %1144 = vmatpush1.msra.mxu0 %v886
    %1145 = vmatprep.subr.mxu0 %v893
    %1146 = vmatpush1.msra.mxu0 %v892
    %1147 = vmatprep.subr.mxu0 %v899
    %1148 = vmatpush1.msra.mxu0 %v898
    %1149 = vmatprep.mubr.f32.mxu0 %v940
    %1150 = vmatmul.mubr.f32.gmra.mrb[0].mxu0 %v939
    %v1151 = vpop.f32.mrb[0].mxu0
    %v1152 = vadd.f32 %v921, %v1151
    %v1153 = vpop.f32.mrb[0].mxu0
    %v1154 = vadd.f32 %v925, %v1153
    %1155 = vdwg.mxu0
    %v1156 = vadd.f32 %v562, %v1010
    %v1157 = vadd.f32 %v564, %v1012
    %v1158 = vsub.f32 0.0, %v1156
    %v1159 = vsub.f32 0.0, %v1157
    %v1160 = vmul.f32 %v1158, 1.442695
    %v1161 = vpow.pop %v1160
    %v1162 = vmul.f32 %v1159, 1.442695
    %v1163 = vpow.pop %v1162
    %v1164 = vadd.f32 %v1161, 1.0
    %v1165 = vadd.f32 %v1163, 1.0
    %v1166 = vrcp.pop %v1164
    %v1167 = vmul.f32 1.0, %v1166
    %v1168 = vrcp.pop %v1165
    %v1169 = vmul.f32 1.0, %v1168
    %v1170 = vadd.f32 %v633, %v1081
    %v1171 = vadd.f32 %v635, %v1083
    %v1172 = vsub.f32 0.0, %v1170
    %v1173 = vsub.f32 0.0, %v1171
    %v1174 = vmul.f32 %v1172, 1.442695
    %v1175 = vpow.pop %v1174
    %v1176 = vmul.f32 %v1173, 1.442695
    %v1177 = vpow.pop %v1176
    %v1178 = vadd.f32 %v1175, 1.0
    %v1179 = vadd.f32 %v1177, 1.0
    %v1180 = vrcp.pop %v1178
    %v1181 = vmul.f32 1.0, %v1180
    %v1182 = vrcp.pop %v1179
    %v1183 = vmul.f32 1.0, %v1182
    %v1184 = vmul.f32 %v1167, %v1152
    %v1185 = vmul.f32 %v1169, %v1154
    %v1186 = vadd.f32 %v704, %v1184
    %v1187 = vadd.f32 %v706, %v1185
    %v1188 = vtanh.pop %v1186
    %v1189 = vtanh.pop %v1187
    %v1190 = vsub.f32 1.0, %v1181
    %v1191 = vsub.f32 1.0, %v1183
    %v1192 = vmul.f32 %v1190, %v1188
    %v1193 = vmul.f32 %v1191, %v1189
    %v1194 = vmul.f32 %v1181, %v939
    %v1195 = vmul.f32 %v1183, %v940
    %v1196 = vadd.f32 %v1192, %v1194
    %v1197 = vadd.f32 %v1193, %v1195
    %v1198 = vld [vmem:[%s15] sm:$0xff]
    %v1199 = vld [vmem:[%s15 + $0x8] sm:$0xff]
    %v1200 = vld [vmem:[%s15 + $0x10] sm:$0xff]
    %v1201 = vld [vmem:[%s15 + $0x18] sm:$0xff]
    %v1202 = vld [vmem:[%s15 + $0x20] sm:$0xff]
    %v1203 = vld [vmem:[%s15 + $0x28] sm:$0xff]
    %v1204 = vld [vmem:[%s15 + $0x30] sm:$0xff]
    %v1205 = vld [vmem:[%s15 + $0x38] sm:$0xff]
    %v1206 = vld [vmem:[%s15 + $0x40] sm:$0xff]
    %v1207 = vld [vmem:[%s15 + $0x48] sm:$0xff]
    %v1208 = vld [vmem:[%s15 + $0x50] sm:$0xff]
    %v1209 = vld [vmem:[%s15 + $0x58] sm:$0xff]
    %v1210 = vld [vmem:[%s15 + $0x60] sm:$0xff]
    %v1211 = vld [vmem:[%s15 + $0x68] sm:$0xff]
    %v1212 = vld [vmem:[%s15 + $0x70] sm:$0xff]
    %v1213 = vld [vmem:[%s15 + $0x78] sm:$0xff]
    %v1214 = vld [vmem:[%s15 + $0x80] sm:$0xff]
    %v1215 = vld [vmem:[%s15 + $0x88] sm:$0xff]
    %v1216 = vld [vmem:[%s15 + $0x90] sm:$0xff]
    %v1217 = vld [vmem:[%s15 + $0x98] sm:$0xff]
    %v1218 = vld [vmem:[%s15 + $0xa0] sm:$0xff]
    %v1219 = vld [vmem:[%s15 + $0xa8] sm:$0xff]
    %v1220 = vld [vmem:[%s15 + $0xb0] sm:$0xff]
    %v1221 = vld [vmem:[%s15 + $0xb8] sm:$0xff]
    %v1222 = vld [vmem:[%s15 + $0xc0] sm:$0xff]
    %v1223 = vld [vmem:[%s15 + $0xc8] sm:$0xff]
    %v1224 = vld [vmem:[%s15 + $0xd0] sm:$0xff]
    %v1225 = vld [vmem:[%s15 + $0xd8] sm:$0xff]
    %v1226 = vld [vmem:[%s15 + $0xe0] sm:$0xff]
    %v1227 = vld [vmem:[%s15 + $0xe8] sm:$0xff]
    %v1228 = vld [vmem:[%s15 + $0xf0] sm:$0xff]
    %v1229 = vld [vmem:[%s15 + $0xf8] sm:$0xff]
    %v1230 = vld [vmem:[%s15 + $0x100] sm:$0xff]
    %v1231 = vld [vmem:[%s15 + $0x108] sm:$0xff]
    %v1232 = vld [vmem:[%s15 + $0x110] sm:$0xff]
    %v1233 = vld [vmem:[%s15 + $0x118] sm:$0xff]
    %v1234 = vld [vmem:[%s15 + $0x120] sm:$0xff]
    %v1235 = vld [vmem:[%s15 + $0x128] sm:$0xff]
    %v1236 = vld [vmem:[%s15 + $0x130] sm:$0xff]
    %v1237 = vld [vmem:[%s15 + $0x138] sm:$0xff]
    %v1238 = vld [vmem:[%s15 + $0x140] sm:$0xff]
    %v1239 = vld [vmem:[%s15 + $0x148] sm:$0xff]
    %v1240 = vld [vmem:[%s15 + $0x150] sm:$0xff]
    %v1241 = vld [vmem:[%s15 + $0x158] sm:$0xff]
    %v1242 = vld [vmem:[%s15 + $0x160] sm:$0xff]
    %v1243 = vld [vmem:[%s15 + $0x168] sm:$0xff]
    %v1244 = vld [vmem:[%s15 + $0x170] sm:$0xff]
    %v1245 = vld [vmem:[%s15 + $0x178] sm:$0xff]
    %v1246 = vld [vmem:[%s15 + $0x180] sm:$0xff]
    %v1247 = vld [vmem:[%s15 + $0x188] sm:$0xff]
    %v1248 = vld [vmem:[%s15 + $0x190] sm:$0xff]
    %v1249 = vld [vmem:[%s15 + $0x198] sm:$0xff]
    %v1250 = vld [vmem:[%s15 + $0x1a0] sm:$0xff]
    %v1251 = vld [vmem:[%s15 + $0x1a8] sm:$0xff]
    %v1252 = vld [vmem:[%s15 + $0x1b0] sm:$0xff]
    %v1253 = vld [vmem:[%s15 + $0x1b8] sm:$0xff]
    %v1254 = vld [vmem:[%s15 + $0x1c0] sm:$0xff]
    %v1255 = vld [vmem:[%s15 + $0x1c8] sm:$0xff]
    %v1256 = vld [vmem:[%s15 + $0x1d0] sm:$0xff]
    %v1257 = vld [vmem:[%s15 + $0x1d8] sm:$0xff]
    %v1258 = vld [vmem:[%s15 + $0x1e0] sm:$0xff]
    %v1259 = vld [vmem:[%s15 + $0x1e8] sm:$0xff]
    %v1260 = vld [vmem:[%s15 + $0x1f0] sm:$0xff]
    %v1261 = vld [vmem:[%s15 + $0x1f8] sm:$0xff]
    %v1262 = vld [vmem:[%s15 + $0x200] sm:$0xff]
    %v1263 = vld [vmem:[%s15 + $0x208] sm:$0xff]
    %v1264 = vld [vmem:[%s15 + $0x210] sm:$0xff]
    %v1265 = vld [vmem:[%s15 + $0x218] sm:$0xff]
    %v1266 = vld [vmem:[%s15 + $0x220] sm:$0xff]
    %v1267 = vld [vmem:[%s15 + $0x228] sm:$0xff]
    %v1268 = vld [vmem:[%s15 + $0x230] sm:$0xff]
    %v1269 = vld [vmem:[%s15 + $0x238] sm:$0xff]
    %v1270 = vld [vmem:[%s15 + $0x240] sm:$0xff]
    %v1271 = vld [vmem:[%s15 + $0x248] sm:$0xff]
    %v1272 = vld [vmem:[%s15 + $0x250] sm:$0xff]
    %v1273 = vld [vmem:[%s15 + $0x258] sm:$0xff]
    %v1274 = vld [vmem:[%s15 + $0x260] sm:$0xff]
    %v1275 = vld [vmem:[%s15 + $0x268] sm:$0xff]
    %v1276 = vld [vmem:[%s15 + $0x270] sm:$0xff]
    %v1277 = vld [vmem:[%s15 + $0x278] sm:$0xff]
    %v1278 = vld [vmem:[%s15 + $0x280] sm:$0xff]
    %v1279 = vld [vmem:[%s15 + $0x288] sm:$0xff]
    %v1280 = vld [vmem:[%s15 + $0x290] sm:$0xff]
    %v1281 = vld [vmem:[%s15 + $0x298] sm:$0xff]
    %v1282 = vld [vmem:[%s15 + $0x2a0] sm:$0xff]
    %v1283 = vld [vmem:[%s15 + $0x2a8] sm:$0xff]
    %v1284 = vld [vmem:[%s15 + $0x2b0] sm:$0xff]
    %v1285 = vld [vmem:[%s15 + $0x2b8] sm:$0xff]
    %v1286 = vld [vmem:[%s15 + $0x2c0] sm:$0xff]
    %v1287 = vld [vmem:[%s15 + $0x2c8] sm:$0xff]
    %v1288 = vld [vmem:[%s15 + $0x2d0] sm:$0xff]
    %v1289 = vld [vmem:[%s15 + $0x2d8] sm:$0xff]
    %v1290 = vld [vmem:[%s15 + $0x2e0] sm:$0xff]
    %v1291 = vld [vmem:[%s15 + $0x2e8] sm:$0xff]
    %v1292 = vld [vmem:[%s15 + $0x2f0] sm:$0xff]
    %v1293 = vld [vmem:[%s15 + $0x2f8] sm:$0xff]
    %v1294 = vld [vmem:[%s15 + $0x300] sm:$0xff]
    %v1295 = vld [vmem:[%s15 + $0x308] sm:$0xff]
    %v1296 = vld [vmem:[%s15 + $0x310] sm:$0xff]
    %v1297 = vld [vmem:[%s15 + $0x318] sm:$0xff]
    %v1298 = vld [vmem:[%s15 + $0x320] sm:$0xff]
    %v1299 = vld [vmem:[%s15 + $0x328] sm:$0xff]
    %v1300 = vld [vmem:[%s15 + $0x330] sm:$0xff]
    %v1301 = vld [vmem:[%s15 + $0x338] sm:$0xff]
    %v1302 = vld [vmem:[%s15 + $0x340] sm:$0xff]
    %v1303 = vld [vmem:[%s15 + $0x348] sm:$0xff]
    %v1304 = vld [vmem:[%s15 + $0x350] sm:$0xff]
    %v1305 = vld [vmem:[%s15 + $0x358] sm:$0xff]
    %v1306 = vld [vmem:[%s15 + $0x360] sm:$0xff]
    %v1307 = vld [vmem:[%s15 + $0x368] sm:$0xff]
    %v1308 = vld [vmem:[%s15 + $0x370] sm:$0xff]
    %v1309 = vld [vmem:[%s15 + $0x378] sm:$0xff]
    %v1310 = vld [vmem:[%s15 + $0x380] sm:$0xff]
    %v1311 = vld [vmem:[%s15 + $0x388] sm:$0xff]
    %v1312 = vld [vmem:[%s15 + $0x390] sm:$0xff]
    %v1313 = vld [vmem:[%s15 + $0x398] sm:$0xff]
    %v1314 = vld [vmem:[%s15 + $0x3a0] sm:$0xff]
    %v1315 = vld [vmem:[%s15 + $0x3a8] sm:$0xff]
    %v1316 = vld [vmem:[%s15 + $0x3b0] sm:$0xff]
    %v1317 = vld [vmem:[%s15 + $0x3b8] sm:$0xff]
    %v1318 = vld [vmem:[%s15 + $0x3c0] sm:$0xff]
    %v1319 = vld [vmem:[%s15 + $0x3c8] sm:$0xff]
    %v1320 = vld [vmem:[%s15 + $0x3d0] sm:$0xff]
    %v1321 = vld [vmem:[%s15 + $0x3d8] sm:$0xff]
    %v1322 = vld [vmem:[%s15 + $0x3e0] sm:$0xff]
    %v1323 = vld [vmem:[%s15 + $0x3e8] sm:$0xff]
    %v1324 = vld [vmem:[%s15 + $0x3f0] sm:$0xff]
    %v1325 = vld [vmem:[%s15 + $0x3f8] sm:$0xff]
    %1326 = vmatprep.subr.mxu0 %v1199
    %1327 = vmatpush1.msra.mxu0 %v1198
    %1328 = vmatprep.subr.mxu0 %v1203
    %1329 = vmatpush1.msra.mxu0 %v1202
    %1330 = vmatprep.subr.mxu0 %v1207
    %1331 = vmatpush1.msra.mxu0 %v1206
    %1332 = vmatprep.subr.mxu0 %v1211
    %1333 = vmatpush1.msra.mxu0 %v1210
    %1334 = vmatprep.subr.mxu0 %v1215
    %1335 = vmatpush1.msra.mxu0 %v1214
    %1336 = vmatprep.subr.mxu0 %v1219
    %1337 = vmatpush1.msra.mxu0 %v1218
    %1338 = vmatprep.subr.mxu0 %v1223
    %1339 = vmatpush1.msra.mxu0 %v1222
    %1340 = vmatprep.subr.mxu0 %v1227
    %1341 = vmatpush1.msra.mxu0 %v1226
    %1342 = vmatprep.subr.mxu0 %v1231
    %1343 = vmatpush1.msra.mxu0 %v1230
    %1344 = vmatprep.subr.mxu0 %v1235
    %1345 = vmatpush1.msra.mxu0 %v1234
    %1346 = vmatprep.subr.mxu0 %v1239
    %1347 = vmatpush1.msra.mxu0 %v1238
    %1348 = vmatprep.subr.mxu0 %v1243
    %1349 = vmatpush1.msra.mxu0 %v1242
    %1350 = vmatprep.subr.mxu0 %v1247
    %1351 = vmatpush1.msra.mxu0 %v1246
    %1352 = vmatprep.subr.mxu0 %v1251
    %1353 = vmatpush1.msra.mxu0 %v1250
    %1354 = vmatprep.subr.mxu0 %v1255
    %1355 = vmatpush1.msra.mxu0 %v1254
    %1356 = vmatprep.subr.mxu0 %v1259
    %1357 = vmatpush1.msra.mxu0 %v1258
    %1358 = vmatprep.subr.mxu0 %v1263
    %1359 = vmatpush1.msra.mxu0 %v1262
    %1360 = vmatprep.subr.mxu0 %v1267
    %1361 = vmatpush1.msra.mxu0 %v1266
    %1362 = vmatprep.subr.mxu0 %v1271
    %1363 = vmatpush1.msra.mxu0 %v1270
    %1364 = vmatprep.subr.mxu0 %v1275
    %1365 = vmatpush1.msra.mxu0 %v1274
    %1366 = vmatprep.subr.mxu0 %v1279
    %1367 = vmatpush1.msra.mxu0 %v1278
    %1368 = vmatprep.subr.mxu0 %v1283
    %1369 = vmatpush1.msra.mxu0 %v1282
    %1370 = vmatprep.subr.mxu0 %v1287
    %1371 = vmatpush1.msra.mxu0 %v1286
    %1372 = vmatprep.subr.mxu0 %v1291
    %1373 = vmatpush1.msra.mxu0 %v1290
    %1374 = vmatprep.subr.mxu0 %v1295
    %1375 = vmatpush1.msra.mxu0 %v1294
    %1376 = vmatprep.subr.mxu0 %v1299
    %1377 = vmatpush1.msra.mxu0 %v1298
    %1378 = vmatprep.subr.mxu0 %v1303
    %1379 = vmatpush1.msra.mxu0 %v1302
    %1380 = vmatprep.subr.mxu0 %v1307
    %1381 = vmatpush1.msra.mxu0 %v1306
    %1382 = vmatprep.subr.mxu0 %v1311
    %1383 = vmatpush1.msra.mxu0 %v1310
    %1384 = vmatprep.subr.mxu0 %v1315
    %1385 = vmatpush1.msra.mxu0 %v1314
    %1386 = vmatprep.subr.mxu0 %v1319
    %1387 = vmatpush1.msra.mxu0 %v1318
    %1388 = vmatprep.subr.mxu0 %v1323
    %1389 = vmatpush1.msra.mxu0 %v1322
    %1390 = vmatprep.mubr.f32.mxu0 %v1197
    %1391 = vmatmul.mubr.f32.gmra.mrb[0].mxu0 %v1196
    %v1392 = vpop.f32.mrb[0].mxu0
    %v1393 = vadd.f32 0.0, %v1392
    %v1394 = vpop.f32.mrb[0].mxu0
    %v1395 = vadd.f32 0.0, %v1394
    %1396 = vdwg.mxu0
    %1397 = vmatprep.subr.mxu0 %v1201
    %1398 = vmatpush1.msra.mxu0 %v1200
    %1399 = vmatprep.subr.mxu0 %v1205
    %1400 = vmatpush1.msra.mxu0 %v1204
    %1401 = vmatprep.subr.mxu0 %v1209
    %1402 = vmatpush1.msra.mxu0 %v1208
    %1403 = vmatprep.subr.mxu0 %v1213
    %1404 = vmatpush1.msra.mxu0 %v1212
    %1405 = vmatprep.subr.mxu0 %v1217
    %1406 = vmatpush1.msra.mxu0 %v1216
    %1407 = vmatprep.subr.mxu0 %v1221
    %1408 = vmatpush1.msra.mxu0 %v1220
    %1409 = vmatprep.subr.mxu0 %v1225
    %1410 = vmatpush1.msra.mxu0 %v1224
    %1411 = vmatprep.subr.mxu0 %v1229
    %1412 = vmatpush1.msra.mxu0 %v1228
    %1413 = vmatprep.subr.mxu0 %v1233
    %1414 = vmatpush1.msra.mxu0 %v1232
    %1415 = vmatprep.subr.mxu0 %v1237
    %1416 = vmatpush1.msra.mxu0 %v1236
    %1417 = vmatprep.subr.mxu0 %v1241
    %1418 = vmatpush1.msra.mxu0 %v1240
    %1419 = vmatprep.subr.mxu0 %v1245
    %1420 = vmatpush1.msra.mxu0 %v1244
    %1421 = vmatprep.subr.mxu0 %v1249
    %1422 = vmatpush1.msra.mxu0 %v1248
    %1423 = vmatprep.subr.mxu0 %v1253
    %1424 = vmatpush1.msra.mxu0 %v1252
    %1425 = vmatprep.subr.mxu0 %v1257
    %1426 = vmatpush1.msra.mxu0 %v1256
    %1427 = vmatprep.subr.mxu0 %v1261
    %1428 = vmatpush1.msra.mxu0 %v1260
    %1429 = vmatprep.subr.mxu0 %v1265
    %1430 = vmatpush1.msra.mxu0 %v1264
    %1431 = vmatprep.subr.mxu0 %v1269
    %1432 = vmatpush1.msra.mxu0 %v1268
    %1433 = vmatprep.subr.mxu0 %v1273
    %1434 = vmatpush1.msra.mxu0 %v1272
    %1435 = vmatprep.subr.mxu0 %v1277
    %1436 = vmatpush1.msra.mxu0 %v1276
    %1437 = vmatprep.subr.mxu0 %v1281
    %1438 = vmatpush1.msra.mxu0 %v1280
    %1439 = vmatprep.subr.mxu0 %v1285
    %1440 = vmatpush1.msra.mxu0 %v1284
    %1441 = vmatprep.subr.mxu0 %v1289
    %1442 = vmatpush1.msra.mxu0 %v1288
    %1443 = vmatprep.subr.mxu0 %v1293
    %1444 = vmatpush1.msra.mxu0 %v1292
    %1445 = vmatprep.subr.mxu0 %v1297
    %1446 = vmatpush1.msra.mxu0 %v1296
    %1447 = vmatprep.subr.mxu0 %v1301
    %1448 = vmatpush1.msra.mxu0 %v1300
    %1449 = vmatprep.subr.mxu0 %v1305
    %1450 = vmatpush1.msra.mxu0 %v1304
    %1451 = vmatprep.subr.mxu0 %v1309
    %1452 = vmatpush1.msra.mxu0 %v1308
    %1453 = vmatprep.subr.mxu0 %v1313
    %1454 = vmatpush1.msra.mxu0 %v1312
    %1455 = vmatprep.subr.mxu0 %v1317
    %1456 = vmatpush1.msra.mxu0 %v1316
    %1457 = vmatprep.subr.mxu0 %v1321
    %1458 = vmatpush1.msra.mxu0 %v1320
    %1459 = vmatprep.subr.mxu0 %v1325
    %1460 = vmatpush1.msra.mxu0 %v1324
    %1461 = vmatprep.mubr.f32.mxu0 %v1197
    %1462 = vmatmul.mubr.f32.gmra.mrb[0].mxu0 %v1196
    %v1463 = vpop.f32.mrb[0].mxu0
    %v1464 = vadd.f32 0.0, %v1463
    %v1465 = vpop.f32.mrb[0].mxu0
    %v1466 = vadd.f32 0.0, %v1465
    %1467 = vdwg.mxu0
    %v1468 = vld [vmem:[%s19] sm:$0xff]
    %v1469 = vld [vmem:[%s19 + $0x8] sm:$0xff]
    %v1470 = vld [vmem:[%s19 + $0x10] sm:$0xff]
    %v1471 = vld [vmem:[%s19 + $0x18] sm:$0xff]
    %v1472 = vld [vmem:[%s23] sm:$0xff]
    %v1473 = vld [vmem:[%s23 + $0x8] sm:$0xff]
    %v1474 = vld [vmem:[%s23 + $0x10] sm:$0xff]
    %v1475 = vld [vmem:[%s23 + $0x18] sm:$0xff]
    %v1476 = vld [vmem:[%s21] sm:$0xff]
    %v1477 = vld [vmem:[%s21 + $0x8] sm:$0xff]
    %v1478 = vld [vmem:[%s21 + $0x10] sm:$0xff]
    %v1479 = vld [vmem:[%s21 + $0x18] sm:$0xff]
    %v1480 = vld [vmem:[%s25] sm:$0xff]
    %v1481 = vld [vmem:[%s25 + $0x8] sm:$0xff]
    %v1482 = vld [vmem:[%s25 + $0x10] sm:$0xff]
    %v1483 = vld [vmem:[%s25 + $0x18] sm:$0xff]
    %v1484 = vld [vmem:[%s25 + $0x20] sm:$0xff]
    %v1485 = vld [vmem:[%s25 + $0x28] sm:$0xff]
    %v1486 = vld [vmem:[%s25 + $0x30] sm:$0xff]
    %v1487 = vld [vmem:[%s25 + $0x38] sm:$0xff]
    %v1488 = vld [vmem:[%s25 + $0x40] sm:$0xff]
    %v1489 = vld [vmem:[%s25 + $0x48] sm:$0xff]
    %v1490 = vld [vmem:[%s25 + $0x50] sm:$0xff]
    %v1491 = vld [vmem:[%s25 + $0x58] sm:$0xff]
    %v1492 = vld [vmem:[%s25 + $0x60] sm:$0xff]
    %v1493 = vld [vmem:[%s25 + $0x68] sm:$0xff]
    %v1494 = vld [vmem:[%s25 + $0x70] sm:$0xff]
    %v1495 = vld [vmem:[%s25 + $0x78] sm:$0xff]
    %v1496 = vld [vmem:[%s25 + $0x80] sm:$0xff]
    %v1497 = vld [vmem:[%s25 + $0x88] sm:$0xff]
    %v1498 = vld [vmem:[%s25 + $0x90] sm:$0xff]
    %v1499 = vld [vmem:[%s25 + $0x98] sm:$0xff]
    %v1500 = vld [vmem:[%s25 + $0xa0] sm:$0xff]
    %v1501 = vld [vmem:[%s25 + $0xa8] sm:$0xff]
    %v1502 = vld [vmem:[%s25 + $0xb0] sm:$0xff]
    %v1503 = vld [vmem:[%s25 + $0xb8] sm:$0xff]
    %v1504 = vld [vmem:[%s25 + $0xc0] sm:$0xff]
    %v1505 = vld [vmem:[%s25 + $0xc8] sm:$0xff]
    %v1506 = vld [vmem:[%s25 + $0xd0] sm:$0xff]
    %v1507 = vld [vmem:[%s25 + $0xd8] sm:$0xff]
    %v1508 = vld [vmem:[%s25 + $0xe0] sm:$0xff]
    %v1509 = vld [vmem:[%s25 + $0xe8] sm:$0xff]
    %v1510 = vld [vmem:[%s25 + $0xf0] sm:$0xff]
    %v1511 = vld [vmem:[%s25 + $0xf8] sm:$0xff]
    %v1512 = vld [vmem:[%s25 + $0x100] sm:$0xff]
    %v1513 = vld [vmem:[%s25 + $0x108] sm:$0xff]
    %v1514 = vld [vmem:[%s25 + $0x110] sm:$0xff]
    %v1515 = vld [vmem:[%s25 + $0x118] sm:$0xff]
    %v1516 = vld [vmem:[%s25 + $0x120] sm:$0xff]
    %v1517 = vld [vmem:[%s25 + $0x128] sm:$0xff]
    %v1518 = vld [vmem:[%s25 + $0x130] sm:$0xff]
    %v1519 = vld [vmem:[%s25 + $0x138] sm:$0xff]
    %v1520 = vld [vmem:[%s25 + $0x140] sm:$0xff]
    %v1521 = vld [vmem:[%s25 + $0x148] sm:$0xff]
    %v1522 = vld [vmem:[%s25 + $0x150] sm:$0xff]
    %v1523 = vld [vmem:[%s25 + $0x158] sm:$0xff]
    %v1524 = vld [vmem:[%s25 + $0x160] sm:$0xff]
    %v1525 = vld [vmem:[%s25 + $0x168] sm:$0xff]
    %v1526 = vld [vmem:[%s25 + $0x170] sm:$0xff]
    %v1527 = vld [vmem:[%s25 + $0x178] sm:$0xff]
    %v1528 = vld [vmem:[%s25 + $0x180] sm:$0xff]
    %v1529 = vld [vmem:[%s25 + $0x188] sm:$0xff]
    %v1530 = vld [vmem:[%s25 + $0x190] sm:$0xff]
    %v1531 = vld [vmem:[%s25 + $0x198] sm:$0xff]
    %v1532 = vld [vmem:[%s25 + $0x1a0] sm:$0xff]
    %v1533 = vld [vmem:[%s25 + $0x1a8] sm:$0xff]
    %v1534 = vld [vmem:[%s25 + $0x1b0] sm:$0xff]
    %v1535 = vld [vmem:[%s25 + $0x1b8] sm:$0xff]
    %v1536 = vld [vmem:[%s25 + $0x1c0] sm:$0xff]
    %v1537 = vld [vmem:[%s25 + $0x1c8] sm:$0xff]
    %v1538 = vld [vmem:[%s25 + $0x1d0] sm:$0xff]
    %v1539 = vld [vmem:[%s25 + $0x1d8] sm:$0xff]
    %v1540 = vld [vmem:[%s25 + $0x1e0] sm:$0x1]
    %v1541 = vld [vmem:[%s25 + $0x1e8] sm:$0x1]
    %v1542 = vld [vmem:[%s25 + $0x1f0] sm:$0x1]
    %v1543 = vld [vmem:[%s25 + $0x1f8] sm:$0x1]
    %v1544 = vld [vmem:[%s27] sm:$0xf]
    %v1546 = vlaneseq
    %v1547 = vshrl.u32 %v1546, 7
    %v1548 = vsub.s32 0, %v1547
    %v1549 = vrot.slane %v1544, %v1548
    %v1550 = vlaneseq
    %v1551 = vshrl.u32 %v1550, 7
    %v1552 = vsub.s32 1, %v1551
    %v1553 = vrot.slane %v1544, %v1552
    %v1554 = vlaneseq
    %v1555 = vshrl.u32 %v1554, 7
    %v1556 = vsub.s32 2, %v1555
    %v1557 = vrot.slane %v1544, %v1556
    %v1558 = vlaneseq
    %v1559 = vshrl.u32 %v1558, 7
    %v1560 = vsub.s32 3, %v1559
    %v1561 = vrot.slane %v1544, %v1560
    %vm1566 = vcmask 990208
    %v1568 = vsel %vm1566, %v1476, 0
    %v1571 = vsel %vm1566, %v1477, 0
    %v1574 = vsel %vm1566, %v1478, 0
    %v1577 = vsel %vm1566, %v1479, 0
    %v1580 = vsel %vm165, %v1540, 0
    %v1583 = vsel %vm165, %v1541, 0
    %v1586 = vsel %vm165, %v1542, 0
    %v1589 = vsel %vm165, %v1543, 0
    %1591 = vmatprep.subr.mxu0 %v1481
    %1592 = vmatpush1.msra.mxu0 %v1480
    %1593 = vmatprep.subr.mxu0 %v1485
    %1594 = vmatpush1.msra.mxu0 %v1484
    %1595 = vmatprep.subr.mxu0 %v1489
    %1596 = vmatpush1.msra.mxu0 %v1488
    %1597 = vmatprep.subr.mxu0 %v1493
    %1598 = vmatpush1.msra.mxu0 %v1492
    %1599 = vmatprep.subr.mxu0 %v1497
    %1600 = vmatpush1.msra.mxu0 %v1496
    %1601 = vmatprep.subr.mxu0 %v1501
    %1602 = vmatpush1.msra.mxu0 %v1500
    %1603 = vmatprep.subr.mxu0 %v1505
    %1604 = vmatpush1.msra.mxu0 %v1504
    %1605 = vmatprep.subr.mxu0 %v1509
    %1606 = vmatpush1.msra.mxu0 %v1508
    %1607 = vmatprep.subr.mxu0 %v1513
    %1608 = vmatpush1.msra.mxu0 %v1512
    %1609 = vmatprep.subr.mxu0 %v1517
    %1610 = vmatpush1.msra.mxu0 %v1516
    %1611 = vmatprep.subr.mxu0 %v1521
    %1612 = vmatpush1.msra.mxu0 %v1520
    %1613 = vmatprep.subr.mxu0 %v1525
    %1614 = vmatpush1.msra.mxu0 %v1524
    %1615 = vmatprep.subr.mxu0 %v1529
    %1616 = vmatpush1.msra.mxu0 %v1528
    %1617 = vmatprep.subr.mxu0 %v1533
    %1618 = vmatpush1.msra.mxu0 %v1532
    %1619 = vmatprep.subr.mxu0 %v1537
    %1620 = vmatpush1.msra.mxu0 %v1536
    %1621 = vmatprep.subr.mxu0 %v1583
    %1622 = vmatpush1.msra.mxu0 %v1580
    %1623 = vmatprep.subr.mxu0 0.0
    %1624 = vmatpush1.msra.mxu0 0.0
    %1625 = vmatprep.subr.mxu0 0.0
    %1626 = vmatpush1.msra.mxu0 0.0
    %1627 = vmatprep.subr.mxu0 0.0
    %1628 = vmatpush1.msra.mxu0 0.0
    %1629 = vmatprep.subr.mxu0 0.0
    %1630 = vmatpush1.msra.mxu0 0.0
    %1631 = vmatprep.subr.mxu0 0.0
    %1632 = vmatpush1.msra.mxu0 0.0
    %1633 = vmatprep.subr.mxu0 0.0
    %1634 = vmatpush1.msra.mxu0 0.0
    %1635 = vmatprep.subr.mxu0 0.0
    %1636 = vmatpush1.msra.mxu0 0.0
    %1637 = vmatprep.subr.mxu0 0.0
    %1638 = vmatpush1.msra.mxu0 0.0
    %1639 = vmatprep.subr.mxu0 0.0
    %1640 = vmatpush1.msra.mxu0 0.0
    %1641 = vmatprep.subr.mxu0 0.0
    %1642 = vmatpush1.msra.mxu0 0.0
    %1643 = vmatprep.subr.mxu0 0.0
    %1644 = vmatpush1.msra.mxu0 0.0
    %1645 = vmatprep.subr.mxu0 0.0
    %1646 = vmatpush1.msra.mxu0 0.0
    %1647 = vmatprep.subr.mxu0 0.0
    %1648 = vmatpush1.msra.mxu0 0.0
    %1649 = vmatprep.subr.mxu0 0.0
    %1650 = vmatpush1.msra.mxu0 0.0
    %1651 = vmatprep.subr.mxu0 0.0
    %1652 = vmatpush1.msra.mxu0 0.0
    %1653 = vmatprep.subr.mxu0 0.0
    %1654 = vmatpush1.msra.mxu0 0.0
    %1655 = vmatprep.mubr.f32.mxu0 0.0
    %1656 = vmatmul.mubr.f32.gmra.mrb[0].mxu0 %v1568
    %v1657 = vpop.f32.mrb[0].mxu0
    %v1658 = vadd.f32 %v1549, %v1657
    %v1659 = vpop.f32.mrb[0].mxu0
    %v1660 = vadd.f32 %v1553, %v1659
    %1661 = vmatprep.mubr.f32.mxu0 0.0
    %1662 = vmatmul.mubr.f32.gmra.mrb[0].mxu0 %v1571
    %v1663 = vpop.f32.mrb[0].mxu0
    %v1664 = vadd.f32 %v1549, %v1663
    %v1665 = vpop.f32.mrb[0].mxu0
    %v1666 = vadd.f32 %v1553, %v1665
    %1667 = vmatprep.mubr.f32.mxu0 0.0
    %1668 = vmatmul.mubr.f32.gmra.mrb[0].mxu0 %v1574
    %v1669 = vpop.f32.mrb[0].mxu0
    %v1670 = vadd.f32 %v1549, %v1669
    %v1671 = vpop.f32.mrb[0].mxu0
    %v1672 = vadd.f32 %v1553, %v1671
    %1673 = vmatprep.mubr.f32.mxu0 0.0
    %1674 = vmatmul.mubr.f32.gmra.mrb[0].mxu0 %v1577
    %v1675 = vpop.f32.mrb[0].mxu0
    %v1676 = vadd.f32 %v1549, %v1675
    %v1677 = vpop.f32.mrb[0].mxu0
    %v1678 = vadd.f32 %v1553, %v1677
    %1679 = vdwg.mxu0
    %1680 = vmatprep.subr.mxu0 %v1483
    %1681 = vmatpush1.msra.mxu0 %v1482
    %1682 = vmatprep.subr.mxu0 %v1487
    %1683 = vmatpush1.msra.mxu0 %v1486
    %1684 = vmatprep.subr.mxu0 %v1491
    %1685 = vmatpush1.msra.mxu0 %v1490
    %1686 = vmatprep.subr.mxu0 %v1495
    %1687 = vmatpush1.msra.mxu0 %v1494
    %1688 = vmatprep.subr.mxu0 %v1499
    %1689 = vmatpush1.msra.mxu0 %v1498
    %1690 = vmatprep.subr.mxu0 %v1503
    %1691 = vmatpush1.msra.mxu0 %v1502
    %1692 = vmatprep.subr.mxu0 %v1507
    %1693 = vmatpush1.msra.mxu0 %v1506
    %1694 = vmatprep.subr.mxu0 %v1511
    %1695 = vmatpush1.msra.mxu0 %v1510
    %1696 = vmatprep.subr.mxu0 %v1515
    %1697 = vmatpush1.msra.mxu0 %v1514
    %1698 = vmatprep.subr.mxu0 %v1519
    %1699 = vmatpush1.msra.mxu0 %v1518
    %1700 = vmatprep.subr.mxu0 %v1523
    %1701 = vmatpush1.msra.mxu0 %v1522
    %1702 = vmatprep.subr.mxu0 %v1527
    %1703 = vmatpush1.msra.mxu0 %v1526
    %1704 = vmatprep.subr.mxu0 %v1531
    %1705 = vmatpush1.msra.mxu0 %v1530
    %1706 = vmatprep.subr.mxu0 %v1535
    %1707 = vmatpush1.msra.mxu0 %v1534
    %1708 = vmatprep.subr.mxu0 %v1539
    %1709 = vmatpush1.msra.mxu0 %v1538
    %1710 = vmatprep.subr.mxu0 %v1589
    %1711 = vmatpush1.msra.mxu0 %v1586
    %1712 = vmatprep.subr.mxu0 0.0
    %1713 = vmatpush1.msra.mxu0 0.0
    %1714 = vmatprep.subr.mxu0 0.0
    %1715 = vmatpush1.msra.mxu0 0.0
    %1716 = vmatprep.subr.mxu0 0.0
    %1717 = vmatpush1.msra.mxu0 0.0
    %1718 = vmatprep.subr.mxu0 0.0
    %1719 = vmatpush1.msra.mxu0 0.0
    %1720 = vmatprep.subr.mxu0 0.0
    %1721 = vmatpush1.msra.mxu0 0.0
    %1722 = vmatprep.subr.mxu0 0.0
    %1723 = vmatpush1.msra.mxu0 0.0
    %1724 = vmatprep.subr.mxu0 0.0
    %1725 = vmatpush1.msra.mxu0 0.0
    %1726 = vmatprep.subr.mxu0 0.0
    %1727 = vmatpush1.msra.mxu0 0.0
    %1728 = vmatprep.subr.mxu0 0.0
    %1729 = vmatpush1.msra.mxu0 0.0
    %1730 = vmatprep.subr.mxu0 0.0
    %1731 = vmatpush1.msra.mxu0 0.0
    %1732 = vmatprep.subr.mxu0 0.0
    %1733 = vmatpush1.msra.mxu0 0.0
    %1734 = vmatprep.subr.mxu0 0.0
    %1735 = vmatpush1.msra.mxu0 0.0
    %1736 = vmatprep.subr.mxu0 0.0
    %1737 = vmatpush1.msra.mxu0 0.0
    %1738 = vmatprep.subr.mxu0 0.0
    %1739 = vmatpush1.msra.mxu0 0.0
    %1740 = vmatprep.subr.mxu0 0.0
    %1741 = vmatpush1.msra.mxu0 0.0
    %1742 = vmatprep.subr.mxu0 0.0
    %1743 = vmatpush1.msra.mxu0 0.0
    %1744 = vmatprep.mubr.f32.mxu0 0.0
    %1745 = vmatmul.mubr.f32.gmra.mrb[0].mxu0 %v1568
    %v1746 = vpop.f32.mrb[0].mxu0
    %v1747 = vadd.f32 %v1557, %v1746
    %v1748 = vpop.f32.mrb[0].mxu0
    %v1749 = vadd.f32 %v1561, %v1748
    %1750 = vmatprep.mubr.f32.mxu0 0.0
    %1751 = vmatmul.mubr.f32.gmra.mrb[0].mxu0 %v1571
    %v1752 = vpop.f32.mrb[0].mxu0
    %v1753 = vadd.f32 %v1557, %v1752
    %v1754 = vpop.f32.mrb[0].mxu0
    %v1755 = vadd.f32 %v1561, %v1754
    %1756 = vmatprep.mubr.f32.mxu0 0.0
    %1757 = vmatmul.mubr.f32.gmra.mrb[0].mxu0 %v1574
    %v1758 = vpop.f32.mrb[0].mxu0
    %v1759 = vadd.f32 %v1557, %v1758
    %v1760 = vpop.f32.mrb[0].mxu0
    %v1761 = vadd.f32 %v1561, %v1760
    %1762 = vmatprep.mubr.f32.mxu0 0.0
    %1763 = vmatmul.mubr.f32.gmra.mrb[0].mxu0 %v1577
    %v1764 = vpop.f32.mrb[0].mxu0
    %v1765 = vadd.f32 %v1557, %v1764
    %v1766 = vpop.f32.mrb[0].mxu0
    %v1767 = vadd.f32 %v1561, %v1766
    %1768 = vdwg.mxu0
    %vm1769 = vcmask 64512
    %v1771 = vsel %vm1769, %v1468, 0
    %v1774 = vsel %vm1769, %v1469, 0
    %v1777 = vsel %vm1769, %v1470, 0
    %v1780 = vsel %vm1769, %v1471, 0
    %1782 = vmatprep.subr.mxu0 %v1473
    %1783 = vmatpush1.msra.mxu0 %v1472
    %1784 = vmatprep.subr.mxu0 0.0
    %1785 = vmatpush1.msra.mxu0 0.0
    %1786 = vmatprep.subr.mxu0 0.0
    %1787 = vmatpush1.msra.mxu0 0.0
    %1788 = vmatprep.subr.mxu0 0.0
    %1789 = vmatpush1.msra.mxu0 0.0
    %1790 = vmatprep.subr.mxu0 0.0
    %1791 = vmatpush1.msra.mxu0 0.0
    %1792 = vmatprep.subr.mxu0 0.0
    %1793 = vmatpush1.msra.mxu0 0.0
    %1794 = vmatprep.subr.mxu0 0.0
    %1795 = vmatpush1.msra.mxu0 0.0
    %1796 = vmatprep.subr.mxu0 0.0
    %1797 = vmatpush1.msra.mxu0 0.0
    %1798 = vmatprep.subr.mxu0 0.0
    %1799 = vmatpush1.msra.mxu0 0.0
    %1800 = vmatprep.subr.mxu0 0.0
    %1801 = vmatpush1.msra.mxu0 0.0
    %1802 = vmatprep.subr.mxu0 0.0
    %1803 = vmatpush1.msra.mxu0 0.0
    %1804 = vmatprep.subr.mxu0 0.0
    %1805 = vmatpush1.msra.mxu0 0.0
    %1806 = vmatprep.subr.mxu0 0.0
    %1807 = vmatpush1.msra.mxu0 0.0
    %1808 = vmatprep.subr.mxu0 0.0
    %1809 = vmatpush1.msra.mxu0 0.0
    %1810 = vmatprep.subr.mxu0 0.0
    %1811 = vmatpush1.msra.mxu0 0.0
    %1812 = vmatprep.subr.mxu0 0.0
    %1813 = vmatpush1.msra.mxu0 0.0
    %1814 = vmatprep.subr.mxu0 0.0
    %1815 = vmatpush1.msra.mxu0 0.0
    %1816 = vmatprep.subr.mxu0 0.0
    %1817 = vmatpush1.msra.mxu0 0.0
    %1818 = vmatprep.subr.mxu0 0.0
    %1819 = vmatpush1.msra.mxu0 0.0
    %1820 = vmatprep.subr.mxu0 0.0
    %1821 = vmatpush1.msra.mxu0 0.0
    %1822 = vmatprep.subr.mxu0 0.0
    %1823 = vmatpush1.msra.mxu0 0.0
    %1824 = vmatprep.subr.mxu0 0.0
    %1825 = vmatpush1.msra.mxu0 0.0
    %1826 = vmatprep.subr.mxu0 0.0
    %1827 = vmatpush1.msra.mxu0 0.0
    %1828 = vmatprep.subr.mxu0 0.0
    %1829 = vmatpush1.msra.mxu0 0.0
    %1830 = vmatprep.subr.mxu0 0.0
    %1831 = vmatpush1.msra.mxu0 0.0
    %1832 = vmatprep.subr.mxu0 0.0
    %1833 = vmatpush1.msra.mxu0 0.0
    %1834 = vmatprep.subr.mxu0 0.0
    %1835 = vmatpush1.msra.mxu0 0.0
    %1836 = vmatprep.subr.mxu0 0.0
    %1837 = vmatpush1.msra.mxu0 0.0
    %1838 = vmatprep.subr.mxu0 0.0
    %1839 = vmatpush1.msra.mxu0 0.0
    %1840 = vmatprep.subr.mxu0 0.0
    %1841 = vmatpush1.msra.mxu0 0.0
    %1842 = vmatprep.subr.mxu0 0.0
    %1843 = vmatpush1.msra.mxu0 0.0
    %1844 = vmatprep.subr.mxu0 0.0
    %1845 = vmatpush1.msra.mxu0 0.0
    %1846 = vmatprep.mubr.f32.mxu0 0.0
    %1847 = vmatmul.mubr.f32.gmra.mrb[0].mxu0 %v1771
    %v1848 = vpop.f32.mrb[0].mxu0
    %v1849 = vadd.f32 %v1658, %v1848
    %v1850 = vpop.f32.mrb[0].mxu0
    %v1851 = vadd.f32 %v1660, %v1850
    %1852 = vmatprep.mubr.f32.mxu0 0.0
    %1853 = vmatmul.mubr.f32.gmra.mrb[0].mxu0 %v1774
    %v1854 = vpop.f32.mrb[0].mxu0
    %v1855 = vadd.f32 %v1664, %v1854
    %v1856 = vpop.f32.mrb[0].mxu0
    %v1857 = vadd.f32 %v1666, %v1856
    %1858 = vmatprep.mubr.f32.mxu0 0.0
    %1859 = vmatmul.mubr.f32.gmra.mrb[0].mxu0 %v1777
    %v1860 = vpop.f32.mrb[0].mxu0
    %v1861 = vadd.f32 %v1670, %v1860
    %v1862 = vpop.f32.mrb[0].mxu0
    %v1863 = vadd.f32 %v1672, %v1862
    %1864 = vmatprep.mubr.f32.mxu0 0.0
    %1865 = vmatmul.mubr.f32.gmra.mrb[0].mxu0 %v1780
    %v1866 = vpop.f32.mrb[0].mxu0
    %v1867 = vadd.f32 %v1676, %v1866
    %v1868 = vpop.f32.mrb[0].mxu0
    %v1869 = vadd.f32 %v1678, %v1868
    %1870 = vdwg.mxu0
    %1871 = vmatprep.subr.mxu0 %v1475
    %1872 = vmatpush1.msra.mxu0 %v1474
    %1873 = vmatprep.subr.mxu0 0.0
    %1874 = vmatpush1.msra.mxu0 0.0
    %1875 = vmatprep.subr.mxu0 0.0
    %1876 = vmatpush1.msra.mxu0 0.0
    %1877 = vmatprep.subr.mxu0 0.0
    %1878 = vmatpush1.msra.mxu0 0.0
    %1879 = vmatprep.subr.mxu0 0.0
    %1880 = vmatpush1.msra.mxu0 0.0
    %1881 = vmatprep.subr.mxu0 0.0
    %1882 = vmatpush1.msra.mxu0 0.0
    %1883 = vmatprep.subr.mxu0 0.0
    %1884 = vmatpush1.msra.mxu0 0.0
    %1885 = vmatprep.subr.mxu0 0.0
    %1886 = vmatpush1.msra.mxu0 0.0
    %1887 = vmatprep.subr.mxu0 0.0
    %1888 = vmatpush1.msra.mxu0 0.0
    %1889 = vmatprep.subr.mxu0 0.0
    %1890 = vmatpush1.msra.mxu0 0.0
    %1891 = vmatprep.subr.mxu0 0.0
    %1892 = vmatpush1.msra.mxu0 0.0
    %1893 = vmatprep.subr.mxu0 0.0
    %1894 = vmatpush1.msra.mxu0 0.0
    %1895 = vmatprep.subr.mxu0 0.0
    %1896 = vmatpush1.msra.mxu0 0.0
    %1897 = vmatprep.subr.mxu0 0.0
    %1898 = vmatpush1.msra.mxu0 0.0
    %1899 = vmatprep.subr.mxu0 0.0
    %1900 = vmatpush1.msra.mxu0 0.0
    %1901 = vmatprep.subr.mxu0 0.0
    %1902 = vmatpush1.msra.mxu0 0.0
    %1903 = vmatprep.subr.mxu0 0.0
    %1904 = vmatpush1.msra.mxu0 0.0
    %1905 = vmatprep.subr.mxu0 0.0
    %1906 = vmatpush1.msra.mxu0 0.0
    %1907 = vmatprep.subr.mxu0 0.0
    %1908 = vmatpush1.msra.mxu0 0.0
    %1909 = vmatprep.subr.mxu0 0.0
    %1910 = vmatpush1.msra.mxu0 0.0
    %1911 = vmatprep.subr.mxu0 0.0
    %1912 = vmatpush1.msra.mxu0 0.0
    %1913 = vmatprep.subr.mxu0 0.0
    %1914 = vmatpush1.msra.mxu0 0.0
    %1915 = vmatprep.subr.mxu0 0.0
    %1916 = vmatpush1.msra.mxu0 0.0
    %1917 = vmatprep.subr.mxu0 0.0
    %1918 = vmatpush1.msra.mxu0 0.0
    %1919 = vmatprep.subr.mxu0 0.0
    %1920 = vmatpush1.msra.mxu0 0.0
    %1921 = vmatprep.subr.mxu0 0.0
    %1922 = vmatpush1.msra.mxu0 0.0
    %1923 = vmatprep.subr.mxu0 0.0
    %1924 = vmatpush1.msra.mxu0 0.0
    %1925 = vmatprep.subr.mxu0 0.0
    %1926 = vmatpush1.msra.mxu0 0.0
    %1927 = vmatprep.subr.mxu0 0.0
    %1928 = vmatpush1.msra.mxu0 0.0
    %1929 = vmatprep.subr.mxu0 0.0
    %1930 = vmatpush1.msra.mxu0 0.0
    %1931 = vmatprep.subr.mxu0 0.0
    %1932 = vmatpush1.msra.mxu0 0.0
    %1933 = vmatprep.subr.mxu0 0.0
    %1934 = vmatpush1.msra.mxu0 0.0
    %1935 = vmatprep.mubr.f32.mxu0 0.0
    %1936 = vmatmul.mubr.f32.gmra.mrb[0].mxu0 %v1771
    %v1937 = vpop.f32.mrb[0].mxu0
    %v1938 = vadd.f32 %v1747, %v1937
    %v1939 = vpop.f32.mrb[0].mxu0
    %v1940 = vadd.f32 %v1749, %v1939
    %1941 = vmatprep.mubr.f32.mxu0 0.0
    %1942 = vmatmul.mubr.f32.gmra.mrb[0].mxu0 %v1774
    %v1943 = vpop.f32.mrb[0].mxu0
    %v1944 = vadd.f32 %v1753, %v1943
    %v1945 = vpop.f32.mrb[0].mxu0
    %v1946 = vadd.f32 %v1755, %v1945
    %1947 = vmatprep.mubr.f32.mxu0 0.0
    %1948 = vmatmul.mubr.f32.gmra.mrb[0].mxu0 %v1777
    %v1949 = vpop.f32.mrb[0].mxu0
    %v1950 = vadd.f32 %v1759, %v1949
    %v1951 = vpop.f32.mrb[0].mxu0
    %v1952 = vadd.f32 %v1761, %v1951
    %1953 = vmatprep.mubr.f32.mxu0 0.0
    %1954 = vmatmul.mubr.f32.gmra.mrb[0].mxu0 %v1780
    %v1955 = vpop.f32.mrb[0].mxu0
    %v1956 = vadd.f32 %v1765, %v1955
    %v1957 = vpop.f32.mrb[0].mxu0
    %v1958 = vadd.f32 %v1767, %v1957
    %1959 = vdwg.mxu0
    %v1964 = vcombine.low %v1393, %v1395
    %v1965 = vcombine.low %v1464, %v1466
    %v1967 = vunpack.c.l.s4 1966171168
    %v1968 = vunpack.c.0.s8 %v1967
    %v1969 = vlaneseq
    %v1970 = vshrl.u32 %v1969, 7
    %v1971 = vsub.s32 %v1968, %v1970
    %v1972 = vrot.slane %v1964, %v1971
    %v1974 = vunpack.c.l.s4 1966171168
    %v1975 = vunpack.c.0.s8 %v1974
    %v1976 = vlaneseq
    %v1977 = vshrl.u32 %v1976, 7
    %v1978 = vsub.s32 %v1975, %v1977
    %v1979 = vrot.slane %v1965, %v1978
    %v1980 = vcombine.low %v1972, %v1979
    %v1981 = vcombine.high %v1972, %v1979
    %v1983 = vunpack.c.l.s4 1966171168
    %v1984 = vunpack.c.0.s8 %v1983
    %v1985 = vlaneseq
    %v1986 = vshrl.u32 %v1985, 7
    %v1987 = vsub.s32 %v1984, %v1986
    %v1988 = vrot.slane %v1980, %v1987
    %v1990 = vunpack.c.l.s4 1966171168
    %v1991 = vunpack.c.0.s8 %v1990
    %v1992 = vlaneseq
    %v1993 = vshrl.u32 %v1992, 7
    %v1994 = vsub.s32 %v1991, %v1993
    %v1995 = vrot.slane %v1981, %v1994
    %v1996 = vlaneseq
    %v1997 = vshrl.u32 %v1996, 7
    %v1998 = vsub.s32 0, %v1997
    %v1999 = vrot.slane %v1988, %v1998
    %v2000 = vlaneseq
    %v2001 = vshrl.u32 %v2000, 7
    %v2002 = vsub.s32 1, %v2001
    %v2003 = vrot.slane %v1988, %v2002
    %v2004 = vlaneseq
    %v2005 = vshrl.u32 %v2004, 7
    %v2006 = vsub.s32 2, %v2005
    %v2007 = vrot.slane %v1988, %v2006
    %v2008 = vlaneseq
    %v2009 = vshrl.u32 %v2008, 7
    %v2010 = vsub.s32 3, %v2009
    %v2011 = vrot.slane %v1988, %v2010
    %v2012 = vlaneseq
    %v2013 = vshrl.u32 %v2012, 7
    %v2014 = vsub.s32 0, %v2013
    %v2015 = vrot.slane %v1995, %v2014
    %v2016 = vlaneseq
    %v2017 = vshrl.u32 %v2016, 7
    %v2018 = vsub.s32 1, %v2017
    %v2019 = vrot.slane %v1995, %v2018
    %v2020 = vlaneseq
    %v2021 = vshrl.u32 %v2020, 7
    %v2022 = vsub.s32 2, %v2021
    %v2023 = vrot.slane %v1995, %v2022
    %v2024 = vlaneseq
    %v2025 = vshrl.u32 %v2024, 7
    %v2026 = vsub.s32 3, %v2025
    %v2027 = vrot.slane %v1995, %v2026
    %v2036 = vadd.f32 %v1849, %v1999
    %v2037 = vadd.f32 %v1851, %v2003
    %v2038 = vadd.f32 %v1938, %v2007
    %v2039 = vadd.f32 %v1940, %v2011
    %v2040 = vadd.f32 %v1855, %v1999
    %v2041 = vadd.f32 %v1857, %v2003
    %v2042 = vadd.f32 %v1944, %v2007
    %v2043 = vadd.f32 %v1946, %v2011
    %v2044 = vadd.f32 %v1861, %v2015
    %v2045 = vadd.f32 %v1863, %v2019
    %v2046 = vadd.f32 %v1950, %v2023
    %v2047 = vadd.f32 %v1952, %v2027
    %v2048 = vadd.f32 %v1867, %v2015
    %v2049 = vadd.f32 %v1869, %v2019
    %v2050 = vadd.f32 %v1956, %v2023
    %v2051 = vadd.f32 %v1958, %v2027
    %v2052 = vtanh.pop %v2036
    %v2053 = vtanh.pop %v2037
    %v2054 = vtanh.pop %v2038
    %v2055 = vtanh.pop %v2039
    %v2056 = vtanh.pop %v2040
    %v2057 = vtanh.pop %v2041
    %v2058 = vtanh.pop %v2042
    %v2059 = vtanh.pop %v2043
    %v2060 = vtanh.pop %v2044
    %v2061 = vtanh.pop %v2045
    %v2062 = vtanh.pop %v2046
    %v2063 = vtanh.pop %v2047
    %v2064 = vtanh.pop %v2048
    %v2065 = vtanh.pop %v2049
    %v2066 = vtanh.pop %v2050
    %v2067 = vtanh.pop %v2051
    %v2068 = vld [vmem:[%s29] sm:$0xf]
    %v2070 = vlaneseq
    %v2071 = vshrl.u32 %v2070, 7
    %v2072 = vsub.s32 0, %v2071
    %v2073 = vrot.slane %v2068, %v2072
    %v2074 = vlaneseq
    %v2075 = vshrl.u32 %v2074, 7
    %v2076 = vsub.s32 1, %v2075
    %v2077 = vrot.slane %v2068, %v2076
    %v2078 = vlaneseq
    %v2079 = vshrl.u32 %v2078, 7
    %v2080 = vsub.s32 2, %v2079
    %v2081 = vrot.slane %v2068, %v2080
    %v2082 = vlaneseq
    %v2083 = vshrl.u32 %v2082, 7
    %v2084 = vsub.s32 3, %v2083
    %v2085 = vrot.slane %v2068, %v2084
    %v2090 = vmul.f32 %v2052, %v2073
    %v2091 = vmul.f32 %v2053, %v2077
    %v2092 = vmul.f32 %v2054, %v2081
    %v2093 = vmul.f32 %v2055, %v2085
    %v2094 = vmul.f32 %v2056, %v2073
    %v2095 = vmul.f32 %v2057, %v2077
    %v2096 = vmul.f32 %v2058, %v2081
    %v2097 = vmul.f32 %v2059, %v2085
    %v2098 = vmul.f32 %v2060, %v2073
    %v2099 = vmul.f32 %v2061, %v2077
    %v2100 = vmul.f32 %v2062, %v2081
    %v2101 = vmul.f32 %v2063, %v2085
    %v2102 = vmul.f32 %v2064, %v2073
    %v2103 = vmul.f32 %v2065, %v2077
    %v2104 = vmul.f32 %v2066, %v2081
    %v2105 = vmul.f32 %v2067, %v2085
    %v2106 = vadd.f32 %v2090, %v2091
    %v2107 = vadd.f32 %v2106, %v2092
    %v2108 = vadd.f32 %v2107, %v2093
    %2109 = vadd.xlane.f32.xlu0 %v2108
    %v2110 = vpop.xlane.xlu0 %2109
    %v2111 = vadd.f32 %v2094, %v2095
    %v2112 = vadd.f32 %v2111, %v2096
    %v2113 = vadd.f32 %v2112, %v2097
    %2114 = vadd.xlane.f32.xlu0 %v2113
    %v2115 = vpop.xlane.xlu0 %2114
    %v2116 = vadd.f32 %v2098, %v2099
    %v2117 = vadd.f32 %v2116, %v2100
    %v2118 = vadd.f32 %v2117, %v2101
    %2119 = vadd.xlane.f32.xlu0 %v2118
    %v2120 = vpop.xlane.xlu0 %2119
    %v2121 = vadd.f32 %v2102, %v2103
    %v2122 = vadd.f32 %v2121, %v2104
    %v2123 = vadd.f32 %v2122, %v2105
    %2124 = vadd.xlane.f32.xlu0 %v2123
    %v2125 = vpop.xlane.xlu0 %2124
    %v2130 = vlaneseq
    %v2131 = vshrl.u32 %v2130, 7
    %v2132 = vsub.s32 %v154, %v2131
    %v2133 = vrot.slane %v2110, %v2132
    %v2134 = vadd.s32 %v154, 4294967288
    %v2135 = vlaneseq
    %v2136 = vshrl.u32 %v2135, 7
    %v2137 = vsub.s32 %v2134, %v2136
    %v2138 = vrot.slane %v2115, %v2137
    %vm2139 = vcmask 130112
    %v2140 = vsel %vm2139, %v2138, %v2133
    %v2141 = vlaneseq
    %v2142 = vshrl.u32 %v2141, 7
    %v2143 = vsub.s32 %v154, %v2142
    %v2144 = vrot.slane %v2120, %v2143
    %v2145 = vlaneseq
    %v2146 = vshrl.u32 %v2145, 7
    %v2147 = vsub.s32 %v2134, %v2146
    %v2148 = vrot.slane %v2125, %v2147
    %v2149 = vsel %vm2139, %v2148, %v2144
    %vm2150 = vcmask 1041409
    %v2151 = vsel %vm2150, %v2149, %v2140
    %vm2153 = vcmask 123904
    %v2154 = vsel %vm2153, %v2151, -inf
    %2155 = vmax.xlane.f32.xlu0 %v2154
    %v2156 = vpop.xlane.xlu0 %2155
    %v2158 = vlaneseq
    %v2159 = vshrl.u32 %v2158, 7
    %v2160 = vsub.s32 0, %v2159
    %v2161 = vrot.slane %v2156, %v2160
    %v2162 = vlaneseq
    %v2163 = vshrl.u32 %v2162, 7
    %v2164 = vsub.s32 1, %v2163
    %v2165 = vrot.slane %v2156, %v2164
    %v2168 = vsub.f32 %v2110, %v2161
    %v2169 = vsub.f32 %v2115, %v2161
    %v2170 = vsub.f32 %v2120, %v2165
    %v2171 = vsub.f32 %v2125, %v2165
    %v2172 = vmul.f32 %v2168, 1.442695
    %v2173 = vpow.pop %v2172
    %v2174 = vmul.f32 %v2169, 1.442695
    %v2175 = vpow.pop %v2174
    %v2176 = vmul.f32 %v2170, 1.442695
    %v2177 = vpow.pop %v2176
    %v2178 = vmul.f32 %v2171, 1.442695
    %v2179 = vpow.pop %v2178
    %2184 = vset.pattern.permute.xlu0 0
    %2185 = vperm.xlu0 %2184, %v2173
    %v2186 = vpop.permute.xlu0 %2185
    %2187 = vset.pattern.permute.xlu0 0
    %2188 = vperm.xlu0 %2187, %v2175
    %v2189 = vpop.permute.xlu0 %2188
    %2190 = vset.pattern.permute.xlu0 0
    %2191 = vperm.xlu0 %2190, %v2177
    %v2192 = vpop.permute.xlu0 %2191
    %2193 = vset.pattern.permute.xlu0 0
    %2194 = vperm.xlu0 %2193, %v2179
    %v2195 = vpop.permute.xlu0 %2194
    %v2196 = vlaneseq
    %v2197 = vshrl.u32 %v2196, 7
    %v2198 = vsub.s32 %v154, %v2197
    %v2199 = vrot.slane %v2186, %v2198
    %v2200 = vlaneseq
    %v2201 = vshrl.u32 %v2200, 7
    %v2202 = vsub.s32 %v2134, %v2201
    %v2203 = vrot.slane %v2189, %v2202
    %v2204 = vsel %vm2139, %v2203, %v2199
    %v2205 = vlaneseq
    %v2206 = vshrl.u32 %v2205, 7
    %v2207 = vsub.s32 %v154, %v2206
    %v2208 = vrot.slane %v2192, %v2207
    %v2209 = vlaneseq
    %v2210 = vshrl.u32 %v2209, 7
    %v2211 = vsub.s32 %v2134, %v2210
    %v2212 = vrot.slane %v2195, %v2211
    %v2213 = vsel %vm2139, %v2212, %v2208
    %v2214 = vsel %vm2150, %v2213, %v2204
    %v2216 = vsel %vm2153, %v2214, 0.0
    %2217 = vadd.xlane.f32.xlu0 %v2216
    %v2218 = vpop.xlane.xlu0 %2217
    %v2220 = vlaneseq
    %v2221 = vshrl.u32 %v2220, 7
    %v2222 = vsub.s32 0, %v2221
    %v2223 = vrot.slane %v2218, %v2222
    %v2224 = vlaneseq
    %v2225 = vshrl.u32 %v2224, 7
    %v2226 = vsub.s32 1, %v2225
    %v2227 = vrot.slane %v2218, %v2226
    %v2230 = vrcp.pop %v2223
    %v2231 = vmul.f32 %v2173, %v2230
    %v2232 = vmul.f32 %v2175, %v2230
    %v2233 = vrcp.pop %v2227
    %v2234 = vmul.f32 %v2177, %v2233
    %v2235 = vmul.f32 %v2179, %v2233
    %v2236 = vld [vmem:[%s17] sm:$0xff]
    %v2237 = vld [vmem:[%s17 + $0x8] sm:$0xff]
    %2242 = vset.pattern.permute.xlu0 0
    %2243 = vperm.xlu0 %2242, %v2231
    %v2244 = vpop.permute.xlu0 %2243
    %2245 = vset.pattern.permute.xlu0 0
    %2246 = vperm.xlu0 %2245, %v2232
    %v2247 = vpop.permute.xlu0 %2246
    %2248 = vset.pattern.permute.xlu0 0
    %2249 = vperm.xlu0 %2248, %v2234
    %v2250 = vpop.permute.xlu0 %2249
    %2251 = vset.pattern.permute.xlu0 0
    %2252 = vperm.xlu0 %2251, %v2235
    %v2253 = vpop.permute.xlu0 %2252
    %v2254 = vlaneseq
    %v2255 = vshrl.u32 %v2254, 7
    %v2256 = vsub.s32 %v154, %v2255
    %v2257 = vrot.slane %v2244, %v2256
    %v2258 = vlaneseq
    %v2259 = vshrl.u32 %v2258, 7
    %v2260 = vsub.s32 %v2134, %v2259
    %v2261 = vrot.slane %v2247, %v2260
    %v2262 = vsel %vm2139, %v2261, %v2257
    %v2263 = vlaneseq
    %v2264 = vshrl.u32 %v2263, 7
    %v2265 = vsub.s32 %v154, %v2264
    %v2266 = vrot.slane %v2250, %v2265
    %v2267 = vlaneseq
    %v2268 = vshrl.u32 %v2267, 7
    %v2269 = vsub.s32 %v2134, %v2268
    %v2270 = vrot.slane %v2253, %v2269
    %v2271 = vsel %vm2139, %v2270, %v2266
    %vm2272 = vcmask 1042434
    %v2273 = vsel %vm2272, %v2262, %v2262
    %vm2274 = vcmask 1043459
    %v2275 = vsel %vm2274, %v2262, %v2273
    %vm2276 = vcmask 1044484
    %v2277 = vsel %vm2276, %v2262, %v2275
    %vm2278 = vcmask 1045509
    %v2279 = vsel %vm2278, %v2262, %v2277
    %vm2280 = vcmask 1046534
    %v2281 = vsel %vm2280, %v2262, %v2279
    %vm2282 = vcmask 1047559
    %v2283 = vsel %vm2282, %v2262, %v2281
    %v2284 = vsel %vm2272, %v2271, %v2271
    %v2285 = vsel %vm2274, %v2271, %v2284
    %v2286 = vsel %vm2276, %v2271, %v2285
    %v2287 = vsel %vm2278, %v2271, %v2286
    %v2288 = vsel %vm2280, %v2271, %v2287
    %v2289 = vsel %vm2282, %v2271, %v2288
    %v2292 = vmul.f32 %v2236, %v2283
    %v2293 = vmul.f32 %v2237, %v2289
    %vm2294 = vcmask 130048
    %v2295 = vsel %vm2294, %v2292, 0.0
    %2296 = vadd.xlane.f32.xlu0 %v2295
    %v2297 = vpop.xlane.xlu0 %2296
    %v2298 = vsel %vm2294, %v2293, 0.0
    %2299 = vadd.xlane.f32.xlu0 %v2298
    %v2300 = vpop.xlane.xlu0 %2299
    %v2301 = vld [vmem:[%s33] sm:$0xff]
    %v2302 = vld [vmem:[%s33 + $0x8] sm:$0xff]
    %v2303 = vld [vmem:[%s33 + $0x10] sm:$0xff]
    %v2304 = vld [vmem:[%s33 + $0x18] sm:$0xff]
    %v2305 = vld [vmem:[%s33 + $0x20] sm:$0xff]
    %v2306 = vld [vmem:[%s33 + $0x28] sm:$0xff]
    %v2307 = vld [vmem:[%s33 + $0x30] sm:$0xff]
    %v2308 = vld [vmem:[%s33 + $0x38] sm:$0xff]
    %v2309 = vld [vmem:[%s33 + $0x40] sm:$0xff]
    %v2310 = vld [vmem:[%s33 + $0x48] sm:$0xff]
    %v2311 = vld [vmem:[%s33 + $0x50] sm:$0xff]
    %v2312 = vld [vmem:[%s33 + $0x58] sm:$0xff]
    %v2313 = vld [vmem:[%s33 + $0x60] sm:$0xff]
    %v2314 = vld [vmem:[%s33 + $0x68] sm:$0xff]
    %v2315 = vld [vmem:[%s33 + $0x70] sm:$0xff]
    %v2316 = vld [vmem:[%s33 + $0x78] sm:$0xff]
    %v2317 = vld [vmem:[%s37] sm:$0xff]
    %v2318 = vld [vmem:[%s37 + $0x8] sm:$0xff]
    %v2319 = vld [vmem:[%s37 + $0x10] sm:$0xff]
    %v2320 = vld [vmem:[%s37 + $0x18] sm:$0xff]
    %v2321 = vld [vmem:[%s37 + $0x20] sm:$0xff]
    %v2322 = vld [vmem:[%s37 + $0x28] sm:$0xff]
    %v2323 = vld [vmem:[%s37 + $0x30] sm:$0xff]
    %v2324 = vld [vmem:[%s37 + $0x38] sm:$0xff]
    %v2325 = vld [vmem:[%s35] sm:$0xff]
    %v2326 = vld [vmem:[%s35 + $0x8] sm:$0xff]
    %v2327 = vld [vmem:[%s35 + $0x10] sm:$0xff]
    %v2328 = vld [vmem:[%s35 + $0x18] sm:$0xff]
    %v2329 = vld [vmem:[%s35 + $0x20] sm:$0xff]
    %v2330 = vld [vmem:[%s35 + $0x28] sm:$0xff]
    %v2331 = vld [vmem:[%s35 + $0x30] sm:$0xff]
    %v2332 = vld [vmem:[%s35 + $0x38] sm:$0xff]
    %v2333 = vld [vmem:[%s35 + $0x40] sm:$0xff]
    %v2334 = vld [vmem:[%s35 + $0x48] sm:$0xff]
    %v2335 = vld [vmem:[%s35 + $0x50] sm:$0xff]
    %v2336 = vld [vmem:[%s35 + $0x58] sm:$0xff]
    %v2337 = vld [vmem:[%s35 + $0x60] sm:$0xff]
    %v2338 = vld [vmem:[%s35 + $0x68] sm:$0xff]
    %v2339 = vld [vmem:[%s35 + $0x70] sm:$0xff]
    %v2340 = vld [vmem:[%s35 + $0x78] sm:$0xff]
    %v2341 = vld [vmem:[%s39] sm:$0xff]
    %v2342 = vld [vmem:[%s39 + $0x8] sm:$0xff]
    %v2343 = vld [vmem:[%s39 + $0x10] sm:$0xff]
    %v2344 = vld [vmem:[%s39 + $0x18] sm:$0xff]
    %v2345 = vld [vmem:[%s39 + $0x20] sm:$0xff]
    %v2346 = vld [vmem:[%s39 + $0x28] sm:$0xff]
    %v2347 = vld [vmem:[%s39 + $0x30] sm:$0xff]
    %v2348 = vld [vmem:[%s39 + $0x38] sm:$0xff]
    %v2349 = vld [vmem:[%s39 + $0x40] sm:$0xff]
    %v2350 = vld [vmem:[%s39 + $0x48] sm:$0xff]
    %v2351 = vld [vmem:[%s39 + $0x50] sm:$0xff]
    %v2352 = vld [vmem:[%s39 + $0x58] sm:$0xff]
    %v2353 = vld [vmem:[%s39 + $0x60] sm:$0xff]
    %v2354 = vld [vmem:[%s39 + $0x68] sm:$0xff]
    %v2355 = vld [vmem:[%s39 + $0x70] sm:$0xff]
    %v2356 = vld [vmem:[%s39 + $0x78] sm:$0xff]
    %v2357 = vld [vmem:[%s39 + $0x80] sm:$0xff]
    %v2358 = vld [vmem:[%s39 + $0x88] sm:$0xff]
    %v2359 = vld [vmem:[%s39 + $0x90] sm:$0xff]
    %v2360 = vld [vmem:[%s39 + $0x98] sm:$0xff]
    %v2361 = vld [vmem:[%s39 + $0xa0] sm:$0xff]
    %v2362 = vld [vmem:[%s39 + $0xa8] sm:$0xff]
    %v2363 = vld [vmem:[%s39 + $0xb0] sm:$0xff]
    %v2364 = vld [vmem:[%s39 + $0xb8] sm:$0xff]
    %v2365 = vld [vmem:[%s39 + $0xc0] sm:$0x1]
    %v2366 = vld [vmem:[%s39 + $0xc8] sm:$0x1]
    %v2367 = vld [vmem:[%s39 + $0xd0] sm:$0x1]
    %v2368 = vld [vmem:[%s39 + $0xd8] sm:$0x1]
    %v2369 = vld [vmem:[%s41] sm:$0xf]
    %v2371 = vlaneseq
    %v2372 = vshrl.u32 %v2371, 7
    %v2373 = vsub.s32 0, %v2372
    %v2374 = vrot.slane %v2369, %v2373
    %v2375 = vlaneseq
    %v2376 = vshrl.u32 %v2375, 7
    %v2377 = vsub.s32 1, %v2376
    %v2378 = vrot.slane %v2369, %v2377
    %v2379 = vlaneseq
    %v2380 = vshrl.u32 %v2379, 7
    %v2381 = vsub.s32 2, %v2380
    %v2382 = vrot.slane %v2369, %v2381
    %v2383 = vlaneseq
    %v2384 = vshrl.u32 %v2383, 7
    %v2385 = vsub.s32 3, %v2384
    %v2386 = vrot.slane %v2369, %v2385
    %vm2391 = vcmask 400384
    %v2393 = vsel %vm2391, %v2325, 0
    %v2396 = vsel %vm2391, %v2326, 0
    %v2399 = vsel %vm2391, %v2327, 0
    %v2402 = vsel %vm2391, %v2328, 0
    %v2405 = vsel %vm2391, %v2329, 0
    %v2408 = vsel %vm2391, %v2330, 0
    %v2411 = vsel %vm2391, %v2331, 0
    %v2414 = vsel %vm2391, %v2332, 0
    %v2417 = vsel %vm2391, %v2333, 0
    %v2420 = vsel %vm2391, %v2334, 0
    %v2423 = vsel %vm2391, %v2335, 0
    %v2426 = vsel %vm2391, %v2336, 0
    %v2429 = vsel %vm2391, %v2337, 0
    %v2432 = vsel %vm2391, %v2338, 0
    %v2435 = vsel %vm2391, %v2339, 0
    %v2438 = vsel %vm2391, %v2340, 0
    %v2441 = vsel %vm165, %v2365, 0
    %v2444 = vsel %vm165, %v2366, 0
    %v2447 = vsel %vm165, %v2367, 0
    %v2450 = vsel %vm165, %v2368, 0
    %2452 = vmatprep.subr.mxu0 %v2342
    %2453 = vmatpush1.msra.mxu0 %v2341
    %2454 = vmatprep.subr.mxu0 %v2346
    %2455 = vmatpush1.msra.mxu0 %v2345
    %2456 = vmatprep.subr.mxu0 %v2350
    %2457 = vmatpush1.msra.mxu0 %v2349
    %2458 = vmatprep.subr.mxu0 %v2354
    %2459 = vmatpush1.msra.mxu0 %v2353
    %2460 = vmatprep.subr.mxu0 %v2358
    %2461 = vmatpush1.msra.mxu0 %v2357
    %2462 = vmatprep.subr.mxu0 %v2362
    %2463 = vmatpush1.msra.mxu0 %v2361
    %2464 = vmatprep.subr.mxu0 %v2444
    %2465 = vmatpush1.msra.mxu0 %v2441
    %2466 = vmatprep.subr.mxu0 0.0
    %2467 = vmatpush1.msra.mxu0 0.0
    %2468 = vmatprep.subr.mxu0 0.0
    %2469 = vmatpush1.msra.mxu0 0.0
    %2470 = vmatprep.subr.mxu0 0.0
    %2471 = vmatpush1.msra.mxu0 0.0
    %2472 = vmatprep.subr.mxu0 0.0
    %2473 = vmatpush1.msra.mxu0 0.0
    %2474 = vmatprep.subr.mxu0 0.0
    %2475 = vmatpush1.msra.mxu0 0.0
    %2476 = vmatprep.subr.mxu0 0.0
    %2477 = vmatpush1.msra.mxu0 0.0
    %2478 = vmatprep.subr.mxu0 0.0
    %2479 = vmatpush1.msra.mxu0 0.0
    %2480 = vmatprep.subr.mxu0 0.0
    %2481 = vmatpush1.msra.mxu0 0.0
    %2482 = vmatprep.subr.mxu0 0.0
    %2483 = vmatpush1.msra.mxu0 0.0
    %2484 = vmatprep.subr.mxu0 0.0
    %2485 = vmatpush1.msra.mxu0 0.0
    %2486 = vmatprep.subr.mxu0 0.0
    %2487 = vmatpush1.msra.mxu0 0.0
    %2488 = vmatprep.subr.mxu0 0.0
    %2489 = vmatpush1.msra.mxu0 0.0
    %2490 = vmatprep.subr.mxu0 0.0
    %2491 = vmatpush1.msra.mxu0 0.0
    %2492 = vmatprep.subr.mxu0 0.0
    %2493 = vmatpush1.msra.mxu0 0.0
    %2494 = vmatprep.subr.mxu0 0.0
    %2495 = vmatpush1.msra.mxu0 0.0
    %2496 = vmatprep.subr.mxu0 0.0
    %2497 = vmatpush1.msra.mxu0 0.0
    %2498 = vmatprep.subr.mxu0 0.0
    %2499 = vmatpush1.msra.mxu0 0.0
    %2500 = vmatprep.subr.mxu0 0.0
    %2501 = vmatpush1.msra.mxu0 0.0
    %2502 = vmatprep.subr.mxu0 0.0
    %2503 = vmatpush1.msra.mxu0 0.0
    %2504 = vmatprep.subr.mxu0 0.0
    %2505 = vmatpush1.msra.mxu0 0.0
    %2506 = vmatprep.subr.mxu0 0.0
    %2507 = vmatpush1.msra.mxu0 0.0
    %2508 = vmatprep.subr.mxu0 0.0
    %2509 = vmatpush1.msra.mxu0 0.0
    %2510 = vmatprep.subr.mxu0 0.0
    %2511 = vmatpush1.msra.mxu0 0.0
    %2512 = vmatprep.subr.mxu0 0.0
    %2513 = vmatpush1.msra.mxu0 0.0
    %2514 = vmatprep.subr.mxu0 0.0
    %2515 = vmatpush1.msra.mxu0 0.0
    %2516 = vmatprep.mubr.f32.mxu0 0.0
    %2517 = vmatmul.mubr.f32.gmra.mrb[0].mxu0 %v2393
    %v2518 = vpop.f32.mrb[0].mxu0
    %v2519 = vadd.f32 %v2374, %v2518
    %v2520 = vpop.f32.mrb[0].mxu0
    %v2521 = vadd.f32 %v2378, %v2520
    %2522 = vmatprep.mubr.f32.mxu0 0.0
    %2523 = vmatmul.mubr.f32.gmra.mrb[0].mxu0 %v2396
    %v2524 = vpop.f32.mrb[0].mxu0
    %v2525 = vadd.f32 %v2374, %v2524
    %v2526 = vpop.f32.mrb[0].mxu0
    %v2527 = vadd.f32 %v2378, %v2526
    %2528 = vmatprep.mubr.f32.mxu0 0.0
    %2529 = vmatmul.mubr.f32.gmra.mrb[0].mxu0 %v2399
    %v2530 = vpop.f32.mrb[0].mxu0
    %v2531 = vadd.f32 %v2374, %v2530
    %v2532 = vpop.f32.mrb[0].mxu0
    %v2533 = vadd.f32 %v2378, %v2532
    %2534 = vmatprep.mubr.f32.mxu0 0.0
    %2535 = vmatmul.mubr.f32.gmra.mrb[0].mxu0 %v2402
    %v2536 = vpop.f32.mrb[0].mxu0
    %v2537 = vadd.f32 %v2374, %v2536
    %v2538 = vpop.f32.mrb[0].mxu0
    %v2539 = vadd.f32 %v2378, %v2538
    %2540 = vmatprep.mubr.f32.mxu0 0.0
    %2541 = vmatmul.mubr.f32.gmra.mrb[0].mxu0 %v2405
    %v2542 = vpop.f32.mrb[0].mxu0
    %v2543 = vadd.f32 %v2374, %v2542
    %v2544 = vpop.f32.mrb[0].mxu0
    %v2545 = vadd.f32 %v2378, %v2544
    %2546 = vmatprep.mubr.f32.mxu0 0.0
    %2547 = vmatmul.mubr.f32.gmra.mrb[0].mxu0 %v2408
    %v2548 = vpop.f32.mrb[0].mxu0
    %v2549 = vadd.f32 %v2374, %v2548
    %v2550 = vpop.f32.mrb[0].mxu0
    %v2551 = vadd.f32 %v2378, %v2550
    %2552 = vmatprep.mubr.f32.mxu0 0.0
    %2553 = vmatmul.mubr.f32.gmra.mrb[0].mxu0 %v2411
    %v2554 = vpop.f32.mrb[0].mxu0
    %v2555 = vadd.f32 %v2374, %v2554
    %v2556 = vpop.f32.mrb[0].mxu0
    %v2557 = vadd.f32 %v2378, %v2556
    %2558 = vmatprep.mubr.f32.mxu0 0.0
    %2559 = vmatmul.mubr.f32.gmra.mrb[0].mxu0 %v2414
    %v2560 = vpop.f32.mrb[0].mxu0
    %v2561 = vadd.f32 %v2374, %v2560
    %v2562 = vpop.f32.mrb[0].mxu0
    %v2563 = vadd.f32 %v2378, %v2562
    %2564 = vmatprep.mubr.f32.mxu0 0.0
    %2565 = vmatmul.mubr.f32.gmra.mrb[0].mxu0 %v2417
    %v2566 = vpop.f32.mrb[0].mxu0
    %v2567 = vadd.f32 %v2374, %v2566
    %v2568 = vpop.f32.mrb[0].mxu0
    %v2569 = vadd.f32 %v2378, %v2568
    %2570 = vmatprep.mubr.f32.mxu0 0.0
    %2571 = vmatmul.mubr.f32.gmra.mrb[0].mxu0 %v2420
    %v2572 = vpop.f32.mrb[0].mxu0
    %v2573 = vadd.f32 %v2374, %v2572
    %v2574 = vpop.f32.mrb[0].mxu0
    %v2575 = vadd.f32 %v2378, %v2574
    %2576 = vmatprep.mubr.f32.mxu0 0.0
    %2577 = vmatmul.mubr.f32.gmra.mrb[0].mxu0 %v2423
    %v2578 = vpop.f32.mrb[0].mxu0
    %v2579 = vadd.f32 %v2374, %v2578
    %v2580 = vpop.f32.mrb[0].mxu0
    %v2581 = vadd.f32 %v2378, %v2580
    %2582 = vmatprep.mubr.f32.mxu0 0.0
    %2583 = vmatmul.mubr.f32.gmra.mrb[0].mxu0 %v2426
    %v2584 = vpop.f32.mrb[0].mxu0
    %v2585 = vadd.f32 %v2374, %v2584
    %v2586 = vpop.f32.mrb[0].mxu0
    %v2587 = vadd.f32 %v2378, %v2586
    %2588 = vmatprep.mubr.f32.mxu0 0.0
    %2589 = vmatmul.mubr.f32.gmra.mrb[0].mxu0 %v2429
    %v2590 = vpop.f32.mrb[0].mxu0
    %v2591 = vadd.f32 %v2374, %v2590
    %v2592 = vpop.f32.mrb[0].mxu0
    %v2593 = vadd.f32 %v2378, %v2592
    %2594 = vmatprep.mubr.f32.mxu0 0.0
    %2595 = vmatmul.mubr.f32.gmra.mrb[0].mxu0 %v2432
    %v2596 = vpop.f32.mrb[0].mxu0
    %v2597 = vadd.f32 %v2374, %v2596
    %v2598 = vpop.f32.mrb[0].mxu0
    %v2599 = vadd.f32 %v2378, %v2598
    %2600 = vmatprep.mubr.f32.mxu0 0.0
    %2601 = vmatmul.mubr.f32.gmra.mrb[0].mxu0 %v2435
    %v2602 = vpop.f32.mrb[0].mxu0
    %v2603 = vadd.f32 %v2374, %v2602
    %v2604 = vpop.f32.mrb[0].mxu0
    %v2605 = vadd.f32 %v2378, %v2604
    %2606 = vmatprep.mubr.f32.mxu0 0.0
    %2607 = vmatmul.mubr.f32.gmra.mrb[0].mxu0 %v2438
    %v2608 = vpop.f32.mrb[0].mxu0
    %v2609 = vadd.f32 %v2374, %v2608
    %v2610 = vpop.f32.mrb[0].mxu0
    %v2611 = vadd.f32 %v2378, %v2610
    %2612 = vdwg.mxu0
    %2613 = vmatprep.subr.mxu0 %v2344
    %2614 = vmatpush1.msra.mxu0 %v2343
    %2615 = vmatprep.subr.mxu0 %v2348
    %2616 = vmatpush1.msra.mxu0 %v2347
    %2617 = vmatprep.subr.mxu0 %v2352
    %2618 = vmatpush1.msra.mxu0 %v2351
    %2619 = vmatprep.subr.mxu0 %v2356
    %2620 = vmatpush1.msra.mxu0 %v2355
    %2621 = vmatprep.subr.mxu0 %v2360
    %2622 = vmatpush1.msra.mxu0 %v2359
    %2623 = vmatprep.subr.mxu0 %v2364
    %2624 = vmatpush1.msra.mxu0 %v2363
    %2625 = vmatprep.subr.mxu0 %v2450
    %2626 = vmatpush1.msra.mxu0 %v2447
    %2627 = vmatprep.subr.mxu0 0.0
    %2628 = vmatpush1.msra.mxu0 0.0
    %2629 = vmatprep.subr.mxu0 0.0
    %2630 = vmatpush1.msra.mxu0 0.0
    %2631 = vmatprep.subr.mxu0 0.0
    %2632 = vmatpush1.msra.mxu0 0.0
    %2633 = vmatprep.subr.mxu0 0.0
    %2634 = vmatpush1.msra.mxu0 0.0
    %2635 = vmatprep.subr.mxu0 0.0
    %2636 = vmatpush1.msra.mxu0 0.0
    %2637 = vmatprep.subr.mxu0 0.0
    %2638 = vmatpush1.msra.mxu0 0.0
    %2639 = vmatprep.subr.mxu0 0.0
    %2640 = vmatpush1.msra.mxu0 0.0
    %2641 = vmatprep.subr.mxu0 0.0
    %2642 = vmatpush1.msra.mxu0 0.0
    %2643 = vmatprep.subr.mxu0 0.0
    %2644 = vmatpush1.msra.mxu0 0.0
    %2645 = vmatprep.subr.mxu0 0.0
    %2646 = vmatpush1.msra.mxu0 0.0
    %2647 = vmatprep.subr.mxu0 0.0
    %2648 = vmatpush1.msra.mxu0 0.0
    %2649 = vmatprep.subr.mxu0 0.0
    %2650 = vmatpush1.msra.mxu0 0.0
    %2651 = vmatprep.subr.mxu0 0.0
    %2652 = vmatpush1.msra.mxu0 0.0
    %2653 = vmatprep.subr.mxu0 0.0
    %2654 = vmatpush1.msra.mxu0 0.0
    %2655 = vmatprep.subr.mxu0 0.0
    %2656 = vmatpush1.msra.mxu0 0.0
    %2657 = vmatprep.subr.mxu0 0.0
    %2658 = vmatpush1.msra.mxu0 0.0
    %2659 = vmatprep.subr.mxu0 0.0
    %2660 = vmatpush1.msra.mxu0 0.0
    %2661 = vmatprep.subr.mxu0 0.0
    %2662 = vmatpush1.msra.mxu0 0.0
    %2663 = vmatprep.subr.mxu0 0.0
    %2664 = vmatpush1.msra.mxu0 0.0
    %2665 = vmatprep.subr.mxu0 0.0
    %2666 = vmatpush1.msra.mxu0 0.0
    %2667 = vmatprep.subr.mxu0 0.0
    %2668 = vmatpush1.msra.mxu0 0.0
    %2669 = vmatprep.subr.mxu0 0.0
    %2670 = vmatpush1.msra.mxu0 0.0
    %2671 = vmatprep.subr.mxu0 0.0
    %2672 = vmatpush1.msra.mxu0 0.0
    %2673 = vmatprep.subr.mxu0 0.0
    %2674 = vmatpush1.msra.mxu0 0.0
    %2675 = vmatprep.subr.mxu0 0.0
    %2676 = vmatpush1.msra.mxu0 0.0
    %2677 = vmatprep.mubr.f32.mxu0 0.0
    %2678 = vmatmul.mubr.f32.gmra.mrb[0].mxu0 %v2393
    %v2679 = vpop.f32.mrb[0].mxu0
    %v2680 = vadd.f32 %v2382, %v2679
    %v2681 = vpop.f32.mrb[0].mxu0
    %v2682 = vadd.f32 %v2386, %v2681
    %2683 = vmatprep.mubr.f32.mxu0 0.0
    %2684 = vmatmul.mubr.f32.gmra.mrb[0].mxu0 %v2396
    %v2685 = vpop.f32.mrb[0].mxu0
    %v2686 = vadd.f32 %v2382, %v2685
    %v2687 = vpop.f32.mrb[0].mxu0
    %v2688 = vadd.f32 %v2386, %v2687
    %2689 = vmatprep.mubr.f32.mxu0 0.0
    %2690 = vmatmul.mubr.f32.gmra.mrb[0].mxu0 %v2399
    %v2691 = vpop.f32.mrb[0].mxu0
    %v2692 = vadd.f32 %v2382, %v2691
    %v2693 = vpop.f32.mrb[0].mxu0
    %v2694 = vadd.f32 %v2386, %v2693
    %2695 = vmatprep.mubr.f32.mxu0 0.0
    %2696 = vmatmul.mubr.f32.gmra.mrb[0].mxu0 %v2402
    %v2697 = vpop.f32.mrb[0].mxu0
    %v2698 = vadd.f32 %v2382, %v2697
    %v2699 = vpop.f32.mrb[0].mxu0
    %v2700 = vadd.f32 %v2386, %v2699
    %2701 = vmatprep.mubr.f32.mxu0 0.0
    %2702 = vmatmul.mubr.f32.gmra.mrb[0].mxu0 %v2405
    %v2703 = vpop.f32.mrb[0].mxu0
    %v2704 = vadd.f32 %v2382, %v2703
    %v2705 = vpop.f32.mrb[0].mxu0
    %v2706 = vadd.f32 %v2386, %v2705
    %2707 = vmatprep.mubr.f32.mxu0 0.0
    %2708 = vmatmul.mubr.f32.gmra.mrb[0].mxu0 %v2408
    %v2709 = vpop.f32.mrb[0].mxu0
    %v2710 = vadd.f32 %v2382, %v2709
    %v2711 = vpop.f32.mrb[0].mxu0
    %v2712 = vadd.f32 %v2386, %v2711
    %2713 = vmatprep.mubr.f32.mxu0 0.0
    %2714 = vmatmul.mubr.f32.gmra.mrb[0].mxu0 %v2411
    %v2715 = vpop.f32.mrb[0].mxu0
    %v2716 = vadd.f32 %v2382, %v2715
    %v2717 = vpop.f32.mrb[0].mxu0
    %v2718 = vadd.f32 %v2386, %v2717
    %2719 = vmatprep.mubr.f32.mxu0 0.0
    %2720 = vmatmul.mubr.f32.gmra.mrb[0].mxu0 %v2414
    %v2721 = vpop.f32.mrb[0].mxu0
    %v2722 = vadd.f32 %v2382, %v2721
    %v2723 = vpop.f32.mrb[0].mxu0
    %v2724 = vadd.f32 %v2386, %v2723
    %2725 = vmatprep.mubr.f32.mxu0 0.0
    %2726 = vmatmul.mubr.f32.gmra.mrb[0].mxu0 %v2417
    %v2727 = vpop.f32.mrb[0].mxu0
    %v2728 = vadd.f32 %v2382, %v2727
    %v2729 = vpop.f32.mrb[0].mxu0
    %v2730 = vadd.f32 %v2386, %v2729
    %2731 = vmatprep.mubr.f32.mxu0 0.0
    %2732 = vmatmul.mubr.f32.gmra.mrb[0].mxu0 %v2420
    %v2733 = vpop.f32.mrb[0].mxu0
    %v2734 = vadd.f32 %v2382, %v2733
    %v2735 = vpop.f32.mrb[0].mxu0
    %v2736 = vadd.f32 %v2386, %v2735
    %2737 = vmatprep.mubr.f32.mxu0 0.0
    %2738 = vmatmul.mubr.f32.gmra.mrb[0].mxu0 %v2423
    %v2739 = vpop.f32.mrb[0].mxu0
    %v2740 = vadd.f32 %v2382, %v2739
    %v2741 = vpop.f32.mrb[0].mxu0
    %v2742 = vadd.f32 %v2386, %v2741
    %2743 = vmatprep.mubr.f32.mxu0 0.0
    %2744 = vmatmul.mubr.f32.gmra.mrb[0].mxu0 %v2426
    %v2745 = vpop.f32.mrb[0].mxu0
    %v2746 = vadd.f32 %v2382, %v2745
    %v2747 = vpop.f32.mrb[0].mxu0
    %v2748 = vadd.f32 %v2386, %v2747
    %2749 = vmatprep.mubr.f32.mxu0 0.0
    %2750 = vmatmul.mubr.f32.gmra.mrb[0].mxu0 %v2429
    %v2751 = vpop.f32.mrb[0].mxu0
    %v2752 = vadd.f32 %v2382, %v2751
    %v2753 = vpop.f32.mrb[0].mxu0
    %v2754 = vadd.f32 %v2386, %v2753
    %2755 = vmatprep.mubr.f32.mxu0 0.0
    %2756 = vmatmul.mubr.f32.gmra.mrb[0].mxu0 %v2432
    %v2757 = vpop.f32.mrb[0].mxu0
    %v2758 = vadd.f32 %v2382, %v2757
    %v2759 = vpop.f32.mrb[0].mxu0
    %v2760 = vadd.f32 %v2386, %v2759
    %2761 = vmatprep.mubr.f32.mxu0 0.0
    %2762 = vmatmul.mubr.f32.gmra.mrb[0].mxu0 %v2435
    %v2763 = vpop.f32.mrb[0].mxu0
    %v2764 = vadd.f32 %v2382, %v2763
    %v2765 = vpop.f32.mrb[0].mxu0
    %v2766 = vadd.f32 %v2386, %v2765
    %2767 = vmatprep.mubr.f32.mxu0 0.0
    %2768 = vmatmul.mubr.f32.gmra.mrb[0].mxu0 %v2438
    %v2769 = vpop.f32.mrb[0].mxu0
    %v2770 = vadd.f32 %v2382, %v2769
    %v2771 = vpop.f32.mrb[0].mxu0
    %v2772 = vadd.f32 %v2386, %v2771
    %2773 = vdwg.mxu0
    %v2775 = vsel %vm2294, %v2301, 0
    %v2778 = vsel %vm2294, %v2302, 0
    %v2781 = vsel %vm2294, %v2303, 0
    %v2784 = vsel %vm2294, %v2304, 0
    %v2787 = vsel %vm2294, %v2305, 0
    %v2790 = vsel %vm2294, %v2306, 0
    %v2793 = vsel %vm2294, %v2307, 0
    %v2796 = vsel %vm2294, %v2308, 0
    %v2799 = vsel %vm2294, %v2309, 0
    %v2802 = vsel %vm2294, %v2310, 0
    %v2805 = vsel %vm2294, %v2311, 0
    %v2808 = vsel %vm2294, %v2312, 0
    %v2811 = vsel %vm2294, %v2313, 0
    %v2814 = vsel %vm2294, %v2314, 0
    %v2817 = vsel %vm2294, %v2315, 0
    %v2820 = vsel %vm2294, %v2316, 0
    %2822 = vmatprep.subr.mxu0 %v2318
    %2823 = vmatpush1.msra.mxu0 %v2317
    %2824 = vmatprep.subr.mxu0 %v2322
    %2825 = vmatpush1.msra.mxu0 %v2321
    %2826 = vmatprep.subr.mxu0 0.0
    %2827 = vmatpush1.msra.mxu0 0.0
    %2828 = vmatprep.subr.mxu0 0.0
    %2829 = vmatpush1.msra.mxu0 0.0
    %2830 = vmatprep.subr.mxu0 0.0
    %2831 = vmatpush1.msra.mxu0 0.0
    %2832 = vmatprep.subr.mxu0 0.0
    %2833 = vmatpush1.msra.mxu0 0.0
    %2834 = vmatprep.subr.mxu0 0.0
    %2835 = vmatpush1.msra.mxu0 0.0
    %2836 = vmatprep.subr.mxu0 0.0
    %2837 = vmatpush1.msra.mxu0 0.0
    %2838 = vmatprep.subr.mxu0 0.0
    %2839 = vmatpush1.msra.mxu0 0.0
    %2840 = vmatprep.subr.mxu0 0.0
    %2841 = vmatpush1.msra.mxu0 0.0
    %2842 = vmatprep.subr.mxu0 0.0
    %2843 = vmatpush1.msra.mxu0 0.0
    %2844 = vmatprep.subr.mxu0 0.0
    %2845 = vmatpush1.msra.mxu0 0.0
    %2846 = vmatprep.subr.mxu0 0.0
    %2847 = vmatpush1.msra.mxu0 0.0
    %2848 = vmatprep.subr.mxu0 0.0
    %2849 = vmatpush1.msra.mxu0 0.0
    %2850 = vmatprep.subr.mxu0 0.0
    %2851 = vmatpush1.msra.mxu0 0.0
    %2852 = vmatprep.subr.mxu0 0.0
    %2853 = vmatpush1.msra.mxu0 0.0
    %2854 = vmatprep.subr.mxu0 0.0
    %2855 = vmatpush1.msra.mxu0 0.0
    %2856 = vmatprep.subr.mxu0 0.0
    %2857 = vmatpush1.msra.mxu0 0.0
    %2858 = vmatprep.subr.mxu0 0.0
    %2859 = vmatpush1.msra.mxu0 0.0
    %2860 = vmatprep.subr.mxu0 0.0
    %2861 = vmatpush1.msra.mxu0 0.0
    %2862 = vmatprep.subr.mxu0 0.0
    %2863 = vmatpush1.msra.mxu0 0.0
    %2864 = vmatprep.subr.mxu0 0.0
    %2865 = vmatpush1.msra.mxu0 0.0
    %2866 = vmatprep.subr.mxu0 0.0
    %2867 = vmatpush1.msra.mxu0 0.0
    %2868 = vmatprep.subr.mxu0 0.0
    %2869 = vmatpush1.msra.mxu0 0.0
    %2870 = vmatprep.subr.mxu0 0.0
    %2871 = vmatpush1.msra.mxu0 0.0
    %2872 = vmatprep.subr.mxu0 0.0
    %2873 = vmatpush1.msra.mxu0 0.0
    %2874 = vmatprep.subr.mxu0 0.0
    %2875 = vmatpush1.msra.mxu0 0.0
    %2876 = vmatprep.subr.mxu0 0.0
    %2877 = vmatpush1.msra.mxu0 0.0
    %2878 = vmatprep.subr.mxu0 0.0
    %2879 = vmatpush1.msra.mxu0 0.0
    %2880 = vmatprep.subr.mxu0 0.0
    %2881 = vmatpush1.msra.mxu0 0.0
    %2882 = vmatprep.subr.mxu0 0.0
    %2883 = vmatpush1.msra.mxu0 0.0
    %2884 = vmatprep.subr.mxu0 0.0
    %2885 = vmatpush1.msra.mxu0 0.0
    %2886 = vmatprep.mubr.f32.mxu0 0.0
    %2887 = vmatmul.mubr.f32.gmra.mrb[0].mxu0 %v2775
    %v2888 = vpop.f32.mrb[0].mxu0
    %v2889 = vadd.f32 %v2519, %v2888
    %v2890 = vpop.f32.mrb[0].mxu0
    %v2891 = vadd.f32 %v2521, %v2890
    %2892 = vmatprep.mubr.f32.mxu0 0.0
    %2893 = vmatmul.mubr.f32.gmra.mrb[0].mxu0 %v2778
    %v2894 = vpop.f32.mrb[0].mxu0
    %v2895 = vadd.f32 %v2525, %v2894
    %v2896 = vpop.f32.mrb[0].mxu0
    %v2897 = vadd.f32 %v2527, %v2896
    %2898 = vmatprep.mubr.f32.mxu0 0.0
    %2899 = vmatmul.mubr.f32.gmra.mrb[0].mxu0 %v2781
    %v2900 = vpop.f32.mrb[0].mxu0
    %v2901 = vadd.f32 %v2531, %v2900
    %v2902 = vpop.f32.mrb[0].mxu0
    %v2903 = vadd.f32 %v2533, %v2902
    %2904 = vmatprep.mubr.f32.mxu0 0.0
    %2905 = vmatmul.mubr.f32.gmra.mrb[0].mxu0 %v2784
    %v2906 = vpop.f32.mrb[0].mxu0
    %v2907 = vadd.f32 %v2537, %v2906
    %v2908 = vpop.f32.mrb[0].mxu0
    %v2909 = vadd.f32 %v2539, %v2908
    %2910 = vmatprep.mubr.f32.mxu0 0.0
    %2911 = vmatmul.mubr.f32.gmra.mrb[0].mxu0 %v2787
    %v2912 = vpop.f32.mrb[0].mxu0
    %v2913 = vadd.f32 %v2543, %v2912
    %v2914 = vpop.f32.mrb[0].mxu0
    %v2915 = vadd.f32 %v2545, %v2914
    %2916 = vmatprep.mubr.f32.mxu0 0.0
    %2917 = vmatmul.mubr.f32.gmra.mrb[0].mxu0 %v2790
    %v2918 = vpop.f32.mrb[0].mxu0
    %v2919 = vadd.f32 %v2549, %v2918
    %v2920 = vpop.f32.mrb[0].mxu0
    %v2921 = vadd.f32 %v2551, %v2920
    %2922 = vmatprep.mubr.f32.mxu0 0.0
    %2923 = vmatmul.mubr.f32.gmra.mrb[0].mxu0 %v2793
    %v2924 = vpop.f32.mrb[0].mxu0
    %v2925 = vadd.f32 %v2555, %v2924
    %v2926 = vpop.f32.mrb[0].mxu0
    %v2927 = vadd.f32 %v2557, %v2926
    %2928 = vmatprep.mubr.f32.mxu0 0.0
    %2929 = vmatmul.mubr.f32.gmra.mrb[0].mxu0 %v2796
    %v2930 = vpop.f32.mrb[0].mxu0
    %v2931 = vadd.f32 %v2561, %v2930
    %v2932 = vpop.f32.mrb[0].mxu0
    %v2933 = vadd.f32 %v2563, %v2932
    %2934 = vmatprep.mubr.f32.mxu0 0.0
    %2935 = vmatmul.mubr.f32.gmra.mrb[0].mxu0 %v2799
    %v2936 = vpop.f32.mrb[0].mxu0
    %v2937 = vadd.f32 %v2567, %v2936
    %v2938 = vpop.f32.mrb[0].mxu0
    %v2939 = vadd.f32 %v2569, %v2938
    %2940 = vmatprep.mubr.f32.mxu0 0.0
    %2941 = vmatmul.mubr.f32.gmra.mrb[0].mxu0 %v2802
    %v2942 = vpop.f32.mrb[0].mxu0
    %v2943 = vadd.f32 %v2573, %v2942
    %v2944 = vpop.f32.mrb[0].mxu0
    %v2945 = vadd.f32 %v2575, %v2944
    %2946 = vmatprep.mubr.f32.mxu0 0.0
    %2947 = vmatmul.mubr.f32.gmra.mrb[0].mxu0 %v2805
    %v2948 = vpop.f32.mrb[0].mxu0
    %v2949 = vadd.f32 %v2579, %v2948
    %v2950 = vpop.f32.mrb[0].mxu0
    %v2951 = vadd.f32 %v2581, %v2950
    %2952 = vmatprep.mubr.f32.mxu0 0.0
    %2953 = vmatmul.mubr.f32.gmra.mrb[0].mxu0 %v2808
    %v2954 = vpop.f32.mrb[0].mxu0
    %v2955 = vadd.f32 %v2585, %v2954
    %v2956 = vpop.f32.mrb[0].mxu0
    %v2957 = vadd.f32 %v2587, %v2956
    %2958 = vmatprep.mubr.f32.mxu0 0.0
    %2959 = vmatmul.mubr.f32.gmra.mrb[0].mxu0 %v2811
    %v2960 = vpop.f32.mrb[0].mxu0
    %v2961 = vadd.f32 %v2591, %v2960
    %v2962 = vpop.f32.mrb[0].mxu0
    %v2963 = vadd.f32 %v2593, %v2962
    %2964 = vmatprep.mubr.f32.mxu0 0.0
    %2965 = vmatmul.mubr.f32.gmra.mrb[0].mxu0 %v2814
    %v2966 = vpop.f32.mrb[0].mxu0
    %v2967 = vadd.f32 %v2597, %v2966
    %v2968 = vpop.f32.mrb[0].mxu0
    %v2969 = vadd.f32 %v2599, %v2968
    %2970 = vmatprep.mubr.f32.mxu0 0.0
    %2971 = vmatmul.mubr.f32.gmra.mrb[0].mxu0 %v2817
    %v2972 = vpop.f32.mrb[0].mxu0
    %v2973 = vadd.f32 %v2603, %v2972
    %v2974 = vpop.f32.mrb[0].mxu0
    %v2975 = vadd.f32 %v2605, %v2974
    %2976 = vmatprep.mubr.f32.mxu0 0.0
    %2977 = vmatmul.mubr.f32.gmra.mrb[0].mxu0 %v2820
    %v2978 = vpop.f32.mrb[0].mxu0
    %v2979 = vadd.f32 %v2609, %v2978
    %v2980 = vpop.f32.mrb[0].mxu0
    %v2981 = vadd.f32 %v2611, %v2980
    %2982 = vdwg.mxu0
    %2983 = vmatprep.subr.mxu0 %v2320
    %2984 = vmatpush1.msra.mxu0 %v2319
    %2985 = vmatprep.subr.mxu0 %v2324
    %2986 = vmatpush1.msra.mxu0 %v2323
    %2987 = vmatprep.subr.mxu0 0.0
    %2988 = vmatpush1.msra.mxu0 0.0
    %2989 = vmatprep.subr.mxu0 0.0
    %2990 = vmatpush1.msra.mxu0 0.0
    %2991 = vmatprep.subr.mxu0 0.0
    %2992 = vmatpush1.msra.mxu0 0.0
    %2993 = vmatprep.subr.mxu0 0.0
    %2994 = vmatpush1.msra.mxu0 0.0
    %2995 = vmatprep.subr.mxu0 0.0
    %2996 = vmatpush1.msra.mxu0 0.0
    %2997 = vmatprep.subr.mxu0 0.0
    %2998 = vmatpush1.msra.mxu0 0.0
    %2999 = vmatprep.subr.mxu0 0.0
    %3000 = vmatpush1.msra.mxu0 0.0
    %3001 = vmatprep.subr.mxu0 0.0
    %3002 = vmatpush1.msra.mxu0 0.0
    %3003 = vmatprep.subr.mxu0 0.0
    %3004 = vmatpush1.msra.mxu0 0.0
    %3005 = vmatprep.subr.mxu0 0.0
    %3006 = vmatpush1.msra.mxu0 0.0
    %3007 = vmatprep.subr.mxu0 0.0
    %3008 = vmatpush1.msra.mxu0 0.0
    %3009 = vmatprep.subr.mxu0 0.0
    %3010 = vmatpush1.msra.mxu0 0.0
    %3011 = vmatprep.subr.mxu0 0.0
    %3012 = vmatpush1.msra.mxu0 0.0
    %3013 = vmatprep.subr.mxu0 0.0
    %3014 = vmatpush1.msra.mxu0 0.0
    %3015 = vmatprep.subr.mxu0 0.0
    %3016 = vmatpush1.msra.mxu0 0.0
    %3017 = vmatprep.subr.mxu0 0.0
    %3018 = vmatpush1.msra.mxu0 0.0
    %3019 = vmatprep.subr.mxu0 0.0
    %3020 = vmatpush1.msra.mxu0 0.0
    %3021 = vmatprep.subr.mxu0 0.0
    %3022 = vmatpush1.msra.mxu0 0.0
    %3023 = vmatprep.subr.mxu0 0.0
    %3024 = vmatpush1.msra.mxu0 0.0
    %3025 = vmatprep.subr.mxu0 0.0
    %3026 = vmatpush1.msra.mxu0 0.0
    %3027 = vmatprep.subr.mxu0 0.0
    %3028 = vmatpush1.msra.mxu0 0.0
    %3029 = vmatprep.subr.mxu0 0.0
    %3030 = vmatpush1.msra.mxu0 0.0
    %3031 = vmatprep.subr.mxu0 0.0
    %3032 = vmatpush1.msra.mxu0 0.0
    %3033 = vmatprep.subr.mxu0 0.0
    %3034 = vmatpush1.msra.mxu0 0.0
    %3035 = vmatprep.subr.mxu0 0.0
    %3036 = vmatpush1.msra.mxu0 0.0
    %3037 = vmatprep.subr.mxu0 0.0
    %3038 = vmatpush1.msra.mxu0 0.0
    %3039 = vmatprep.subr.mxu0 0.0
    %3040 = vmatpush1.msra.mxu0 0.0
    %3041 = vmatprep.subr.mxu0 0.0
    %3042 = vmatpush1.msra.mxu0 0.0
    %3043 = vmatprep.subr.mxu0 0.0
    %3044 = vmatpush1.msra.mxu0 0.0
    %3045 = vmatprep.subr.mxu0 0.0
    %3046 = vmatpush1.msra.mxu0 0.0
    %3047 = vmatprep.mubr.f32.mxu0 0.0
    %3048 = vmatmul.mubr.f32.gmra.mrb[0].mxu0 %v2775
    %v3049 = vpop.f32.mrb[0].mxu0
    %v3050 = vadd.f32 %v2680, %v3049
    %v3051 = vpop.f32.mrb[0].mxu0
    %v3052 = vadd.f32 %v2682, %v3051
    %3053 = vmatprep.mubr.f32.mxu0 0.0
    %3054 = vmatmul.mubr.f32.gmra.mrb[0].mxu0 %v2778
    %v3055 = vpop.f32.mrb[0].mxu0
    %v3056 = vadd.f32 %v2686, %v3055
    %v3057 = vpop.f32.mrb[0].mxu0
    %v3058 = vadd.f32 %v2688, %v3057
    %3059 = vmatprep.mubr.f32.mxu0 0.0
    %3060 = vmatmul.mubr.f32.gmra.mrb[0].mxu0 %v2781
    %v3061 = vpop.f32.mrb[0].mxu0
    %v3062 = vadd.f32 %v2692, %v3061
    %v3063 = vpop.f32.mrb[0].mxu0
    %v3064 = vadd.f32 %v2694, %v3063
    %3065 = vmatprep.mubr.f32.mxu0 0.0
    %3066 = vmatmul.mubr.f32.gmra.mrb[0].mxu0 %v2784
    %v3067 = vpop.f32.mrb[0].mxu0
    %v3068 = vadd.f32 %v2698, %v3067
    %v3069 = vpop.f32.mrb[0].mxu0
    %v3070 = vadd.f32 %v2700, %v3069
    %3071 = vmatprep.mubr.f32.mxu0 0.0
    %3072 = vmatmul.mubr.f32.gmra.mrb[0].mxu0 %v2787
    %v3073 = vpop.f32.mrb[0].mxu0
    %v3074 = vadd.f32 %v2704, %v3073
    %v3075 = vpop.f32.mrb[0].mxu0
    %v3076 = vadd.f32 %v2706, %v3075
    %3077 = vmatprep.mubr.f32.mxu0 0.0
    %3078 = vmatmul.mubr.f32.gmra.mrb[0].mxu0 %v2790
    %v3079 = vpop.f32.mrb[0].mxu0
    %v3080 = vadd.f32 %v2710, %v3079
    %v3081 = vpop.f32.mrb[0].mxu0
    %v3082 = vadd.f32 %v2712, %v3081
    %3083 = vmatprep.mubr.f32.mxu0 0.0
    %3084 = vmatmul.mubr.f32.gmra.mrb[0].mxu0 %v2793
    %v3085 = vpop.f32.mrb[0].mxu0
    %v3086 = vadd.f32 %v2716, %v3085
    %v3087 = vpop.f32.mrb[0].mxu0
    %v3088 = vadd.f32 %v2718, %v3087
    %3089 = vmatprep.mubr.f32.mxu0 0.0
    %3090 = vmatmul.mubr.f32.gmra.mrb[0].mxu0 %v2796
    %v3091 = vpop.f32.mrb[0].mxu0
    %v3092 = vadd.f32 %v2722, %v3091
    %v3093 = vpop.f32.mrb[0].mxu0
    %v3094 = vadd.f32 %v2724, %v3093
    %3095 = vmatprep.mubr.f32.mxu0 0.0
    %3096 = vmatmul.mubr.f32.gmra.mrb[0].mxu0 %v2799
    %v3097 = vpop.f32.mrb[0].mxu0
    %v3098 = vadd.f32 %v2728, %v3097
    %v3099 = vpop.f32.mrb[0].mxu0
    %v3100 = vadd.f32 %v2730, %v3099
    %3101 = vmatprep.mubr.f32.mxu0 0.0
    %3102 = vmatmul.mubr.f32.gmra.mrb[0].mxu0 %v2802
    %v3103 = vpop.f32.mrb[0].mxu0
    %v3104 = vadd.f32 %v2734, %v3103
    %v3105 = vpop.f32.mrb[0].mxu0
    %v3106 = vadd.f32 %v2736, %v3105
    %3107 = vmatprep.mubr.f32.mxu0 0.0
    %3108 = vmatmul.mubr.f32.gmra.mrb[0].mxu0 %v2805
    %v3109 = vpop.f32.mrb[0].mxu0
    %v3110 = vadd.f32 %v2740, %v3109
    %v3111 = vpop.f32.mrb[0].mxu0
    %v3112 = vadd.f32 %v2742, %v3111
    %3113 = vmatprep.mubr.f32.mxu0 0.0
    %3114 = vmatmul.mubr.f32.gmra.mrb[0].mxu0 %v2808
    %v3115 = vpop.f32.mrb[0].mxu0
    %v3116 = vadd.f32 %v2746, %v3115
    %v3117 = vpop.f32.mrb[0].mxu0
    %v3118 = vadd.f32 %v2748, %v3117
    %3119 = vmatprep.mubr.f32.mxu0 0.0
    %3120 = vmatmul.mubr.f32.gmra.mrb[0].mxu0 %v2811
    %v3121 = vpop.f32.mrb[0].mxu0
    %v3122 = vadd.f32 %v2752, %v3121
    %v3123 = vpop.f32.mrb[0].mxu0
    %v3124 = vadd.f32 %v2754, %v3123
    %3125 = vmatprep.mubr.f32.mxu0 0.0
    %3126 = vmatmul.mubr.f32.gmra.mrb[0].mxu0 %v2814
    %v3127 = vpop.f32.mrb[0].mxu0
    %v3128 = vadd.f32 %v2758, %v3127
    %v3129 = vpop.f32.mrb[0].mxu0
    %v3130 = vadd.f32 %v2760, %v3129
    %3131 = vmatprep.mubr.f32.mxu0 0.0
    %3132 = vmatmul.mubr.f32.gmra.mrb[0].mxu0 %v2817
    %v3133 = vpop.f32.mrb[0].mxu0
    %v3134 = vadd.f32 %v2764, %v3133
    %v3135 = vpop.f32.mrb[0].mxu0
    %v3136 = vadd.f32 %v2766, %v3135
    %3137 = vmatprep.mubr.f32.mxu0 0.0
    %3138 = vmatmul.mubr.f32.gmra.mrb[0].mxu0 %v2820
    %v3139 = vpop.f32.mrb[0].mxu0
    %v3140 = vadd.f32 %v2770, %v3139
    %v3141 = vpop.f32.mrb[0].mxu0
    %v3142 = vadd.f32 %v2772, %v3141
    %3143 = vdwg.mxu0
    %v3144 = vadd.f32 %v2889, %v1999
    %v3145 = vadd.f32 %v2891, %v2003
    %v3146 = vadd.f32 %v3050, %v2007
    %v3147 = vadd.f32 %v3052, %v2011
    %v3148 = vadd.f32 %v2895, %v1999
    %v3149 = vadd.f32 %v2897, %v2003
    %v3150 = vadd.f32 %v3056, %v2007
    %v3151 = vadd.f32 %v3058, %v2011
    %v3152 = vadd.f32 %v2901, %v1999
    %v3153 = vadd.f32 %v2903, %v2003
    %v3154 = vadd.f32 %v3062, %v2007
    %v3155 = vadd.f32 %v3064, %v2011
    %v3156 = vadd.f32 %v2907, %v1999
    %v3157 = vadd.f32 %v2909, %v2003
    %v3158 = vadd.f32 %v3068, %v2007
    %v3159 = vadd.f32 %v3070, %v2011
    %v3160 = vadd.f32 %v2913, %v1999
    %v3161 = vadd.f32 %v2915, %v2003
    %v3162 = vadd.f32 %v3074, %v2007
    %v3163 = vadd.f32 %v3076, %v2011
    %v3164 = vadd.f32 %v2919, %v1999
    %v3165 = vadd.f32 %v2921, %v2003
    %v3166 = vadd.f32 %v3080, %v2007
    %v3167 = vadd.f32 %v3082, %v2011
    %v3168 = vadd.f32 %v2925, %v1999
    %v3169 = vadd.f32 %v2927, %v2003
    %v3170 = vadd.f32 %v3086, %v2007
    %v3171 = vadd.f32 %v3088, %v2011
    %v3172 = vadd.f32 %v2931, %v1999
    %v3173 = vadd.f32 %v2933, %v2003
    %v3174 = vadd.f32 %v3092, %v2007
    %v3175 = vadd.f32 %v3094, %v2011
    %v3176 = vadd.f32 %v2937, %v2015
    %v3177 = vadd.f32 %v2939, %v2019
    %v3178 = vadd.f32 %v3098, %v2023
    %v3179 = vadd.f32 %v3100, %v2027
    %v3180 = vadd.f32 %v2943, %v2015
    %v3181 = vadd.f32 %v2945, %v2019
    %v3182 = vadd.f32 %v3104, %v2023
    %v3183 = vadd.f32 %v3106, %v2027
    %v3184 = vadd.f32 %v2949, %v2015
    %v3185 = vadd.f32 %v2951, %v2019
    %v3186 = vadd.f32 %v3110, %v2023
    %v3187 = vadd.f32 %v3112, %v2027
    %v3188 = vadd.f32 %v2955, %v2015
    %v3189 = vadd.f32 %v2957, %v2019
    %v3190 = vadd.f32 %v3116, %v2023
    %v3191 = vadd.f32 %v3118, %v2027
    %v3192 = vadd.f32 %v2961, %v2015
    %v3193 = vadd.f32 %v2963, %v2019
    %v3194 = vadd.f32 %v3122, %v2023
    %v3195 = vadd.f32 %v3124, %v2027
    %v3196 = vadd.f32 %v2967, %v2015
    %v3197 = vadd.f32 %v2969, %v2019
    %v3198 = vadd.f32 %v3128, %v2023
    %v3199 = vadd.f32 %v3130, %v2027
    %v3200 = vadd.f32 %v2973, %v2015
    %v3201 = vadd.f32 %v2975, %v2019
    %v3202 = vadd.f32 %v3134, %v2023
    %v3203 = vadd.f32 %v3136, %v2027
    %v3204 = vadd.f32 %v2979, %v2015
    %v3205 = vadd.f32 %v2981, %v2019
    %v3206 = vadd.f32 %v3140, %v2023
    %v3207 = vadd.f32 %v3142, %v2027
    %v3208 = vtanh.pop %v3144
    %v3209 = vtanh.pop %v3145
    %v3210 = vtanh.pop %v3146
    %v3211 = vtanh.pop %v3147
    %v3212 = vtanh.pop %v3148
    %v3213 = vtanh.pop %v3149
    %v3214 = vtanh.pop %v3150
    %v3215 = vtanh.pop %v3151
    %v3216 = vtanh.pop %v3152
    %v3217 = vtanh.pop %v3153
    %v3218 = vtanh.pop %v3154
    %v3219 = vtanh.pop %v3155
    %v3220 = vtanh.pop %v3156
    %v3221 = vtanh.pop %v3157
    %v3222 = vtanh.pop %v3158
    %v3223 = vtanh.pop %v3159
    %v3224 = vtanh.pop %v3160
    %v3225 = vtanh.pop %v3161
    %v3226 = vtanh.pop %v3162
    %v3227 = vtanh.pop %v3163
    %v3228 = vtanh.pop %v3164
    %v3229 = vtanh.pop %v3165
    %v3230 = vtanh.pop %v3166
    %v3231 = vtanh.pop %v3167
    %v3232 = vtanh.pop %v3168
    %v3233 = vtanh.pop %v3169
    %v3234 = vtanh.pop %v3170
    %v3235 = vtanh.pop %v3171
    %v3236 = vtanh.pop %v3172
    %v3237 = vtanh.pop %v3173
    %v3238 = vtanh.pop %v3174
    %v3239 = vtanh.pop %v3175
    %v3240 = vtanh.pop %v3176
    %v3241 = vtanh.pop %v3177
    %v3242 = vtanh.pop %v3178
    %v3243 = vtanh.pop %v3179
    %v3244 = vtanh.pop %v3180
    %v3245 = vtanh.pop %v3181
    %v3246 = vtanh.pop %v3182
    %v3247 = vtanh.pop %v3183
    %v3248 = vtanh.pop %v3184
    %v3249 = vtanh.pop %v3185
    %v3250 = vtanh.pop %v3186
    %v3251 = vtanh.pop %v3187
    %v3252 = vtanh.pop %v3188
    %v3253 = vtanh.pop %v3189
    %v3254 = vtanh.pop %v3190
    %v3255 = vtanh.pop %v3191
    %v3256 = vtanh.pop %v3192
    %v3257 = vtanh.pop %v3193
    %v3258 = vtanh.pop %v3194
    %v3259 = vtanh.pop %v3195
    %v3260 = vtanh.pop %v3196
    %v3261 = vtanh.pop %v3197
    %v3262 = vtanh.pop %v3198
    %v3263 = vtanh.pop %v3199
    %v3264 = vtanh.pop %v3200
    %v3265 = vtanh.pop %v3201
    %v3266 = vtanh.pop %v3202
    %v3267 = vtanh.pop %v3203
    %v3268 = vtanh.pop %v3204
    %v3269 = vtanh.pop %v3205
    %v3270 = vtanh.pop %v3206
    %v3271 = vtanh.pop %v3207
    %v3272 = vld [vmem:[%s43] sm:$0xf]
    %v3274 = vlaneseq
    %v3275 = vshrl.u32 %v3274, 7
    %v3276 = vsub.s32 0, %v3275
    %v3277 = vrot.slane %v3272, %v3276
    %v3278 = vlaneseq
    %v3279 = vshrl.u32 %v3278, 7
    %v3280 = vsub.s32 1, %v3279
    %v3281 = vrot.slane %v3272, %v3280
    %v3282 = vlaneseq
    %v3283 = vshrl.u32 %v3282, 7
    %v3284 = vsub.s32 2, %v3283
    %v3285 = vrot.slane %v3272, %v3284
    %v3286 = vlaneseq
    %v3287 = vshrl.u32 %v3286, 7
    %v3288 = vsub.s32 3, %v3287
    %v3289 = vrot.slane %v3272, %v3288
    %v3294 = vmul.f32 %v3208, %v3277
    %v3295 = vmul.f32 %v3209, %v3281
    %v3296 = vmul.f32 %v3210, %v3285
    %v3297 = vmul.f32 %v3211, %v3289
    %v3298 = vmul.f32 %v3212, %v3277
    %v3299 = vmul.f32 %v3213, %v3281
    %v3300 = vmul.f32 %v3214, %v3285
    %v3301 = vmul.f32 %v3215, %v3289
    %v3302 = vmul.f32 %v3216, %v3277
    %v3303 = vmul.f32 %v3217, %v3281
    %v3304 = vmul.f32 %v3218, %v3285
    %v3305 = vmul.f32 %v3219, %v3289
    %v3306 = vmul.f32 %v3220, %v3277
    %v3307 = vmul.f32 %v3221, %v3281
    %v3308 = vmul.f32 %v3222, %v3285
    %v3309 = vmul.f32 %v3223, %v3289
    %v3310 = vmul.f32 %v3224, %v3277
    %v3311 = vmul.f32 %v3225, %v3281
    %v3312 = vmul.f32 %v3226, %v3285
    %v3313 = vmul.f32 %v3227, %v3289
    %v3314 = vmul.f32 %v3228, %v3277
    %v3315 = vmul.f32 %v3229, %v3281
    %v3316 = vmul.f32 %v3230, %v3285
    %v3317 = vmul.f32 %v3231, %v3289
    %v3318 = vmul.f32 %v3232, %v3277
    %v3319 = vmul.f32 %v3233, %v3281
    %v3320 = vmul.f32 %v3234, %v3285
    %v3321 = vmul.f32 %v3235, %v3289
    %v3322 = vmul.f32 %v3236, %v3277
    %v3323 = vmul.f32 %v3237, %v3281
    %v3324 = vmul.f32 %v3238, %v3285
    %v3325 = vmul.f32 %v3239, %v3289
    %v3326 = vmul.f32 %v3240, %v3277
    %v3327 = vmul.f32 %v3241, %v3281
    %v3328 = vmul.f32 %v3242, %v3285
    %v3329 = vmul.f32 %v3243, %v3289
    %v3330 = vmul.f32 %v3244, %v3277
    %v3331 = vmul.f32 %v3245, %v3281
    %v3332 = vmul.f32 %v3246, %v3285
    %v3333 = vmul.f32 %v3247, %v3289
    %v3334 = vmul.f32 %v3248, %v3277
    %v3335 = vmul.f32 %v3249, %v3281
    %v3336 = vmul.f32 %v3250, %v3285
    %v3337 = vmul.f32 %v3251, %v3289
    %v3338 = vmul.f32 %v3252, %v3277
    %v3339 = vmul.f32 %v3253, %v3281
    %v3340 = vmul.f32 %v3254, %v3285
    %v3341 = vmul.f32 %v3255, %v3289
    %v3342 = vmul.f32 %v3256, %v3277
    %v3343 = vmul.f32 %v3257, %v3281
    %v3344 = vmul.f32 %v3258, %v3285
    %v3345 = vmul.f32 %v3259, %v3289
    %v3346 = vmul.f32 %v3260, %v3277
    %v3347 = vmul.f32 %v3261, %v3281
    %v3348 = vmul.f32 %v3262, %v3285
    %v3349 = vmul.f32 %v3263, %v3289
    %v3350 = vmul.f32 %v3264, %v3277
    %v3351 = vmul.f32 %v3265, %v3281
    %v3352 = vmul.f32 %v3266, %v3285
    %v3353 = vmul.f32 %v3267, %v3289
    %v3354 = vmul.f32 %v3268, %v3277
    %v3355 = vmul.f32 %v3269, %v3281
    %v3356 = vmul.f32 %v3270, %v3285
    %v3357 = vmul.f32 %v3271, %v3289
    %v3358 = vadd.f32 %v3294, %v3295
    %v3359 = vadd.f32 %v3358, %v3296
    %v3360 = vadd.f32 %v3359, %v3297
    %3361 = vadd.xlane.f32.xlu0 %v3360
    %v3362 = vpop.xlane.xlu0 %3361
    %v3363 = vadd.f32 %v3298, %v3299
    %v3364 = vadd.f32 %v3363, %v3300
    %v3365 = vadd.f32 %v3364, %v3301
    %3366 = vadd.xlane.f32.xlu0 %v3365
    %v3367 = vpop.xlane.xlu0 %3366
    %v3368 = vadd.f32 %v3302, %v3303
    %v3369 = vadd.f32 %v3368, %v3304
    %v3370 = vadd.f32 %v3369, %v3305
    %3371 = vadd.xlane.f32.xlu0 %v3370
    %v3372 = vpop.xlane.xlu0 %3371
    %v3373 = vadd.f32 %v3306, %v3307
    %v3374 = vadd.f32 %v3373, %v3308
    %v3375 = vadd.f32 %v3374, %v3309
    %3376 = vadd.xlane.f32.xlu0 %v3375
    %v3377 = vpop.xlane.xlu0 %3376
    %v3378 = vadd.f32 %v3310, %v3311
    %v3379 = vadd.f32 %v3378, %v3312
    %v3380 = vadd.f32 %v3379, %v3313
    %3381 = vadd.xlane.f32.xlu0 %v3380
    %v3382 = vpop.xlane.xlu0 %3381
    %v3383 = vadd.f32 %v3314, %v3315
    %v3384 = vadd.f32 %v3383, %v3316
    %v3385 = vadd.f32 %v3384, %v3317
    %3386 = vadd.xlane.f32.xlu0 %v3385
    %v3387 = vpop.xlane.xlu0 %3386
    %v3388 = vadd.f32 %v3318, %v3319
    %v3389 = vadd.f32 %v3388, %v3320
    %v3390 = vadd.f32 %v3389, %v3321
    %3391 = vadd.xlane.f32.xlu0 %v3390
    %v3392 = vpop.xlane.xlu0 %3391
    %v3393 = vadd.f32 %v3322, %v3323
    %v3394 = vadd.f32 %v3393, %v3324
    %v3395 = vadd.f32 %v3394, %v3325
    %3396 = vadd.xlane.f32.xlu0 %v3395
    %v3397 = vpop.xlane.xlu0 %3396
    %v3398 = vadd.f32 %v3326, %v3327
    %v3399 = vadd.f32 %v3398, %v3328
    %v3400 = vadd.f32 %v3399, %v3329
    %3401 = vadd.xlane.f32.xlu0 %v3400
    %v3402 = vpop.xlane.xlu0 %3401
    %v3403 = vadd.f32 %v3330, %v3331
    %v3404 = vadd.f32 %v3403, %v3332
    %v3405 = vadd.f32 %v3404, %v3333
    %3406 = vadd.xlane.f32.xlu0 %v3405
    %v3407 = vpop.xlane.xlu0 %3406
    %v3408 = vadd.f32 %v3334, %v3335
    %v3409 = vadd.f32 %v3408, %v3336
    %v3410 = vadd.f32 %v3409, %v3337
    %3411 = vadd.xlane.f32.xlu0 %v3410
    %v3412 = vpop.xlane.xlu0 %3411
    %v3413 = vadd.f32 %v3338, %v3339
    %v3414 = vadd.f32 %v3413, %v3340
    %v3415 = vadd.f32 %v3414, %v3341
    %3416 = vadd.xlane.f32.xlu0 %v3415
    %v3417 = vpop.xlane.xlu0 %3416
    %v3418 = vadd.f32 %v3342, %v3343
    %v3419 = vadd.f32 %v3418, %v3344
    %v3420 = vadd.f32 %v3419, %v3345
    %3421 = vadd.xlane.f32.xlu0 %v3420
    %v3422 = vpop.xlane.xlu0 %3421
    %v3423 = vadd.f32 %v3346, %v3347
    %v3424 = vadd.f32 %v3423, %v3348
    %v3425 = vadd.f32 %v3424, %v3349
    %3426 = vadd.xlane.f32.xlu0 %v3425
    %v3427 = vpop.xlane.xlu0 %3426
    %v3428 = vadd.f32 %v3350, %v3351
    %v3429 = vadd.f32 %v3428, %v3352
    %v3430 = vadd.f32 %v3429, %v3353
    %3431 = vadd.xlane.f32.xlu0 %v3430
    %v3432 = vpop.xlane.xlu0 %3431
    %v3433 = vadd.f32 %v3354, %v3355
    %v3434 = vadd.f32 %v3433, %v3356
    %v3435 = vadd.f32 %v3434, %v3357
    %3436 = vadd.xlane.f32.xlu0 %v3435
    %v3437 = vpop.xlane.xlu0 %3436
    %v3454 = vlaneseq
    %v3455 = vshrl.u32 %v3454, 7
    %v3456 = vsub.s32 %v154, %v3455
    %v3457 = vrot.slane %v3362, %v3456
    %v3458 = vlaneseq
    %v3459 = vshrl.u32 %v3458, 7
    %v3460 = vsub.s32 %v2134, %v3459
    %v3461 = vrot.slane %v3367, %v3460
    %v3462 = vsel %vm2139, %v3461, %v3457
    %v3463 = vadd.s32 %v154, 4294967280
    %v3464 = vlaneseq
    %v3465 = vshrl.u32 %v3464, 7
    %v3466 = vsub.s32 %v3463, %v3465
    %v3467 = vrot.slane %v3372, %v3466
    %vm3468 = vcmask 195712
    %v3469 = vsel %vm3468, %v3467, %v3462
    %v3470 = vadd.s32 %v154, 4294967272
    %v3471 = vlaneseq
    %v3472 = vshrl.u32 %v3471, 7
    %v3473 = vsub.s32 %v3470, %v3472
    %v3474 = vrot.slane %v3377, %v3473
    %vm3475 = vcmask 261312
    %v3476 = vsel %vm3475, %v3474, %v3469
    %v3477 = vadd.s32 %v154, 4294967264
    %v3478 = vlaneseq
    %v3479 = vshrl.u32 %v3478, 7
    %v3480 = vsub.s32 %v3477, %v3479
    %v3481 = vrot.slane %v3382, %v3480
    %vm3482 = vcmask 326912
    %v3483 = vsel %vm3482, %v3481, %v3476
    %v3484 = vadd.s32 %v154, 4294967256
    %v3485 = vlaneseq
    %v3486 = vshrl.u32 %v3485, 7
    %v3487 = vsub.s32 %v3484, %v3486
    %v3488 = vrot.slane %v3387, %v3487
    %vm3489 = vcmask 392512
    %v3490 = vsel %vm3489, %v3488, %v3483
    %v3491 = vadd.s32 %v154, 4294967248
    %v3492 = vlaneseq
    %v3493 = vshrl.u32 %v3492, 7
    %v3494 = vsub.s32 %v3491, %v3493
    %v3495 = vrot.slane %v3392, %v3494
    %vm3496 = vcmask 458112
    %v3497 = vsel %vm3496, %v3495, %v3490
    %v3498 = vadd.s32 %v154, 4294967240
    %v3499 = vlaneseq
    %v3500 = vshrl.u32 %v3499, 7
    %v3501 = vsub.s32 %v3498, %v3500
    %v3502 = vrot.slane %v3397, %v3501
    %vm3503 = vcmask 523712
    %v3504 = vsel %vm3503, %v3502, %v3497
    %v3505 = vlaneseq
    %v3506 = vshrl.u32 %v3505, 7
    %v3507 = vsub.s32 %v154, %v3506
    %v3508 = vrot.slane %v3402, %v3507
    %v3509 = vlaneseq
    %v3510 = vshrl.u32 %v3509, 7
    %v3511 = vsub.s32 %v2134, %v3510
    %v3512 = vrot.slane %v3407, %v3511
    %v3513 = vsel %vm2139, %v3512, %v3508
    %v3514 = vlaneseq
    %v3515 = vshrl.u32 %v3514, 7
    %v3516 = vsub.s32 %v3463, %v3515
    %v3517 = vrot.slane %v3412, %v3516
    %v3518 = vsel %vm3468, %v3517, %v3513
    %v3519 = vlaneseq
    %v3520 = vshrl.u32 %v3519, 7
    %v3521 = vsub.s32 %v3470, %v3520
    %v3522 = vrot.slane %v3417, %v3521
    %v3523 = vsel %vm3475, %v3522, %v3518
    %v3524 = vlaneseq
    %v3525 = vshrl.u32 %v3524, 7
    %v3526 = vsub.s32 %v3477, %v3525
    %v3527 = vrot.slane %v3422, %v3526
    %v3528 = vsel %vm3482, %v3527, %v3523
    %v3529 = vlaneseq
    %v3530 = vshrl.u32 %v3529, 7
    %v3531 = vsub.s32 %v3484, %v3530
    %v3532 = vrot.slane %v3427, %v3531
    %v3533 = vsel %vm3489, %v3532, %v3528
    %v3534 = vlaneseq
    %v3535 = vshrl.u32 %v3534, 7
    %v3536 = vsub.s32 %v3491, %v3535
    %v3537 = vrot.slane %v3432, %v3536
    %v3538 = vsel %vm3496, %v3537, %v3533
    %v3539 = vlaneseq
    %v3540 = vshrl.u32 %v3539, 7
    %v3541 = vsub.s32 %v3498, %v3540
    %v3542 = vrot.slane %v3437, %v3541
    %v3543 = vsel %vm3503, %v3542, %v3538
    %v3544 = vsel %vm2150, %v3543, %v3504
    %vm3546 = vcmask 517120
    %v3547 = vsel %vm3546, %v3544, -inf
    %3548 = vmax.xlane.f32.xlu0 %v3547
    %v3549 = vpop.xlane.xlu0 %3548
    %v3551 = vlaneseq
    %v3552 = vshrl.u32 %v3551, 7
    %v3553 = vsub.s32 0, %v3552
    %v3554 = vrot.slane %v3549, %v3553
    %v3555 = vlaneseq
    %v3556 = vshrl.u32 %v3555, 7
    %v3557 = vsub.s32 1, %v3556
    %v3558 = vrot.slane %v3549, %v3557
    %v3561 = vsub.f32 %v3362, %v3554
    %v3562 = vsub.f32 %v3367, %v3554
    %v3563 = vsub.f32 %v3372, %v3554
    %v3564 = vsub.f32 %v3377, %v3554
    %v3565 = vsub.f32 %v3382, %v3554
    %v3566 = vsub.f32 %v3387, %v3554
    %v3567 = vsub.f32 %v3392, %v3554
    %v3568 = vsub.f32 %v3397, %v3554
    %v3569 = vsub.f32 %v3402, %v3558
    %v3570 = vsub.f32 %v3407, %v3558
    %v3571 = vsub.f32 %v3412, %v3558
    %v3572 = vsub.f32 %v3417, %v3558
    %v3573 = vsub.f32 %v3422, %v3558
    %v3574 = vsub.f32 %v3427, %v3558
    %v3575 = vsub.f32 %v3432, %v3558
    %v3576 = vsub.f32 %v3437, %v3558
    %v3577 = vmul.f32 %v3561, 1.442695
    %v3578 = vpow.pop %v3577
    %v3579 = vmul.f32 %v3562, 1.442695
    %v3580 = vpow.pop %v3579
    %v3581 = vmul.f32 %v3563, 1.442695
    %v3582 = vpow.pop %v3581
    %v3583 = vmul.f32 %v3564, 1.442695
    %v3584 = vpow.pop %v3583
    %v3585 = vmul.f32 %v3565, 1.442695
    %v3586 = vpow.pop %v3585
    %v3587 = vmul.f32 %v3566, 1.442695
    %v3588 = vpow.pop %v3587
    %v3589 = vmul.f32 %v3567, 1.442695
    %v3590 = vpow.pop %v3589
    %v3591 = vmul.f32 %v3568, 1.442695
    %v3592 = vpow.pop %v3591
    %v3593 = vmul.f32 %v3569, 1.442695
    %v3594 = vpow.pop %v3593
    %v3595 = vmul.f32 %v3570, 1.442695
    %v3596 = vpow.pop %v3595
    %v3597 = vmul.f32 %v3571, 1.442695
    %v3598 = vpow.pop %v3597
    %v3599 = vmul.f32 %v3572, 1.442695
    %v3600 = vpow.pop %v3599
    %v3601 = vmul.f32 %v3573, 1.442695
    %v3602 = vpow.pop %v3601
    %v3603 = vmul.f32 %v3574, 1.442695
    %v3604 = vpow.pop %v3603
    %v3605 = vmul.f32 %v3575, 1.442695
    %v3606 = vpow.pop %v3605
    %v3607 = vmul.f32 %v3576, 1.442695
    %v3608 = vpow.pop %v3607
    %3625 = vset.pattern.permute.xlu0 0
    %3626 = vperm.xlu0 %3625, %v3578
    %v3627 = vpop.permute.xlu0 %3626
    %3628 = vset.pattern.permute.xlu0 0
    %3629 = vperm.xlu0 %3628, %v3580
    %v3630 = vpop.permute.xlu0 %3629
    %3631 = vset.pattern.permute.xlu0 0
    %3632 = vperm.xlu0 %3631, %v3582
    %v3633 = vpop.permute.xlu0 %3632
    %3634 = vset.pattern.permute.xlu0 0
    %3635 = vperm.xlu0 %3634, %v3584
    %v3636 = vpop.permute.xlu0 %3635
    %3637 = vset.pattern.permute.xlu0 0
    %3638 = vperm.xlu0 %3637, %v3586
    %v3639 = vpop.permute.xlu0 %3638
    %3640 = vset.pattern.permute.xlu0 0
    %3641 = vperm.xlu0 %3640, %v3588
    %v3642 = vpop.permute.xlu0 %3641
    %3643 = vset.pattern.permute.xlu0 0
    %3644 = vperm.xlu0 %3643, %v3590
    %v3645 = vpop.permute.xlu0 %3644
    %3646 = vset.pattern.permute.xlu0 0
    %3647 = vperm.xlu0 %3646, %v3592
    %v3648 = vpop.permute.xlu0 %3647
    %3649 = vset.pattern.permute.xlu0 0
    %3650 = vperm.xlu0 %3649, %v3594
    %v3651 = vpop.permute.xlu0 %3650
    %3652 = vset.pattern.permute.xlu0 0
    %3653 = vperm.xlu0 %3652, %v3596
    %v3654 = vpop.permute.xlu0 %3653
    %3655 = vset.pattern.permute.xlu0 0
    %3656 = vperm.xlu0 %3655, %v3598
    %v3657 = vpop.permute.xlu0 %3656
    %3658 = vset.pattern.permute.xlu0 0
    %3659 = vperm.xlu0 %3658, %v3600
    %v3660 = vpop.permute.xlu0 %3659
    %3661 = vset.pattern.permute.xlu0 0
    %3662 = vperm.xlu0 %3661, %v3602
    %v3663 = vpop.permute.xlu0 %3662
    %3664 = vset.pattern.permute.xlu0 0
    %3665 = vperm.xlu0 %3664, %v3604
    %v3666 = vpop.permute.xlu0 %3665
    %3667 = vset.pattern.permute.xlu0 0
    %3668 = vperm.xlu0 %3667, %v3606
    %v3669 = vpop.permute.xlu0 %3668
    %3670 = vset.pattern.permute.xlu0 0
    %3671 = vperm.xlu0 %3670, %v3608
    %v3672 = vpop.permute.xlu0 %3671
    %v3673 = vlaneseq
    %v3674 = vshrl.u32 %v3673, 7
    %v3675 = vsub.s32 %v154, %v3674
    %v3676 = vrot.slane %v3627, %v3675
    %v3677 = vlaneseq
    %v3678 = vshrl.u32 %v3677, 7
    %v3679 = vsub.s32 %v2134, %v3678
    %v3680 = vrot.slane %v3630, %v3679
    %v3681 = vsel %vm2139, %v3680, %v3676
    %v3682 = vlaneseq
    %v3683 = vshrl.u32 %v3682, 7
    %v3684 = vsub.s32 %v3463, %v3683
    %v3685 = vrot.slane %v3633, %v3684
    %v3686 = vsel %vm3468, %v3685, %v3681
    %v3687 = vlaneseq
    %v3688 = vshrl.u32 %v3687, 7
    %v3689 = vsub.s32 %v3470, %v3688
    %v3690 = vrot.slane %v3636, %v3689
    %v3691 = vsel %vm3475, %v3690, %v3686
    %v3692 = vlaneseq
    %v3693 = vshrl.u32 %v3692, 7
    %v3694 = vsub.s32 %v3477, %v3693
    %v3695 = vrot.slane %v3639, %v3694
    %v3696 = vsel %vm3482, %v3695, %v3691
    %v3697 = vlaneseq
    %v3698 = vshrl.u32 %v3697, 7
    %v3699 = vsub.s32 %v3484, %v3698
    %v3700 = vrot.slane %v3642, %v3699
    %v3701 = vsel %vm3489, %v3700, %v3696
    %v3702 = vlaneseq
    %v3703 = vshrl.u32 %v3702, 7
    %v3704 = vsub.s32 %v3491, %v3703
    %v3705 = vrot.slane %v3645, %v3704
    %v3706 = vsel %vm3496, %v3705, %v3701
    %v3707 = vlaneseq
    %v3708 = vshrl.u32 %v3707, 7
    %v3709 = vsub.s32 %v3498, %v3708
    %v3710 = vrot.slane %v3648, %v3709
    %v3711 = vsel %vm3503, %v3710, %v3706
    %v3712 = vlaneseq
    %v3713 = vshrl.u32 %v3712, 7
    %v3714 = vsub.s32 %v154, %v3713
    %v3715 = vrot.slane %v3651, %v3714
    %v3716 = vlaneseq
    %v3717 = vshrl.u32 %v3716, 7
    %v3718 = vsub.s32 %v2134, %v3717
    %v3719 = vrot.slane %v3654, %v3718
    %v3720 = vsel %vm2139, %v3719, %v3715
    %v3721 = vlaneseq
    %v3722 = vshrl.u32 %v3721, 7
    %v3723 = vsub.s32 %v3463, %v3722
    %v3724 = vrot.slane %v3657, %v3723
    %v3725 = vsel %vm3468, %v3724, %v3720
    %v3726 = vlaneseq
    %v3727 = vshrl.u32 %v3726, 7
    %v3728 = vsub.s32 %v3470, %v3727
    %v3729 = vrot.slane %v3660, %v3728
    %v3730 = vsel %vm3475, %v3729, %v3725
    %v3731 = vlaneseq
    %v3732 = vshrl.u32 %v3731, 7
    %v3733 = vsub.s32 %v3477, %v3732
    %v3734 = vrot.slane %v3663, %v3733
    %v3735 = vsel %vm3482, %v3734, %v3730
    %v3736 = vlaneseq
    %v3737 = vshrl.u32 %v3736, 7
    %v3738 = vsub.s32 %v3484, %v3737
    %v3739 = vrot.slane %v3666, %v3738
    %v3740 = vsel %vm3489, %v3739, %v3735
    %v3741 = vlaneseq
    %v3742 = vshrl.u32 %v3741, 7
    %v3743 = vsub.s32 %v3491, %v3742
    %v3744 = vrot.slane %v3669, %v3743
    %v3745 = vsel %vm3496, %v3744, %v3740
    %v3746 = vlaneseq
    %v3747 = vshrl.u32 %v3746, 7
    %v3748 = vsub.s32 %v3498, %v3747
    %v3749 = vrot.slane %v3672, %v3748
    %v3750 = vsel %vm3503, %v3749, %v3745
    %v3751 = vsel %vm2150, %v3750, %v3711
    %v3753 = vsel %vm3546, %v3751, 0.0
    %3754 = vadd.xlane.f32.xlu0 %v3753
    %v3755 = vpop.xlane.xlu0 %3754
    %v3757 = vlaneseq
    %v3758 = vshrl.u32 %v3757, 7
    %v3759 = vsub.s32 0, %v3758
    %v3760 = vrot.slane %v3755, %v3759
    %v3761 = vlaneseq
    %v3762 = vshrl.u32 %v3761, 7
    %v3763 = vsub.s32 1, %v3762
    %v3764 = vrot.slane %v3755, %v3763
    %v3767 = vrcp.pop %v3760
    %v3768 = vmul.f32 %v3578, %v3767
    %v3769 = vmul.f32 %v3580, %v3767
    %v3770 = vmul.f32 %v3582, %v3767
    %v3771 = vmul.f32 %v3584, %v3767
    %v3772 = vmul.f32 %v3586, %v3767
    %v3773 = vmul.f32 %v3588, %v3767
    %v3774 = vmul.f32 %v3590, %v3767
    %v3775 = vmul.f32 %v3592, %v3767
    %v3776 = vrcp.pop %v3764
    %v3777 = vmul.f32 %v3594, %v3776
    %v3778 = vmul.f32 %v3596, %v3776
    %v3779 = vmul.f32 %v3598, %v3776
    %v3780 = vmul.f32 %v3600, %v3776
    %v3781 = vmul.f32 %v3602, %v3776
    %v3782 = vmul.f32 %v3604, %v3776
    %v3783 = vmul.f32 %v3606, %v3776
    %v3784 = vmul.f32 %v3608, %v3776
    %v3785 = vld [vmem:[%s31] sm:$0xff]
    %v3786 = vld [vmem:[%s31 + $0x8] sm:$0xff]
    %v3787 = vld [vmem:[%s31 + $0x10] sm:$0xff]
    %v3788 = vld [vmem:[%s31 + $0x18] sm:$0xff]
    %3805 = vset.pattern.permute.xlu0 0
    %3806 = vperm.xlu0 %3805, %v3768
    %v3807 = vpop.permute.xlu0 %3806
    %3808 = vset.pattern.permute.xlu0 0
    %3809 = vperm.xlu0 %3808, %v3769
    %v3810 = vpop.permute.xlu0 %3809
    %3811 = vset.pattern.permute.xlu0 0
    %3812 = vperm.xlu0 %3811, %v3770
    %v3813 = vpop.permute.xlu0 %3812
    %3814 = vset.pattern.permute.xlu0 0
    %3815 = vperm.xlu0 %3814, %v3771
    %v3816 = vpop.permute.xlu0 %3815
    %3817 = vset.pattern.permute.xlu0 0
    %3818 = vperm.xlu0 %3817, %v3772
    %v3819 = vpop.permute.xlu0 %3818
    %3820 = vset.pattern.permute.xlu0 0
    %3821 = vperm.xlu0 %3820, %v3773
    %v3822 = vpop.permute.xlu0 %3821
    %3823 = vset.pattern.permute.xlu0 0
    %3824 = vperm.xlu0 %3823, %v3774
    %v3825 = vpop.permute.xlu0 %3824
    %3826 = vset.pattern.permute.xlu0 0
    %3827 = vperm.xlu0 %3826, %v3775
    %v3828 = vpop.permute.xlu0 %3827
    %3829 = vset.pattern.permute.xlu0 0
    %3830 = vperm.xlu0 %3829, %v3777
    %v3831 = vpop.permute.xlu0 %3830
    %3832 = vset.pattern.permute.xlu0 0
    %3833 = vperm.xlu0 %3832, %v3778
    %v3834 = vpop.permute.xlu0 %3833
    %3835 = vset.pattern.permute.xlu0 0
    %3836 = vperm.xlu0 %3835, %v3779
    %v3837 = vpop.permute.xlu0 %3836
    %3838 = vset.pattern.permute.xlu0 0
    %3839 = vperm.xlu0 %3838, %v3780
    %v3840 = vpop.permute.xlu0 %3839
    %3841 = vset.pattern.permute.xlu0 0
    %3842 = vperm.xlu0 %3841, %v3781
    %v3843 = vpop.permute.xlu0 %3842
    %3844 = vset.pattern.permute.xlu0 0
    %3845 = vperm.xlu0 %3844, %v3782
    %v3846 = vpop.permute.xlu0 %3845
    %3847 = vset.pattern.permute.xlu0 0
    %3848 = vperm.xlu0 %3847, %v3783
    %v3849 = vpop.permute.xlu0 %3848
    %3850 = vset.pattern.permute.xlu0 0
    %3851 = vperm.xlu0 %3850, %v3784
    %v3852 = vpop.permute.xlu0 %3851
    %v3853 = vlaneseq
    %v3854 = vshrl.u32 %v3853, 7
    %v3855 = vsub.s32 %v154, %v3854
    %v3856 = vrot.slane %v3807, %v3855
    %v3857 = vlaneseq
    %v3858 = vshrl.u32 %v3857, 7
    %v3859 = vsub.s32 %v2134, %v3858
    %v3860 = vrot.slane %v3810, %v3859
    %v3861 = vsel %vm2139, %v3860, %v3856
    %v3862 = vlaneseq
    %v3863 = vshrl.u32 %v3862, 7
    %v3864 = vsub.s32 %v3463, %v3863
    %v3865 = vrot.slane %v3813, %v3864
    %v3866 = vsel %vm3468, %v3865, %v3861
    %v3867 = vlaneseq
    %v3868 = vshrl.u32 %v3867, 7
    %v3869 = vsub.s32 %v3470, %v3868
    %v3870 = vrot.slane %v3816, %v3869
    %v3871 = vsel %vm3475, %v3870, %v3866
    %v3872 = vlaneseq
    %v3873 = vshrl.u32 %v3872, 7
    %v3874 = vsub.s32 %v3477, %v3873
    %v3875 = vrot.slane %v3819, %v3874
    %v3876 = vsel %vm3482, %v3875, %v3871
    %v3877 = vlaneseq
    %v3878 = vshrl.u32 %v3877, 7
    %v3879 = vsub.s32 %v3484, %v3878
    %v3880 = vrot.slane %v3822, %v3879
    %v3881 = vsel %vm3489, %v3880, %v3876
    %v3882 = vlaneseq
    %v3883 = vshrl.u32 %v3882, 7
    %v3884 = vsub.s32 %v3491, %v3883
    %v3885 = vrot.slane %v3825, %v3884
    %v3886 = vsel %vm3496, %v3885, %v3881
    %v3887 = vlaneseq
    %v3888 = vshrl.u32 %v3887, 7
    %v3889 = vsub.s32 %v3498, %v3888
    %v3890 = vrot.slane %v3828, %v3889
    %v3891 = vsel %vm3503, %v3890, %v3886
    %v3892 = vlaneseq
    %v3893 = vshrl.u32 %v3892, 7
    %v3894 = vsub.s32 %v154, %v3893
    %v3895 = vrot.slane %v3831, %v3894
    %v3896 = vlaneseq
    %v3897 = vshrl.u32 %v3896, 7
    %v3898 = vsub.s32 %v2134, %v3897
    %v3899 = vrot.slane %v3834, %v3898
    %v3900 = vsel %vm2139, %v3899, %v3895
    %v3901 = vlaneseq
    %v3902 = vshrl.u32 %v3901, 7
    %v3903 = vsub.s32 %v3463, %v3902
    %v3904 = vrot.slane %v3837, %v3903
    %v3905 = vsel %vm3468, %v3904, %v3900
    %v3906 = vlaneseq
    %v3907 = vshrl.u32 %v3906, 7
    %v3908 = vsub.s32 %v3470, %v3907
    %v3909 = vrot.slane %v3840, %v3908
    %v3910 = vsel %vm3475, %v3909, %v3905
    %v3911 = vlaneseq
    %v3912 = vshrl.u32 %v3911, 7
    %v3913 = vsub.s32 %v3477, %v3912
    %v3914 = vrot.slane %v3843, %v3913
    %v3915 = vsel %vm3482, %v3914, %v3910
    %v3916 = vlaneseq
    %v3917 = vshrl.u32 %v3916, 7
    %v3918 = vsub.s32 %v3484, %v3917
    %v3919 = vrot.slane %v3846, %v3918
    %v3920 = vsel %vm3489, %v3919, %v3915
    %v3921 = vlaneseq
    %v3922 = vshrl.u32 %v3921, 7
    %v3923 = vsub.s32 %v3491, %v3922
    %v3924 = vrot.slane %v3849, %v3923
    %v3925 = vsel %vm3496, %v3924, %v3920
    %v3926 = vlaneseq
    %v3927 = vshrl.u32 %v3926, 7
    %v3928 = vsub.s32 %v3498, %v3927
    %v3929 = vrot.slane %v3852, %v3928
    %v3930 = vsel %vm3503, %v3929, %v3925
    %v3931 = vsel %vm2272, %v3891, %v3891
    %v3932 = vsel %vm2274, %v3891, %v3931
    %v3933 = vsel %vm2276, %v3891, %v3932
    %v3934 = vsel %vm2278, %v3891, %v3933
    %v3935 = vsel %vm2280, %v3891, %v3934
    %v3936 = vsel %vm2282, %v3891, %v3935
    %v3937 = vsel %vm2272, %v3930, %v3930
    %v3938 = vsel %vm2274, %v3930, %v3937
    %v3939 = vsel %vm2276, %v3930, %v3938
    %v3940 = vsel %vm2278, %v3930, %v3939
    %v3941 = vsel %vm2280, %v3930, %v3940
    %v3942 = vsel %vm2282, %v3930, %v3941
    %v3945 = vmul.f32 %v3785, %v3936
    %v3946 = vmul.f32 %v3786, %v3936
    %v3947 = vmul.f32 %v3787, %v3942
    %v3948 = vmul.f32 %v3788, %v3942
    %vm3949 = vcmask 523264
    %v3950 = vsel %vm3949, %v3945, 0.0
    %3951 = vadd.xlane.f32.xlu0 %v3950
    %v3952 = vpop.xlane.xlu0 %3951
    %v3953 = vsel %vm3949, %v3946, 0.0
    %3954 = vadd.xlane.f32.xlu0 %v3953
    %v3955 = vpop.xlane.xlu0 %3954
    %v3956 = vsel %vm3949, %v3947, 0.0
    %3957 = vadd.xlane.f32.xlu0 %v3956
    %v3958 = vpop.xlane.xlu0 %3957
    %v3959 = vsel %vm3949, %v3948, 0.0
    %3960 = vadd.xlane.f32.xlu0 %v3959
    %v3961 = vpop.xlane.xlu0 %3960
    %v3962 = vld [vmem:[%s45] sm:$0xff]
    %v3963 = vld [vmem:[%s45 + $0x8] sm:$0xff]
    %v3964 = vld [vmem:[%s45 + $0x10] sm:$0xff]
    %v3965 = vld [vmem:[%s45 + $0x18] sm:$0xff]
    %v3966 = vld [vmem:[%s45 + $0x20] sm:$0xff]
    %v3967 = vld [vmem:[%s45 + $0x28] sm:$0xff]
    %v3968 = vld [vmem:[%s47] sm:$0xff]
    %v3969 = vld [vmem:[%s47 + $0x8] sm:$0xff]
    %v3970 = vld [vmem:[%s47 + $0x10] sm:$0xff]
    %v3971 = vld [vmem:[%s47 + $0x18] sm:$0xff]
    %v3972 = vld [vmem:[%s47 + $0x20] sm:$0xff]
    %v3973 = vld [vmem:[%s47 + $0x28] sm:$0xff]
    %v3974 = vld [vmem:[%s47 + $0x30] sm:$0xff]
    %v3975 = vld [vmem:[%s47 + $0x38] sm:$0xff]
    %v3976 = vld [vmem:[%s47 + $0x40] sm:$0xff]
    %v3977 = vld [vmem:[%s47 + $0x48] sm:$0xff]
    %v3978 = vld [vmem:[%s47 + $0x50] sm:$0xff]
    %v3979 = vld [vmem:[%s47 + $0x58] sm:$0xff]
    %v3984 = vlaneseq
    %v3985 = vshrl.u32 %v3984, 7
    %v3986 = vsub.s32 %v154, %v3985
    %v3987 = vrot.slane %v3952, %v3986
    %v3988 = vlaneseq
    %v3989 = vshrl.u32 %v3988, 7
    %v3990 = vsub.s32 %v2134, %v3989
    %v3991 = vrot.slane %v3955, %v3990
    %v3992 = vsel %vm2139, %v3991, %v3987
    %v3993 = vlaneseq
    %v3994 = vshrl.u32 %v3993, 7
    %v3995 = vsub.s32 %v154, %v3994
    %v3996 = vrot.slane %v3958, %v3995
    %v3997 = vlaneseq
    %v3998 = vshrl.u32 %v3997, 7
    %v3999 = vsub.s32 %v2134, %v3998
    %v4000 = vrot.slane %v3961, %v3999
    %v4001 = vsel %vm2139, %v4000, %v3996
    %v4002 = vsel %vm2150, %v4001, %v3992
    %v4003 = vsel %vm2294, %v4002, 0
    %4005 = vmatprep.subr.mxu0 %v3969
    %4006 = vmatpush1.msra.mxu0 %v3968
    %4007 = vmatprep.subr.mxu0 %v3975
    %4008 = vmatpush1.msra.mxu0 %v3974
    %4009 = vmatprep.subr.mxu0 0.0
    %4010 = vmatpush1.msra.mxu0 0.0
    %4011 = vmatprep.subr.mxu0 0.0
    %4012 = vmatpush1.msra.mxu0 0.0
    %4013 = vmatprep.subr.mxu0 0.0
    %4014 = vmatpush1.msra.mxu0 0.0
    %4015 = vmatprep.subr.mxu0 0.0
    %4016 = vmatpush1.msra.mxu0 0.0
    %4017 = vmatprep.subr.mxu0 0.0
    %4018 = vmatpush1.msra.mxu0 0.0
    %4019 = vmatprep.subr.mxu0 0.0
    %4020 = vmatpush1.msra.mxu0 0.0
    %4021 = vmatprep.subr.mxu0 0.0
    %4022 = vmatpush1.msra.mxu0 0.0
    %4023 = vmatprep.subr.mxu0 0.0
    %4024 = vmatpush1.msra.mxu0 0.0
    %4025 = vmatprep.subr.mxu0 0.0
    %4026 = vmatpush1.msra.mxu0 0.0
    %4027 = vmatprep.subr.mxu0 0.0
    %4028 = vmatpush1.msra.mxu0 0.0
    %4029 = vmatprep.subr.mxu0 0.0
    %4030 = vmatpush1.msra.mxu0 0.0
    %4031 = vmatprep.subr.mxu0 0.0
    %4032 = vmatpush1.msra.mxu0 0.0
    %4033 = vmatprep.subr.mxu0 0.0
    %4034 = vmatpush1.msra.mxu0 0.0
    %4035 = vmatprep.subr.mxu0 0.0
    %4036 = vmatpush1.msra.mxu0 0.0
    %4037 = vmatprep.subr.mxu0 0.0
    %4038 = vmatpush1.msra.mxu0 0.0
    %4039 = vmatprep.subr.mxu0 0.0
    %4040 = vmatpush1.msra.mxu0 0.0
    %4041 = vmatprep.subr.mxu0 0.0
    %4042 = vmatpush1.msra.mxu0 0.0
    %4043 = vmatprep.subr.mxu0 0.0
    %4044 = vmatpush1.msra.mxu0 0.0
    %4045 = vmatprep.subr.mxu0 0.0
    %4046 = vmatpush1.msra.mxu0 0.0
    %4047 = vmatprep.subr.mxu0 0.0
    %4048 = vmatpush1.msra.mxu0 0.0
    %4049 = vmatprep.subr.mxu0 0.0
    %4050 = vmatpush1.msra.mxu0 0.0
    %4051 = vmatprep.subr.mxu0 0.0
    %4052 = vmatpush1.msra.mxu0 0.0
    %4053 = vmatprep.subr.mxu0 0.0
    %4054 = vmatpush1.msra.mxu0 0.0
    %4055 = vmatprep.subr.mxu0 0.0
    %4056 = vmatpush1.msra.mxu0 0.0
    %4057 = vmatprep.subr.mxu0 0.0
    %4058 = vmatpush1.msra.mxu0 0.0
    %4059 = vmatprep.subr.mxu0 0.0
    %4060 = vmatpush1.msra.mxu0 0.0
    %4061 = vmatprep.subr.mxu0 0.0
    %4062 = vmatpush1.msra.mxu0 0.0
    %4063 = vmatprep.subr.mxu0 0.0
    %4064 = vmatpush1.msra.mxu0 0.0
    %4065 = vmatprep.subr.mxu0 0.0
    %4066 = vmatpush1.msra.mxu0 0.0
    %4067 = vmatprep.subr.mxu0 0.0
    %4068 = vmatpush1.msra.mxu0 0.0
    %4069 = vmatprep.mubr.f32.mxu0 0.0
    %4070 = vmatmul.mubr.f32.gmra.mrb[0].mxu0 %v4003
    %v4071 = vpop.f32.mrb[0].mxu0
    %v4072 = vadd.f32 0.0, %v4071
    %v4073 = vpop.f32.mrb[0].mxu0
    %v4074 = vadd.f32 0.0, %v4073
    %4075 = vdwg.mxu0
    %4076 = vmatprep.subr.mxu0 %v3971
    %4077 = vmatpush1.msra.mxu0 %v3970
    %4078 = vmatprep.subr.mxu0 %v3977
    %4079 = vmatpush1.msra.mxu0 %v3976
    %4080 = vmatprep.subr.mxu0 0.0
    %4081 = vmatpush1.msra.mxu0 0.0
    %4082 = vmatprep.subr.mxu0 0.0
    %4083 = vmatpush1.msra.mxu0 0.0
    %4084 = vmatprep.subr.mxu0 0.0
    %4085 = vmatpush1.msra.mxu0 0.0
    %4086 = vmatprep.subr.mxu0 0.0
    %4087 = vmatpush1.msra.mxu0 0.0
    %4088 = vmatprep.subr.mxu0 0.0
    %4089 = vmatpush1.msra.mxu0 0.0
    %4090 = vmatprep.subr.mxu0 0.0
    %4091 = vmatpush1.msra.mxu0 0.0
    %4092 = vmatprep.subr.mxu0 0.0
    %4093 = vmatpush1.msra.mxu0 0.0
    %4094 = vmatprep.subr.mxu0 0.0
    %4095 = vmatpush1.msra.mxu0 0.0
    %4096 = vmatprep.subr.mxu0 0.0
    %4097 = vmatpush1.msra.mxu0 0.0
    %4098 = vmatprep.subr.mxu0 0.0
    %4099 = vmatpush1.msra.mxu0 0.0
    %4100 = vmatprep.subr.mxu0 0.0
    %4101 = vmatpush1.msra.mxu0 0.0
    %4102 = vmatprep.subr.mxu0 0.0
    %4103 = vmatpush1.msra.mxu0 0.0
    %4104 = vmatprep.subr.mxu0 0.0
    %4105 = vmatpush1.msra.mxu0 0.0
    %4106 = vmatprep.subr.mxu0 0.0
    %4107 = vmatpush1.msra.mxu0 0.0
    %4108 = vmatprep.subr.mxu0 0.0
    %4109 = vmatpush1.msra.mxu0 0.0
    %4110 = vmatprep.subr.mxu0 0.0
    %4111 = vmatpush1.msra.mxu0 0.0
    %4112 = vmatprep.subr.mxu0 0.0
    %4113 = vmatpush1.msra.mxu0 0.0
    %4114 = vmatprep.subr.mxu0 0.0
    %4115 = vmatpush1.msra.mxu0 0.0
    %4116 = vmatprep.subr.mxu0 0.0
    %4117 = vmatpush1.msra.mxu0 0.0
    %4118 = vmatprep.subr.mxu0 0.0
    %4119 = vmatpush1.msra.mxu0 0.0
    %4120 = vmatprep.subr.mxu0 0.0
    %4121 = vmatpush1.msra.mxu0 0.0
    %4122 = vmatprep.subr.mxu0 0.0
    %4123 = vmatpush1.msra.mxu0 0.0
    %4124 = vmatprep.subr.mxu0 0.0
    %4125 = vmatpush1.msra.mxu0 0.0
    %4126 = vmatprep.subr.mxu0 0.0
    %4127 = vmatpush1.msra.mxu0 0.0
    %4128 = vmatprep.subr.mxu0 0.0
    %4129 = vmatpush1.msra.mxu0 0.0
    %4130 = vmatprep.subr.mxu0 0.0
    %4131 = vmatpush1.msra.mxu0 0.0
    %4132 = vmatprep.subr.mxu0 0.0
    %4133 = vmatpush1.msra.mxu0 0.0
    %4134 = vmatprep.subr.mxu0 0.0
    %4135 = vmatpush1.msra.mxu0 0.0
    %4136 = vmatprep.subr.mxu0 0.0
    %4137 = vmatpush1.msra.mxu0 0.0
    %4138 = vmatprep.subr.mxu0 0.0
    %4139 = vmatpush1.msra.mxu0 0.0
    %4140 = vmatprep.mubr.f32.mxu0 0.0
    %4141 = vmatmul.mubr.f32.gmra.mrb[0].mxu0 %v4003
    %v4142 = vpop.f32.mrb[0].mxu0
    %v4143 = vadd.f32 0.0, %v4142
    %v4144 = vpop.f32.mrb[0].mxu0
    %v4145 = vadd.f32 0.0, %v4144
    %4146 = vdwg.mxu0
    %4147 = vmatprep.subr.mxu0 %v3973
    %4148 = vmatpush1.msra.mxu0 %v3972
    %4149 = vmatprep.subr.mxu0 %v3979
    %4150 = vmatpush1.msra.mxu0 %v3978
    %4151 = vmatprep.subr.mxu0 0.0
    %4152 = vmatpush1.msra.mxu0 0.0
    %4153 = vmatprep.subr.mxu0 0.0
    %4154 = vmatpush1.msra.mxu0 0.0
    %4155 = vmatprep.subr.mxu0 0.0
    %4156 = vmatpush1.msra.mxu0 0.0
    %4157 = vmatprep.subr.mxu0 0.0
    %4158 = vmatpush1.msra.mxu0 0.0
    %4159 = vmatprep.subr.mxu0 0.0
    %4160 = vmatpush1.msra.mxu0 0.0
    %4161 = vmatprep.subr.mxu0 0.0
    %4162 = vmatpush1.msra.mxu0 0.0
    %4163 = vmatprep.subr.mxu0 0.0
    %4164 = vmatpush1.msra.mxu0 0.0
    %4165 = vmatprep.subr.mxu0 0.0
    %4166 = vmatpush1.msra.mxu0 0.0
    %4167 = vmatprep.subr.mxu0 0.0
    %4168 = vmatpush1.msra.mxu0 0.0
    %4169 = vmatprep.subr.mxu0 0.0
    %4170 = vmatpush1.msra.mxu0 0.0
    %4171 = vmatprep.subr.mxu0 0.0
    %4172 = vmatpush1.msra.mxu0 0.0
    %4173 = vmatprep.subr.mxu0 0.0
    %4174 = vmatpush1.msra.mxu0 0.0
    %4175 = vmatprep.subr.mxu0 0.0
    %4176 = vmatpush1.msra.mxu0 0.0
    %4177 = vmatprep.subr.mxu0 0.0
    %4178 = vmatpush1.msra.mxu0 0.0
    %4179 = vmatprep.subr.mxu0 0.0
    %4180 = vmatpush1.msra.mxu0 0.0
    %4181 = vmatprep.subr.mxu0 0.0
    %4182 = vmatpush1.msra.mxu0 0.0
    %4183 = vmatprep.subr.mxu0 0.0
    %4184 = vmatpush1.msra.mxu0 0.0
    %4185 = vmatprep.subr.mxu0 0.0
    %4186 = vmatpush1.msra.mxu0 0.0
    %4187 = vmatprep.subr.mxu0 0.0
    %4188 = vmatpush1.msra.mxu0 0.0
    %4189 = vmatprep.subr.mxu0 0.0
    %4190 = vmatpush1.msra.mxu0 0.0
    %4191 = vmatprep.subr.mxu0 0.0
    %4192 = vmatpush1.msra.mxu0 0.0
    %4193 = vmatprep.subr.mxu0 0.0
    %4194 = vmatpush1.msra.mxu0 0.0
    %4195 = vmatprep.subr.mxu0 0.0
    %4196 = vmatpush1.msra.mxu0 0.0
    %4197 = vmatprep.subr.mxu0 0.0
    %4198 = vmatpush1.msra.mxu0 0.0
    %4199 = vmatprep.subr.mxu0 0.0
    %4200 = vmatpush1.msra.mxu0 0.0
    %4201 = vmatprep.subr.mxu0 0.0
    %4202 = vmatpush1.msra.mxu0 0.0
    %4203 = vmatprep.subr.mxu0 0.0
    %4204 = vmatpush1.msra.mxu0 0.0
    %4205 = vmatprep.subr.mxu0 0.0
    %4206 = vmatpush1.msra.mxu0 0.0
    %4207 = vmatprep.subr.mxu0 0.0
    %4208 = vmatpush1.msra.mxu0 0.0
    %4209 = vmatprep.subr.mxu0 0.0
    %4210 = vmatpush1.msra.mxu0 0.0
    %4211 = vmatprep.mubr.f32.mxu0 0.0
    %4212 = vmatmul.mubr.f32.gmra.mrb[0].mxu0 %v4003
    %v4213 = vpop.f32.mrb[0].mxu0
    %v4214 = vadd.f32 0.0, %v4213
    %v4215 = vpop.f32.mrb[0].mxu0
    %v4216 = vadd.f32 0.0, %v4215
    %4217 = vdwg.mxu0
    %v4220 = vlaneseq
    %v4221 = vshrl.u32 %v4220, 7
    %v4222 = vsub.s32 %v154, %v4221
    %v4223 = vrot.slane %v2297, %v4222
    %v4224 = vlaneseq
    %v4225 = vshrl.u32 %v4224, 7
    %v4226 = vsub.s32 %v154, %v4225
    %v4227 = vrot.slane %v2300, %v4226
    %v4228 = vsel %vm2150, %v4227, %v4223
    %v4229 = vsel %vm1769, %v4228, 0
    %4231 = vmatprep.subr.mxu0 %v3963
    %4232 = vmatpush1.msra.mxu0 %v3962
    %4233 = vmatprep.subr.mxu0 0.0
    %4234 = vmatpush1.msra.mxu0 0.0
    %4235 = vmatprep.subr.mxu0 0.0
    %4236 = vmatpush1.msra.mxu0 0.0
    %4237 = vmatprep.subr.mxu0 0.0
    %4238 = vmatpush1.msra.mxu0 0.0
    %4239 = vmatprep.subr.mxu0 0.0
    %4240 = vmatpush1.msra.mxu0 0.0
    %4241 = vmatprep.subr.mxu0 0.0
    %4242 = vmatpush1.msra.mxu0 0.0
    %4243 = vmatprep.subr.mxu0 0.0
    %4244 = vmatpush1.msra.mxu0 0.0
    %4245 = vmatprep.subr.mxu0 0.0
    %4246 = vmatpush1.msra.mxu0 0.0
    %4247 = vmatprep.subr.mxu0 0.0
    %4248 = vmatpush1.msra.mxu0 0.0
    %4249 = vmatprep.subr.mxu0 0.0
    %4250 = vmatpush1.msra.mxu0 0.0
    %4251 = vmatprep.subr.mxu0 0.0
    %4252 = vmatpush1.msra.mxu0 0.0
    %4253 = vmatprep.subr.mxu0 0.0
    %4254 = vmatpush1.msra.mxu0 0.0
    %4255 = vmatprep.subr.mxu0 0.0
    %4256 = vmatpush1.msra.mxu0 0.0
    %4257 = vmatprep.subr.mxu0 0.0
    %4258 = vmatpush1.msra.mxu0 0.0
    %4259 = vmatprep.subr.mxu0 0.0
    %4260 = vmatpush1.msra.mxu0 0.0
    %4261 = vmatprep.subr.mxu0 0.0
    %4262 = vmatpush1.msra.mxu0 0.0
    %4263 = vmatprep.subr.mxu0 0.0
    %4264 = vmatpush1.msra.mxu0 0.0
    %4265 = vmatprep.subr.mxu0 0.0
    %4266 = vmatpush1.msra.mxu0 0.0
    %4267 = vmatprep.subr.mxu0 0.0
    %4268 = vmatpush1.msra.mxu0 0.0
    %4269 = vmatprep.subr.mxu0 0.0
    %4270 = vmatpush1.msra.mxu0 0.0
    %4271 = vmatprep.subr.mxu0 0.0
    %4272 = vmatpush1.msra.mxu0 0.0
    %4273 = vmatprep.subr.mxu0 0.0
    %4274 = vmatpush1.msra.mxu0 0.0
    %4275 = vmatprep.subr.mxu0 0.0
    %4276 = vmatpush1.msra.mxu0 0.0
    %4277 = vmatprep.subr.mxu0 0.0
    %4278 = vmatpush1.msra.mxu0 0.0
    %4279 = vmatprep.subr.mxu0 0.0
    %4280 = vmatpush1.msra.mxu0 0.0
    %4281 = vmatprep.subr.mxu0 0.0
    %4282 = vmatpush1.msra.mxu0 0.0
    %4283 = vmatprep.subr.mxu0 0.0
    %4284 = vmatpush1.msra.mxu0 0.0
    %4285 = vmatprep.subr.mxu0 0.0
    %4286 = vmatpush1.msra.mxu0 0.0
    %4287 = vmatprep.subr.mxu0 0.0
    %4288 = vmatpush1.msra.mxu0 0.0
    %4289 = vmatprep.subr.mxu0 0.0
    %4290 = vmatpush1.msra.mxu0 0.0
    %4291 = vmatprep.subr.mxu0 0.0
    %4292 = vmatpush1.msra.mxu0 0.0
    %4293 = vmatprep.subr.mxu0 0.0
    %4294 = vmatpush1.msra.mxu0 0.0
    %4295 = vmatprep.mubr.f32.mxu0 0.0
    %4296 = vmatmul.mubr.f32.gmra.mrb[0].mxu0 %v4229
    %v4297 = vpop.f32.mrb[0].mxu0
    %v4298 = vadd.f32 %v4072, %v4297
    %v4299 = vpop.f32.mrb[0].mxu0
    %v4300 = vadd.f32 %v4074, %v4299
    %4301 = vdwg.mxu0
    %4302 = vmatprep.subr.mxu0 %v3965
    %4303 = vmatpush1.msra.mxu0 %v3964
    %4304 = vmatprep.subr.mxu0 0.0
    %4305 = vmatpush1.msra.mxu0 0.0
    %4306 = vmatprep.subr.mxu0 0.0
    %4307 = vmatpush1.msra.mxu0 0.0
    %4308 = vmatprep.subr.mxu0 0.0
    %4309 = vmatpush1.msra.mxu0 0.0
    %4310 = vmatprep.subr.mxu0 0.0
    %4311 = vmatpush1.msra.mxu0 0.0
    %4312 = vmatprep.subr.mxu0 0.0
    %4313 = vmatpush1.msra.mxu0 0.0
    %4314 = vmatprep.subr.mxu0 0.0
    %4315 = vmatpush1.msra.mxu0 0.0
    %4316 = vmatprep.subr.mxu0 0.0
    %4317 = vmatpush1.msra.mxu0 0.0
    %4318 = vmatprep.subr.mxu0 0.0
    %4319 = vmatpush1.msra.mxu0 0.0
    %4320 = vmatprep.subr.mxu0 0.0
    %4321 = vmatpush1.msra.mxu0 0.0
    %4322 = vmatprep.subr.mxu0 0.0
    %4323 = vmatpush1.msra.mxu0 0.0
    %4324 = vmatprep.subr.mxu0 0.0
    %4325 = vmatpush1.msra.mxu0 0.0
    %4326 = vmatprep.subr.mxu0 0.0
    %4327 = vmatpush1.msra.mxu0 0.0
    %4328 = vmatprep.subr.mxu0 0.0
    %4329 = vmatpush1.msra.mxu0 0.0
    %4330 = vmatprep.subr.mxu0 0.0
    %4331 = vmatpush1.msra.mxu0 0.0
    %4332 = vmatprep.subr.mxu0 0.0
    %4333 = vmatpush1.msra.mxu0 0.0
    %4334 = vmatprep.subr.mxu0 0.0
    %4335 = vmatpush1.msra.mxu0 0.0
    %4336 = vmatprep.subr.mxu0 0.0
    %4337 = vmatpush1.msra.mxu0 0.0
    %4338 = vmatprep.subr.mxu0 0.0
    %4339 = vmatpush1.msra.mxu0 0.0
    %4340 = vmatprep.subr.mxu0 0.0
    %4341 = vmatpush1.msra.mxu0 0.0
    %4342 = vmatprep.subr.mxu0 0.0
    %4343 = vmatpush1.msra.mxu0 0.0
    %4344 = vmatprep.subr.mxu0 0.0
    %4345 = vmatpush1.msra.mxu0 0.0
    %4346 = vmatprep.subr.mxu0 0.0
    %4347 = vmatpush1.msra.mxu0 0.0
    %4348 = vmatprep.subr.mxu0 0.0
    %4349 = vmatpush1.msra.mxu0 0.0
    %4350 = vmatprep.subr.mxu0 0.0
    %4351 = vmatpush1.msra.mxu0 0.0
    %4352 = vmatprep.subr.mxu0 0.0
    %4353 = vmatpush1.msra.mxu0 0.0
    %4354 = vmatprep.subr.mxu0 0.0
    %4355 = vmatpush1.msra.mxu0 0.0
    %4356 = vmatprep.subr.mxu0 0.0
    %4357 = vmatpush1.msra.mxu0 0.0
    %4358 = vmatprep.subr.mxu0 0.0
    %4359 = vmatpush1.msra.mxu0 0.0
    %4360 = vmatprep.subr.mxu0 0.0
    %4361 = vmatpush1.msra.mxu0 0.0
    %4362 = vmatprep.subr.mxu0 0.0
    %4363 = vmatpush1.msra.mxu0 0.0
    %4364 = vmatprep.subr.mxu0 0.0
    %4365 = vmatpush1.msra.mxu0 0.0
    %4366 = vmatprep.mubr.f32.mxu0 0.0
    %4367 = vmatmul.mubr.f32.gmra.mrb[0].mxu0 %v4229
    %v4368 = vpop.f32.mrb[0].mxu0
    %v4369 = vadd.f32 %v4143, %v4368
    %v4370 = vpop.f32.mrb[0].mxu0
    %v4371 = vadd.f32 %v4145, %v4370
    %4372 = vdwg.mxu0
    %4373 = vmatprep.subr.mxu0 %v3967
    %4374 = vmatpush1.msra.mxu0 %v3966
    %4375 = vmatprep.subr.mxu0 0.0
    %4376 = vmatpush1.msra.mxu0 0.0
    %4377 = vmatprep.subr.mxu0 0.0
    %4378 = vmatpush1.msra.mxu0 0.0
    %4379 = vmatprep.subr.mxu0 0.0
    %4380 = vmatpush1.msra.mxu0 0.0
    %4381 = vmatprep.subr.mxu0 0.0
    %4382 = vmatpush1.msra.mxu0 0.0
    %4383 = vmatprep.subr.mxu0 0.0
    %4384 = vmatpush1.msra.mxu0 0.0
    %4385 = vmatprep.subr.mxu0 0.0
    %4386 = vmatpush1.msra.mxu0 0.0
    %4387 = vmatprep.subr.mxu0 0.0
    %4388 = vmatpush1.msra.mxu0 0.0
    %4389 = vmatprep.subr.mxu0 0.0
    %4390 = vmatpush1.msra.mxu0 0.0
    %4391 = vmatprep.subr.mxu0 0.0
    %4392 = vmatpush1.msra.mxu0 0.0
    %4393 = vmatprep.subr.mxu0 0.0
    %4394 = vmatpush1.msra.mxu0 0.0
    %4395 = vmatprep.subr.mxu0 0.0
    %4396 = vmatpush1.msra.mxu0 0.0
    %4397 = vmatprep.subr.mxu0 0.0
    %4398 = vmatpush1.msra.mxu0 0.0
    %4399 = vmatprep.subr.mxu0 0.0
    %4400 = vmatpush1.msra.mxu0 0.0
    %4401 = vmatprep.subr.mxu0 0.0
    %4402 = vmatpush1.msra.mxu0 0.0
    %4403 = vmatprep.subr.mxu0 0.0
    %4404 = vmatpush1.msra.mxu0 0.0
    %4405 = vmatprep.subr.mxu0 0.0
    %4406 = vmatpush1.msra.mxu0 0.0
    %4407 = vmatprep.subr.mxu0 0.0
    %4408 = vmatpush1.msra.mxu0 0.0
    %4409 = vmatprep.subr.mxu0 0.0
    %4410 = vmatpush1.msra.mxu0 0.0
    %4411 = vmatprep.subr.mxu0 0.0
    %4412 = vmatpush1.msra.mxu0 0.0
    %4413 = vmatprep.subr.mxu0 0.0
    %4414 = vmatpush1.msra.mxu0 0.0
    %4415 = vmatprep.subr.mxu0 0.0
    %4416 = vmatpush1.msra.mxu0 0.0
    %4417 = vmatprep.subr.mxu0 0.0
    %4418 = vmatpush1.msra.mxu0 0.0
    %4419 = vmatprep.subr.mxu0 0.0
    %4420 = vmatpush1.msra.mxu0 0.0
    %4421 = vmatprep.subr.mxu0 0.0
    %4422 = vmatpush1.msra.mxu0 0.0
    %4423 = vmatprep.subr.mxu0 0.0
    %4424 = vmatpush1.msra.mxu0 0.0
    %4425 = vmatprep.subr.mxu0 0.0
    %4426 = vmatpush1.msra.mxu0 0.0
    %4427 = vmatprep.subr.mxu0 0.0
    %4428 = vmatpush1.msra.mxu0 0.0
    %4429 = vmatprep.subr.mxu0 0.0
    %4430 = vmatpush1.msra.mxu0 0.0
    %4431 = vmatprep.subr.mxu0 0.0
    %4432 = vmatpush1.msra.mxu0 0.0
    %4433 = vmatprep.subr.mxu0 0.0
    %4434 = vmatpush1.msra.mxu0 0.0
    %4435 = vmatprep.subr.mxu0 0.0
    %4436 = vmatpush1.msra.mxu0 0.0
    %4437 = vmatprep.mubr.f32.mxu0 0.0
    %4438 = vmatmul.mubr.f32.gmra.mrb[0].mxu0 %v4229
    %v4439 = vpop.f32.mrb[0].mxu0
    %v4440 = vadd.f32 %v4214, %v4439
    %v4441 = vpop.f32.mrb[0].mxu0
    %v4442 = vadd.f32 %v4216, %v4441
    %4443 = vdwg.mxu0
    %v4444 = vld [vmem:[%s51] sm:$0x3f]
    %v4446 = vlaneseq
    %v4447 = vshrl.u32 %v4446, 7
    %v4448 = vsub.s32 0, %v4447
    %v4449 = vrot.slane %v4444, %v4448
    %v4450 = vlaneseq
    %v4451 = vshrl.u32 %v4450, 7
    %v4452 = vsub.s32 1, %v4451
    %v4453 = vrot.slane %v4444, %v4452
    %v4454 = vlaneseq
    %v4455 = vshrl.u32 %v4454, 7
    %v4456 = vsub.s32 2, %v4455
    %v4457 = vrot.slane %v4444, %v4456
    %v4458 = vlaneseq
    %v4459 = vshrl.u32 %v4458, 7
    %v4460 = vsub.s32 3, %v4459
    %v4461 = vrot.slane %v4444, %v4460
    %v4462 = vlaneseq
    %v4463 = vshrl.u32 %v4462, 7
    %v4464 = vsub.s32 4, %v4463
    %v4465 = vrot.slane %v4444, %v4464
    %v4466 = vlaneseq
    %v4467 = vshrl.u32 %v4466, 7
    %v4468 = vsub.s32 5, %v4467
    %v4469 = vrot.slane %v4444, %v4468
    %v4476 = vadd.f32 %v4298, %v4449
    %v4477 = vadd.f32 %v4300, %v4453
    %v4478 = vadd.f32 %v4369, %v4457
    %v4479 = vadd.f32 %v4371, %v4461
    %v4480 = vadd.f32 %v4440, %v4465
    %v4481 = vadd.f32 %v4442, %v4469
    %v4482 = vld [vmem:[%s49] sm:$0xff]
    %v4483 = vld [vmem:[%s49 + $0x8] sm:$0xff]
    %v4484 = vld [vmem:[%s49 + $0x10] sm:$0xff]
    %v4485 = vld [vmem:[%s49 + $0x18] sm:$0xff]
    %v4486 = vld [vmem:[%s49 + $0x20] sm:$0xff]
    %v4487 = vld [vmem:[%s49 + $0x28] sm:$0xff]
    %v4488 = vld [vmem:[%s49 + $0x30] sm:$0xff]
    %v4489 = vld [vmem:[%s49 + $0x38] sm:$0xff]
    %v4490 = vld [vmem:[%s49 + $0x40] sm:$0xff]
    %v4491 = vld [vmem:[%s49 + $0x48] sm:$0xff]
    %v4492 = vld [vmem:[%s49 + $0x50] sm:$0xff]
    %v4493 = vld [vmem:[%s49 + $0x58] sm:$0xff]
    %v4494 = vld [vmem:[%s49 + $0x60] sm:$0xff]
    %v4495 = vld [vmem:[%s49 + $0x68] sm:$0xff]
    %v4496 = vld [vmem:[%s49 + $0x70] sm:$0xff]
    %v4497 = vld [vmem:[%s49 + $0x78] sm:$0xff]
    %v4498 = vld [vmem:[%s49 + $0x80] sm:$0xff]
    %v4499 = vld [vmem:[%s49 + $0x88] sm:$0xff]
    %v4500 = vld [vmem:[%s49 + $0x90] sm:$0xff]
    %v4501 = vld [vmem:[%s49 + $0x98] sm:$0xff]
    %v4502 = vld [vmem:[%s49 + $0xa0] sm:$0xff]
    %v4503 = vld [vmem:[%s49 + $0xa8] sm:$0xff]
    %v4504 = vld [vmem:[%s49 + $0xb0] sm:$0xff]
    %v4505 = vld [vmem:[%s49 + $0xb8] sm:$0xff]
    %v4506 = vld [vmem:[%s49 + $0xc0] sm:$0xff]
    %v4507 = vld [vmem:[%s49 + $0xc8] sm:$0xff]
    %v4508 = vld [vmem:[%s49 + $0xd0] sm:$0xff]
    %v4509 = vld [vmem:[%s49 + $0xd8] sm:$0xff]
    %v4510 = vld [vmem:[%s49 + $0xe0] sm:$0xff]
    %v4511 = vld [vmem:[%s49 + $0xe8] sm:$0xff]
    %v4512 = vld [vmem:[%s49 + $0xf0] sm:$0xff]
    %v4513 = vld [vmem:[%s49 + $0xf8] sm:$0xff]
    %v4514 = vld [vmem:[%s49 + $0x100] sm:$0xff]
    %v4515 = vld [vmem:[%s49 + $0x108] sm:$0xff]
    %v4516 = vld [vmem:[%s49 + $0x110] sm:$0xff]
    %v4517 = vld [vmem:[%s49 + $0x118] sm:$0xff]
    %v4518 = vld [vmem:[%s49 + $0x120] sm:$0xff]
    %v4519 = vld [vmem:[%s49 + $0x128] sm:$0xff]
    %v4520 = vld [vmem:[%s49 + $0x130] sm:$0xff]
    %v4521 = vld [vmem:[%s49 + $0x138] sm:$0xff]
    %v4522 = vld [vmem:[%s49 + $0x140] sm:$0xff]
    %v4523 = vld [vmem:[%s49 + $0x148] sm:$0xff]
    %v4524 = vld [vmem:[%s49 + $0x150] sm:$0xff]
    %v4525 = vld [vmem:[%s49 + $0x158] sm:$0xff]
    %v4526 = vld [vmem:[%s49 + $0x160] sm:$0xff]
    %v4527 = vld [vmem:[%s49 + $0x168] sm:$0xff]
    %v4528 = vld [vmem:[%s49 + $0x170] sm:$0xff]
    %v4529 = vld [vmem:[%s49 + $0x178] sm:$0xff]
    %v4530 = vld [vmem:[%s49 + $0x180] sm:$0xff]
    %v4531 = vld [vmem:[%s49 + $0x188] sm:$0xff]
    %v4532 = vld [vmem:[%s49 + $0x190] sm:$0xff]
    %v4533 = vld [vmem:[%s49 + $0x198] sm:$0xff]
    %v4534 = vld [vmem:[%s49 + $0x1a0] sm:$0xff]
    %v4535 = vld [vmem:[%s49 + $0x1a8] sm:$0xff]
    %v4536 = vld [vmem:[%s49 + $0x1b0] sm:$0xff]
    %v4537 = vld [vmem:[%s49 + $0x1b8] sm:$0xff]
    %v4538 = vld [vmem:[%s49 + $0x1c0] sm:$0xff]
    %v4539 = vld [vmem:[%s49 + $0x1c8] sm:$0xff]
    %v4540 = vld [vmem:[%s49 + $0x1d0] sm:$0xff]
    %v4541 = vld [vmem:[%s49 + $0x1d8] sm:$0xff]
    %v4542 = vld [vmem:[%s49 + $0x1e0] sm:$0xff]
    %v4543 = vld [vmem:[%s49 + $0x1e8] sm:$0xff]
    %v4544 = vld [vmem:[%s49 + $0x1f0] sm:$0xff]
    %v4545 = vld [vmem:[%s49 + $0x1f8] sm:$0xff]
    %v4546 = vld [vmem:[%s49 + $0x200] sm:$0xff]
    %v4547 = vld [vmem:[%s49 + $0x208] sm:$0xff]
    %v4548 = vld [vmem:[%s49 + $0x210] sm:$0xff]
    %v4549 = vld [vmem:[%s49 + $0x218] sm:$0xff]
    %v4550 = vld [vmem:[%s49 + $0x220] sm:$0xff]
    %v4551 = vld [vmem:[%s49 + $0x228] sm:$0xff]
    %v4552 = vld [vmem:[%s49 + $0x230] sm:$0xff]
    %v4553 = vld [vmem:[%s49 + $0x238] sm:$0xff]
    %v4554 = vld [vmem:[%s49 + $0x240] sm:$0xff]
    %v4555 = vld [vmem:[%s49 + $0x248] sm:$0xff]
    %v4556 = vld [vmem:[%s49 + $0x250] sm:$0xff]
    %v4557 = vld [vmem:[%s49 + $0x258] sm:$0xff]
    %v4558 = vld [vmem:[%s49 + $0x260] sm:$0xff]
    %v4559 = vld [vmem:[%s49 + $0x268] sm:$0xff]
    %v4560 = vld [vmem:[%s49 + $0x270] sm:$0xff]
    %v4561 = vld [vmem:[%s49 + $0x278] sm:$0xff]
    %v4562 = vld [vmem:[%s49 + $0x280] sm:$0xff]
    %v4563 = vld [vmem:[%s49 + $0x288] sm:$0xff]
    %v4564 = vld [vmem:[%s49 + $0x290] sm:$0xff]
    %v4565 = vld [vmem:[%s49 + $0x298] sm:$0xff]
    %v4566 = vld [vmem:[%s49 + $0x2a0] sm:$0xff]
    %v4567 = vld [vmem:[%s49 + $0x2a8] sm:$0xff]
    %v4568 = vld [vmem:[%s49 + $0x2b0] sm:$0xff]
    %v4569 = vld [vmem:[%s49 + $0x2b8] sm:$0xff]
    %v4570 = vld [vmem:[%s49 + $0x2c0] sm:$0xff]
    %v4571 = vld [vmem:[%s49 + $0x2c8] sm:$0xff]
    %v4572 = vld [vmem:[%s49 + $0x2d0] sm:$0xff]
    %v4573 = vld [vmem:[%s49 + $0x2d8] sm:$0xff]
    %v4574 = vld [vmem:[%s49 + $0x2e0] sm:$0xff]
    %v4575 = vld [vmem:[%s49 + $0x2e8] sm:$0xff]
    %v4576 = vld [vmem:[%s49 + $0x2f0] sm:$0xff]
    %v4577 = vld [vmem:[%s49 + $0x2f8] sm:$0xff]
    %v4578 = vld [vmem:[%s49 + $0x300] sm:$0xff]
    %v4579 = vld [vmem:[%s49 + $0x308] sm:$0xff]
    %v4580 = vld [vmem:[%s49 + $0x310] sm:$0xff]
    %v4581 = vld [vmem:[%s49 + $0x318] sm:$0xff]
    %v4582 = vld [vmem:[%s49 + $0x320] sm:$0xff]
    %v4583 = vld [vmem:[%s49 + $0x328] sm:$0xff]
    %v4584 = vld [vmem:[%s49 + $0x330] sm:$0xff]
    %v4585 = vld [vmem:[%s49 + $0x338] sm:$0xff]
    %v4586 = vld [vmem:[%s49 + $0x340] sm:$0xff]
    %v4587 = vld [vmem:[%s49 + $0x348] sm:$0xff]
    %v4588 = vld [vmem:[%s49 + $0x350] sm:$0xff]
    %v4589 = vld [vmem:[%s49 + $0x358] sm:$0xff]
    %v4590 = vld [vmem:[%s49 + $0x360] sm:$0xff]
    %v4591 = vld [vmem:[%s49 + $0x368] sm:$0xff]
    %v4592 = vld [vmem:[%s49 + $0x370] sm:$0xff]
    %v4593 = vld [vmem:[%s49 + $0x378] sm:$0xff]
    %v4594 = vld [vmem:[%s49 + $0x380] sm:$0xff]
    %v4595 = vld [vmem:[%s49 + $0x388] sm:$0xff]
    %v4596 = vld [vmem:[%s49 + $0x390] sm:$0xff]
    %v4597 = vld [vmem:[%s49 + $0x398] sm:$0xff]
    %v4598 = vld [vmem:[%s49 + $0x3a0] sm:$0xff]
    %v4599 = vld [vmem:[%s49 + $0x3a8] sm:$0xff]
    %v4600 = vld [vmem:[%s49 + $0x3b0] sm:$0xff]
    %v4601 = vld [vmem:[%s49 + $0x3b8] sm:$0xff]
    %v4602 = vld [vmem:[%s49 + $0x3c0] sm:$0xff]
    %v4603 = vld [vmem:[%s49 + $0x3c8] sm:$0xff]
    %v4604 = vld [vmem:[%s49 + $0x3d0] sm:$0xff]
    %v4605 = vld [vmem:[%s49 + $0x3d8] sm:$0xff]
    %v4606 = vld [vmem:[%s49 + $0x3e0] sm:$0xff]
    %v4607 = vld [vmem:[%s49 + $0x3e8] sm:$0xff]
    %v4608 = vld [vmem:[%s49 + $0x3f0] sm:$0xff]
    %v4609 = vld [vmem:[%s49 + $0x3f8] sm:$0xff]
    %v4610 = vld [vmem:[%s49 + $0x400] sm:$0xff]
    %v4611 = vld [vmem:[%s49 + $0x408] sm:$0xff]
    %v4612 = vld [vmem:[%s49 + $0x410] sm:$0xff]
    %v4613 = vld [vmem:[%s49 + $0x418] sm:$0xff]
    %v4614 = vld [vmem:[%s49 + $0x420] sm:$0xff]
    %v4615 = vld [vmem:[%s49 + $0x428] sm:$0xff]
    %v4616 = vld [vmem:[%s49 + $0x430] sm:$0xff]
    %v4617 = vld [vmem:[%s49 + $0x438] sm:$0xff]
    %v4618 = vld [vmem:[%s49 + $0x440] sm:$0xff]
    %v4619 = vld [vmem:[%s49 + $0x448] sm:$0xff]
    %v4620 = vld [vmem:[%s49 + $0x450] sm:$0xff]
    %v4621 = vld [vmem:[%s49 + $0x458] sm:$0xff]
    %v4622 = vld [vmem:[%s49 + $0x460] sm:$0xff]
    %v4623 = vld [vmem:[%s49 + $0x468] sm:$0xff]
    %v4624 = vld [vmem:[%s49 + $0x470] sm:$0xff]
    %v4625 = vld [vmem:[%s49 + $0x478] sm:$0xff]
    %v4626 = vld [vmem:[%s49 + $0x480] sm:$0xff]
    %v4627 = vld [vmem:[%s49 + $0x488] sm:$0xff]
    %v4628 = vld [vmem:[%s49 + $0x490] sm:$0xff]
    %v4629 = vld [vmem:[%s49 + $0x498] sm:$0xff]
    %v4630 = vld [vmem:[%s49 + $0x4a0] sm:$0xff]
    %v4631 = vld [vmem:[%s49 + $0x4a8] sm:$0xff]
    %v4632 = vld [vmem:[%s49 + $0x4b0] sm:$0xff]
    %v4633 = vld [vmem:[%s49 + $0x4b8] sm:$0xff]
    %v4634 = vld [vmem:[%s49 + $0x4c0] sm:$0xff]
    %v4635 = vld [vmem:[%s49 + $0x4c8] sm:$0xff]
    %v4636 = vld [vmem:[%s49 + $0x4d0] sm:$0xff]
    %v4637 = vld [vmem:[%s49 + $0x4d8] sm:$0xff]
    %v4638 = vld [vmem:[%s49 + $0x4e0] sm:$0xff]
    %v4639 = vld [vmem:[%s49 + $0x4e8] sm:$0xff]
    %v4640 = vld [vmem:[%s49 + $0x4f0] sm:$0xff]
    %v4641 = vld [vmem:[%s49 + $0x4f8] sm:$0xff]
    %v4642 = vld [vmem:[%s49 + $0x500] sm:$0xff]
    %v4643 = vld [vmem:[%s49 + $0x508] sm:$0xff]
    %v4644 = vld [vmem:[%s49 + $0x510] sm:$0xff]
    %v4645 = vld [vmem:[%s49 + $0x518] sm:$0xff]
    %v4646 = vld [vmem:[%s49 + $0x520] sm:$0xff]
    %v4647 = vld [vmem:[%s49 + $0x528] sm:$0xff]
    %v4648 = vld [vmem:[%s49 + $0x530] sm:$0xff]
    %v4649 = vld [vmem:[%s49 + $0x538] sm:$0xff]
    %v4650 = vld [vmem:[%s49 + $0x540] sm:$0xff]
    %v4651 = vld [vmem:[%s49 + $0x548] sm:$0xff]
    %v4652 = vld [vmem:[%s49 + $0x550] sm:$0xff]
    %v4653 = vld [vmem:[%s49 + $0x558] sm:$0xff]
    %v4654 = vld [vmem:[%s49 + $0x560] sm:$0xff]
    %v4655 = vld [vmem:[%s49 + $0x568] sm:$0xff]
    %v4656 = vld [vmem:[%s49 + $0x570] sm:$0xff]
    %v4657 = vld [vmem:[%s49 + $0x578] sm:$0xff]
    %v4658 = vld [vmem:[%s49 + $0x580] sm:$0xff]
    %v4659 = vld [vmem:[%s49 + $0x588] sm:$0xff]
    %v4660 = vld [vmem:[%s49 + $0x590] sm:$0xff]
    %v4661 = vld [vmem:[%s49 + $0x598] sm:$0xff]
    %v4662 = vld [vmem:[%s49 + $0x5a0] sm:$0xff]
    %v4663 = vld [vmem:[%s49 + $0x5a8] sm:$0xff]
    %v4664 = vld [vmem:[%s49 + $0x5b0] sm:$0xff]
    %v4665 = vld [vmem:[%s49 + $0x5b8] sm:$0xff]
    %v4666 = vld [vmem:[%s49 + $0x5c0] sm:$0xff]
    %v4667 = vld [vmem:[%s49 + $0x5c8] sm:$0xff]
    %v4668 = vld [vmem:[%s49 + $0x5d0] sm:$0xff]
    %v4669 = vld [vmem:[%s49 + $0x5d8] sm:$0xff]
    %v4670 = vld [vmem:[%s49 + $0x5e0] sm:$0xff]
    %v4671 = vld [vmem:[%s49 + $0x5e8] sm:$0xff]
    %v4672 = vld [vmem:[%s49 + $0x5f0] sm:$0xff]
    %v4673 = vld [vmem:[%s49 + $0x5f8] sm:$0xff]
    %v4674 = vld [vmem:[%s53] sm:$0x3f]
    %v4676 = vlaneseq
    %v4677 = vshrl.u32 %v4676, 7
    %v4678 = vsub.s32 0, %v4677
    %v4679 = vrot.slane %v4674, %v4678
    %v4680 = vlaneseq
    %v4681 = vshrl.u32 %v4680, 7
    %v4682 = vsub.s32 1, %v4681
    %v4683 = vrot.slane %v4674, %v4682
    %v4684 = vlaneseq
    %v4685 = vshrl.u32 %v4684, 7
    %v4686 = vsub.s32 2, %v4685
    %v4687 = vrot.slane %v4674, %v4686
    %v4688 = vlaneseq
    %v4689 = vshrl.u32 %v4688, 7
    %v4690 = vsub.s32 3, %v4689
    %v4691 = vrot.slane %v4674, %v4690
    %v4692 = vlaneseq
    %v4693 = vshrl.u32 %v4692, 7
    %v4694 = vsub.s32 4, %v4693
    %v4695 = vrot.slane %v4674, %v4694
    %v4696 = vlaneseq
    %v4697 = vshrl.u32 %v4696, 7
    %v4698 = vsub.s32 5, %v4697
    %v4699 = vrot.slane %v4674, %v4698
    %4706 = vmatprep.subr.mxu0 %v4483
    %4707 = vmatpush1.msra.mxu0 %v4482
    %4708 = vmatprep.subr.mxu0 %v4489
    %4709 = vmatpush1.msra.mxu0 %v4488
    %4710 = vmatprep.subr.mxu0 %v4495
    %4711 = vmatpush1.msra.mxu0 %v4494
    %4712 = vmatprep.subr.mxu0 %v4501
    %4713 = vmatpush1.msra.mxu0 %v4500
    %4714 = vmatprep.subr.mxu0 %v4507
    %4715 = vmatpush1.msra.mxu0 %v4506
    %4716 = vmatprep.subr.mxu0 %v4513
    %4717 = vmatpush1.msra.mxu0 %v4512
    %4718 = vmatprep.subr.mxu0 %v4519
    %4719 = vmatpush1.msra.mxu0 %v4518
    %4720 = vmatprep.subr.mxu0 %v4525
    %4721 = vmatpush1.msra.mxu0 %v4524
    %4722 = vmatprep.subr.mxu0 %v4531
    %4723 = vmatpush1.msra.mxu0 %v4530
    %4724 = vmatprep.subr.mxu0 %v4537
    %4725 = vmatpush1.msra.mxu0 %v4536
    %4726 = vmatprep.subr.mxu0 %v4543
    %4727 = vmatpush1.msra.mxu0 %v4542
    %4728 = vmatprep.subr.mxu0 %v4549
    %4729 = vmatpush1.msra.mxu0 %v4548
    %4730 = vmatprep.subr.mxu0 %v4555
    %4731 = vmatpush1.msra.mxu0 %v4554
    %4732 = vmatprep.subr.mxu0 %v4561
    %4733 = vmatpush1.msra.mxu0 %v4560
    %4734 = vmatprep.subr.mxu0 %v4567
    %4735 = vmatpush1.msra.mxu0 %v4566
    %4736 = vmatprep.subr.mxu0 %v4573
    %4737 = vmatpush1.msra.mxu0 %v4572
    %4738 = vmatprep.subr.mxu0 %v4579
    %4739 = vmatpush1.msra.mxu0 %v4578
    %4740 = vmatprep.subr.mxu0 %v4585
    %4741 = vmatpush1.msra.mxu0 %v4584
    %4742 = vmatprep.subr.mxu0 %v4591
    %4743 = vmatpush1.msra.mxu0 %v4590
    %4744 = vmatprep.subr.mxu0 %v4597
    %4745 = vmatpush1.msra.mxu0 %v4596
    %4746 = vmatprep.subr.mxu0 %v4603
    %4747 = vmatpush1.msra.mxu0 %v4602
    %4748 = vmatprep.subr.mxu0 %v4609
    %4749 = vmatpush1.msra.mxu0 %v4608
    %4750 = vmatprep.subr.mxu0 %v4615
    %4751 = vmatpush1.msra.mxu0 %v4614
    %4752 = vmatprep.subr.mxu0 %v4621
    %4753 = vmatpush1.msra.mxu0 %v4620
    %4754 = vmatprep.subr.mxu0 %v4627
    %4755 = vmatpush1.msra.mxu0 %v4626
    %4756 = vmatprep.subr.mxu0 %v4633
    %4757 = vmatpush1.msra.mxu0 %v4632
    %4758 = vmatprep.subr.mxu0 %v4639
    %4759 = vmatpush1.msra.mxu0 %v4638
    %4760 = vmatprep.subr.mxu0 %v4645
    %4761 = vmatpush1.msra.mxu0 %v4644
    %4762 = vmatprep.subr.mxu0 %v4651
    %4763 = vmatpush1.msra.mxu0 %v4650
    %4764 = vmatprep.subr.mxu0 %v4657
    %4765 = vmatpush1.msra.mxu0 %v4656
    %4766 = vmatprep.subr.mxu0 %v4663
    %4767 = vmatpush1.msra.mxu0 %v4662
    %4768 = vmatprep.subr.mxu0 %v4669
    %4769 = vmatpush1.msra.mxu0 %v4668
    %4770 = vmatprep.mubr.f32.mxu0 %v1197
    %4771 = vmatmul.mubr.f32.gmra.mrb[0].mxu0 %v1196
    %v4772 = vpop.f32.mrb[0].mxu0
    %v4773 = vadd.f32 %v4679, %v4772
    %v4774 = vpop.f32.mrb[0].mxu0
    %v4775 = vadd.f32 %v4683, %v4774
    %4776 = vdwg.mxu0
    %4777 = vmatprep.subr.mxu0 %v4485
    %4778 = vmatpush1.msra.mxu0 %v4484
    %4779 = vmatprep.subr.mxu0 %v4491
    %4780 = vmatpush1.msra.mxu0 %v4490
    %4781 = vmatprep.subr.mxu0 %v4497
    %4782 = vmatpush1.msra.mxu0 %v4496
    %4783 = vmatprep.subr.mxu0 %v4503
    %4784 = vmatpush1.msra.mxu0 %v4502
    %4785 = vmatprep.subr.mxu0 %v4509
    %4786 = vmatpush1.msra.mxu0 %v4508
    %4787 = vmatprep.subr.mxu0 %v4515
    %4788 = vmatpush1.msra.mxu0 %v4514
    %4789 = vmatprep.subr.mxu0 %v4521
    %4790 = vmatpush1.msra.mxu0 %v4520
    %4791 = vmatprep.subr.mxu0 %v4527
    %4792 = vmatpush1.msra.mxu0 %v4526
    %4793 = vmatprep.subr.mxu0 %v4533
    %4794 = vmatpush1.msra.mxu0 %v4532
    %4795 = vmatprep.subr.mxu0 %v4539
    %4796 = vmatpush1.msra.mxu0 %v4538
    %4797 = vmatprep.subr.mxu0 %v4545
    %4798 = vmatpush1.msra.mxu0 %v4544
    %4799 = vmatprep.subr.mxu0 %v4551
    %4800 = vmatpush1.msra.mxu0 %v4550
    %4801 = vmatprep.subr.mxu0 %v4557
    %4802 = vmatpush1.msra.mxu0 %v4556
    %4803 = vmatprep.subr.mxu0 %v4563
    %4804 = vmatpush1.msra.mxu0 %v4562
    %4805 = vmatprep.subr.mxu0 %v4569
    %4806 = vmatpush1.msra.mxu0 %v4568
    %4807 = vmatprep.subr.mxu0 %v4575
    %4808 = vmatpush1.msra.mxu0 %v4574
    %4809 = vmatprep.subr.mxu0 %v4581
    %4810 = vmatpush1.msra.mxu0 %v4580
    %4811 = vmatprep.subr.mxu0 %v4587
    %4812 = vmatpush1.msra.mxu0 %v4586
    %4813 = vmatprep.subr.mxu0 %v4593
    %4814 = vmatpush1.msra.mxu0 %v4592
    %4815 = vmatprep.subr.mxu0 %v4599
    %4816 = vmatpush1.msra.mxu0 %v4598
    %4817 = vmatprep.subr.mxu0 %v4605
    %4818 = vmatpush1.msra.mxu0 %v4604
    %4819 = vmatprep.subr.mxu0 %v4611
    %4820 = vmatpush1.msra.mxu0 %v4610
    %4821 = vmatprep.subr.mxu0 %v4617
    %4822 = vmatpush1.msra.mxu0 %v4616
    %4823 = vmatprep.subr.mxu0 %v4623
    %4824 = vmatpush1.msra.mxu0 %v4622
    %4825 = vmatprep.subr.mxu0 %v4629
    %4826 = vmatpush1.msra.mxu0 %v4628
    %4827 = vmatprep.subr.mxu0 %v4635
    %4828 = vmatpush1.msra.mxu0 %v4634
    %4829 = vmatprep.subr.mxu0 %v4641
    %4830 = vmatpush1.msra.mxu0 %v4640
    %4831 = vmatprep.subr.mxu0 %v4647
    %4832 = vmatpush1.msra.mxu0 %v4646
    %4833 = vmatprep.subr.mxu0 %v4653
    %4834 = vmatpush1.msra.mxu0 %v4652
    %4835 = vmatprep.subr.mxu0 %v4659
    %4836 = vmatpush1.msra.mxu0 %v4658
    %4837 = vmatprep.subr.mxu0 %v4665
    %4838 = vmatpush1.msra.mxu0 %v4664
    %4839 = vmatprep.subr.mxu0 %v4671
    %4840 = vmatpush1.msra.mxu0 %v4670
    %4841 = vmatprep.mubr.f32.mxu0 %v1197
    %4842 = vmatmul.mubr.f32.gmra.mrb[0].mxu0 %v1196
    %v4843 = vpop.f32.mrb[0].mxu0
    %v4844 = vadd.f32 %v4687, %v4843
    %v4845 = vpop.f32.mrb[0].mxu0
    %v4846 = vadd.f32 %v4691, %v4845
    %4847 = vdwg.mxu0
    %4848 = vmatprep.subr.mxu0 %v4487
    %4849 = vmatpush1.msra.mxu0 %v4486
    %4850 = vmatprep.subr.mxu0 %v4493
    %4851 = vmatpush1.msra.mxu0 %v4492
    %4852 = vmatprep.subr.mxu0 %v4499
    %4853 = vmatpush1.msra.mxu0 %v4498
    %4854 = vmatprep.subr.mxu0 %v4505
    %4855 = vmatpush1.msra.mxu0 %v4504
    %4856 = vmatprep.subr.mxu0 %v4511
    %4857 = vmatpush1.msra.mxu0 %v4510
    %4858 = vmatprep.subr.mxu0 %v4517
    %4859 = vmatpush1.msra.mxu0 %v4516
    %4860 = vmatprep.subr.mxu0 %v4523
    %4861 = vmatpush1.msra.mxu0 %v4522
    %4862 = vmatprep.subr.mxu0 %v4529
    %4863 = vmatpush1.msra.mxu0 %v4528
    %4864 = vmatprep.subr.mxu0 %v4535
    %4865 = vmatpush1.msra.mxu0 %v4534
    %4866 = vmatprep.subr.mxu0 %v4541
    %4867 = vmatpush1.msra.mxu0 %v4540
    %4868 = vmatprep.subr.mxu0 %v4547
    %4869 = vmatpush1.msra.mxu0 %v4546
    %4870 = vmatprep.subr.mxu0 %v4553
    %4871 = vmatpush1.msra.mxu0 %v4552
    %4872 = vmatprep.subr.mxu0 %v4559
    %4873 = vmatpush1.msra.mxu0 %v4558
    %4874 = vmatprep.subr.mxu0 %v4565
    %4875 = vmatpush1.msra.mxu0 %v4564
    %4876 = vmatprep.subr.mxu0 %v4571
    %4877 = vmatpush1.msra.mxu0 %v4570
    %4878 = vmatprep.subr.mxu0 %v4577
    %4879 = vmatpush1.msra.mxu0 %v4576
    %4880 = vmatprep.subr.mxu0 %v4583
    %4881 = vmatpush1.msra.mxu0 %v4582
    %4882 = vmatprep.subr.mxu0 %v4589
    %4883 = vmatpush1.msra.mxu0 %v4588
    %4884 = vmatprep.subr.mxu0 %v4595
    %4885 = vmatpush1.msra.mxu0 %v4594
    %4886 = vmatprep.subr.mxu0 %v4601
    %4887 = vmatpush1.msra.mxu0 %v4600
    %4888 = vmatprep.subr.mxu0 %v4607
    %4889 = vmatpush1.msra.mxu0 %v4606
    %4890 = vmatprep.subr.mxu0 %v4613
    %4891 = vmatpush1.msra.mxu0 %v4612
    %4892 = vmatprep.subr.mxu0 %v4619
    %4893 = vmatpush1.msra.mxu0 %v4618
    %4894 = vmatprep.subr.mxu0 %v4625
    %4895 = vmatpush1.msra.mxu0 %v4624
    %4896 = vmatprep.subr.mxu0 %v4631
    %4897 = vmatpush1.msra.mxu0 %v4630
    %4898 = vmatprep.subr.mxu0 %v4637
    %4899 = vmatpush1.msra.mxu0 %v4636
    %4900 = vmatprep.subr.mxu0 %v4643
    %4901 = vmatpush1.msra.mxu0 %v4642
    %4902 = vmatprep.subr.mxu0 %v4649
    %4903 = vmatpush1.msra.mxu0 %v4648
    %4904 = vmatprep.subr.mxu0 %v4655
    %4905 = vmatpush1.msra.mxu0 %v4654
    %4906 = vmatprep.subr.mxu0 %v4661
    %4907 = vmatpush1.msra.mxu0 %v4660
    %4908 = vmatprep.subr.mxu0 %v4667
    %4909 = vmatpush1.msra.mxu0 %v4666
    %4910 = vmatprep.subr.mxu0 %v4673
    %4911 = vmatpush1.msra.mxu0 %v4672
    %4912 = vmatprep.mubr.f32.mxu0 %v1197
    %4913 = vmatmul.mubr.f32.gmra.mrb[0].mxu0 %v1196
    %v4914 = vpop.f32.mrb[0].mxu0
    %v4915 = vadd.f32 %v4695, %v4914
    %v4916 = vpop.f32.mrb[0].mxu0
    %v4917 = vadd.f32 %v4699, %v4916
    %4918 = vdwg.mxu0
    %v4919 = vadd.f32 %v4476, %v4773
    %v4920 = vadd.f32 %v4477, %v4775
    %v4921 = vsub.f32 0.0, %v4919
    %v4922 = vsub.f32 0.0, %v4920
    %v4923 = vmul.f32 %v4921, 1.442695
    %v4924 = vpow.pop %v4923
    %v4925 = vmul.f32 %v4922, 1.442695
    %v4926 = vpow.pop %v4925
    %v4927 = vadd.f32 %v4924, 1.0
    %v4928 = vadd.f32 %v4926, 1.0
    %v4929 = vrcp.pop %v4927
    %v4930 = vmul.f32 1.0, %v4929
    %v4931 = vrcp.pop %v4928
    %v4932 = vmul.f32 1.0, %v4931
    %v4933 = vadd.f32 %v4478, %v4844
    %v4934 = vadd.f32 %v4479, %v4846
    %v4935 = vsub.f32 0.0, %v4933
    %v4936 = vsub.f32 0.0, %v4934
    %v4937 = vmul.f32 %v4935, 1.442695
    %v4938 = vpow.pop %v4937
    %v4939 = vmul.f32 %v4936, 1.442695
    %v4940 = vpow.pop %v4939
    %v4941 = vadd.f32 %v4938, 1.0
    %v4942 = vadd.f32 %v4940, 1.0
    %v4943 = vrcp.pop %v4941
    %v4944 = vmul.f32 1.0, %v4943
    %v4945 = vrcp.pop %v4942
    %v4946 = vmul.f32 1.0, %v4945
    %v4947 = vmul.f32 %v4930, %v4915
    %v4948 = vmul.f32 %v4932, %v4917
    %v4949 = vadd.f32 %v4480, %v4947
    %v4950 = vadd.f32 %v4481, %v4948
    %v4951 = vtanh.pop %v4949
    %v4952 = vtanh.pop %v4950
    %v4953 = vsub.f32 1.0, %v4944
    %v4954 = vsub.f32 1.0, %v4946
    %v4955 = vmul.f32 %v4953, %v4951
    %v4956 = vmul.f32 %v4954, %v4952
    %v4957 = vmul.f32 %v4944, %v1196
    %v4958 = vmul.f32 %v4946, %v1197
    %v4959 = vadd.f32 %v4955, %v4957
    %v4960 = vadd.f32 %v4956, %v4958
    %v4961 = vld [vmem:[%s55] sm:$0xff]
    %v4962 = vld [vmem:[%s55 + $0x8] sm:$0xff]
    %v4963 = vld [vmem:[%s55 + $0x10] sm:$0xff]
    %v4964 = vld [vmem:[%s55 + $0x18] sm:$0xff]
    %v4965 = vld [vmem:[%s55 + $0x20] sm:$0xff]
    %v4966 = vld [vmem:[%s55 + $0x28] sm:$0xff]
    %v4967 = vld [vmem:[%s55 + $0x30] sm:$0xff]
    %v4968 = vld [vmem:[%s55 + $0x38] sm:$0xff]
    %v4969 = vld [vmem:[%s55 + $0x40] sm:$0xff]
    %v4970 = vld [vmem:[%s55 + $0x48] sm:$0xff]
    %v4971 = vld [vmem:[%s55 + $0x50] sm:$0xff]
    %v4972 = vld [vmem:[%s55 + $0x58] sm:$0xff]
    %v4973 = vld [vmem:[%s55 + $0x60] sm:$0xff]
    %v4974 = vld [vmem:[%s55 + $0x68] sm:$0xff]
    %v4975 = vld [vmem:[%s55 + $0x70] sm:$0xff]
    %v4976 = vld [vmem:[%s55 + $0x78] sm:$0xff]
    %v4977 = vld [vmem:[%s55 + $0x80] sm:$0xff]
    %v4978 = vld [vmem:[%s55 + $0x88] sm:$0xff]
    %v4979 = vld [vmem:[%s55 + $0x90] sm:$0xff]
    %v4980 = vld [vmem:[%s55 + $0x98] sm:$0xff]
    %v4981 = vld [vmem:[%s55 + $0xa0] sm:$0xff]
    %v4982 = vld [vmem:[%s55 + $0xa8] sm:$0xff]
    %v4983 = vld [vmem:[%s55 + $0xb0] sm:$0xff]
    %v4984 = vld [vmem:[%s55 + $0xb8] sm:$0xff]
    %v4985 = vld [vmem:[%s55 + $0xc0] sm:$0xff]
    %v4986 = vld [vmem:[%s55 + $0xc8] sm:$0xff]
    %v4987 = vld [vmem:[%s55 + $0xd0] sm:$0xff]
    %v4988 = vld [vmem:[%s55 + $0xd8] sm:$0xff]
    %v4989 = vld [vmem:[%s55 + $0xe0] sm:$0xff]
    %v4990 = vld [vmem:[%s55 + $0xe8] sm:$0xff]
    %v4991 = vld [vmem:[%s55 + $0xf0] sm:$0xff]
    %v4992 = vld [vmem:[%s55 + $0xf8] sm:$0xff]
    %v4993 = vld [vmem:[%s55 + $0x100] sm:$0xff]
    %v4994 = vld [vmem:[%s55 + $0x108] sm:$0xff]
    %v4995 = vld [vmem:[%s55 + $0x110] sm:$0xff]
    %v4996 = vld [vmem:[%s55 + $0x118] sm:$0xff]
    %v4997 = vld [vmem:[%s55 + $0x120] sm:$0xff]
    %v4998 = vld [vmem:[%s55 + $0x128] sm:$0xff]
    %v4999 = vld [vmem:[%s55 + $0x130] sm:$0xff]
    %v5000 = vld [vmem:[%s55 + $0x138] sm:$0xff]
    %v5001 = vld [vmem:[%s55 + $0x140] sm:$0xff]
    %v5002 = vld [vmem:[%s55 + $0x148] sm:$0xff]
    %v5003 = vld [vmem:[%s55 + $0x150] sm:$0xff]
    %v5004 = vld [vmem:[%s55 + $0x158] sm:$0xff]
    %v5005 = vld [vmem:[%s55 + $0x160] sm:$0xff]
    %v5006 = vld [vmem:[%s55 + $0x168] sm:$0xff]
    %v5007 = vld [vmem:[%s55 + $0x170] sm:$0xff]
    %v5008 = vld [vmem:[%s55 + $0x178] sm:$0xff]
    %v5009 = vld [vmem:[%s55 + $0x180] sm:$0xff]
    %v5010 = vld [vmem:[%s55 + $0x188] sm:$0xff]
    %v5011 = vld [vmem:[%s55 + $0x190] sm:$0xff]
    %v5012 = vld [vmem:[%s55 + $0x198] sm:$0xff]
    %v5013 = vld [vmem:[%s55 + $0x1a0] sm:$0xff]
    %v5014 = vld [vmem:[%s55 + $0x1a8] sm:$0xff]
    %v5015 = vld [vmem:[%s55 + $0x1b0] sm:$0xff]
    %v5016 = vld [vmem:[%s55 + $0x1b8] sm:$0xff]
    %v5017 = vld [vmem:[%s55 + $0x1c0] sm:$0xff]
    %v5018 = vld [vmem:[%s55 + $0x1c8] sm:$0xff]
    %v5019 = vld [vmem:[%s55 + $0x1d0] sm:$0xff]
    %v5020 = vld [vmem:[%s55 + $0x1d8] sm:$0xff]
    %v5021 = vld [vmem:[%s55 + $0x1e0] sm:$0xff]
    %v5022 = vld [vmem:[%s55 + $0x1e8] sm:$0xff]
    %v5023 = vld [vmem:[%s55 + $0x1f0] sm:$0xff]
    %v5024 = vld [vmem:[%s55 + $0x1f8] sm:$0xff]
    %5025 = vmatprep.subr.mxu0 %v4962
    %5026 = vmatpush1.msra.mxu0 %v4961
    %5027 = vmatprep.subr.mxu0 %v4964
    %5028 = vmatpush1.msra.mxu0 %v4963
    %5029 = vmatprep.subr.mxu0 %v4966
    %5030 = vmatpush1.msra.mxu0 %v4965
    %5031 = vmatprep.subr.mxu0 %v4968
    %5032 = vmatpush1.msra.mxu0 %v4967
    %5033 = vmatprep.subr.mxu0 %v4970
    %5034 = vmatpush1.msra.mxu0 %v4969
    %5035 = vmatprep.subr.mxu0 %v4972
    %5036 = vmatpush1.msra.mxu0 %v4971
    %5037 = vmatprep.subr.mxu0 %v4974
    %5038 = vmatpush1.msra.mxu0 %v4973
    %5039 = vmatprep.subr.mxu0 %v4976
    %5040 = vmatpush1.msra.mxu0 %v4975
    %5041 = vmatprep.subr.mxu0 %v4978
    %5042 = vmatpush1.msra.mxu0 %v4977
    %5043 = vmatprep.subr.mxu0 %v4980
    %5044 = vmatpush1.msra.mxu0 %v4979
    %5045 = vmatprep.subr.mxu0 %v4982
    %5046 = vmatpush1.msra.mxu0 %v4981
    %5047 = vmatprep.subr.mxu0 %v4984
    %5048 = vmatpush1.msra.mxu0 %v4983
    %5049 = vmatprep.subr.mxu0 %v4986
    %5050 = vmatpush1.msra.mxu0 %v4985
    %5051 = vmatprep.subr.mxu0 %v4988
    %5052 = vmatpush1.msra.mxu0 %v4987
    %5053 = vmatprep.subr.mxu0 %v4990
    %5054 = vmatpush1.msra.mxu0 %v4989
    %5055 = vmatprep.subr.mxu0 %v4992
    %5056 = vmatpush1.msra.mxu0 %v4991
    %5057 = vmatprep.subr.mxu0 %v4994
    %5058 = vmatpush1.msra.mxu0 %v4993
    %5059 = vmatprep.subr.mxu0 %v4996
    %5060 = vmatpush1.msra.mxu0 %v4995
    %5061 = vmatprep.subr.mxu0 %v4998
    %5062 = vmatpush1.msra.mxu0 %v4997
    %5063 = vmatprep.subr.mxu0 %v5000
    %5064 = vmatpush1.msra.mxu0 %v4999
    %5065 = vmatprep.subr.mxu0 %v5002
    %5066 = vmatpush1.msra.mxu0 %v5001
    %5067 = vmatprep.subr.mxu0 %v5004
    %5068 = vmatpush1.msra.mxu0 %v5003
    %5069 = vmatprep.subr.mxu0 %v5006
    %5070 = vmatpush1.msra.mxu0 %v5005
    %5071 = vmatprep.subr.mxu0 %v5008
    %5072 = vmatpush1.msra.mxu0 %v5007
    %5073 = vmatprep.subr.mxu0 %v5010
    %5074 = vmatpush1.msra.mxu0 %v5009
    %5075 = vmatprep.subr.mxu0 %v5012
    %5076 = vmatpush1.msra.mxu0 %v5011
    %5077 = vmatprep.subr.mxu0 %v5014
    %5078 = vmatpush1.msra.mxu0 %v5013
    %5079 = vmatprep.subr.mxu0 %v5016
    %5080 = vmatpush1.msra.mxu0 %v5015
    %5081 = vmatprep.subr.mxu0 %v5018
    %5082 = vmatpush1.msra.mxu0 %v5017
    %5083 = vmatprep.subr.mxu0 %v5020
    %5084 = vmatpush1.msra.mxu0 %v5019
    %5085 = vmatprep.subr.mxu0 %v5022
    %5086 = vmatpush1.msra.mxu0 %v5021
    %5087 = vmatprep.subr.mxu0 %v5024
    %5088 = vmatpush1.msra.mxu0 %v5023
    %5089 = vmatprep.mubr.f32.mxu0 %v4960
    %5090 = vmatmul.mubr.f32.gmra.mrb[0].mxu0 %v4959
    %v5091 = vpop.f32.mrb[0].mxu0
    %v5092 = vadd.f32 0.0, %v5091
    %v5093 = vpop.f32.mrb[0].mxu0
    %v5094 = vadd.f32 0.0, %v5093
    %5095 = vdwg.mxu0
    %v5096 = vld [vmem:[%s57] sm:$0xff]
    %v5097 = vld [vmem:[%s57 + $0x8] sm:$0xff]
    %v5098 = vld [vmem:[%s59] sm:$0xff]
    %v5099 = vld [vmem:[%s59 + $0x8] sm:$0xff]
    %v5100 = vld [vmem:[%s59 + $0x10] sm:$0xff]
    %v5101 = vld [vmem:[%s59 + $0x18] sm:$0xff]
    %5102 = vmatprep.subr.mxu0 %v5099
    %5103 = vmatpush1.msra.mxu0 %v5098
    %5104 = vmatprep.subr.mxu0 %v5101
    %5105 = vmatpush1.msra.mxu0 %v5100
    %5106 = vmatprep.subr.mxu0 0.0
    %5107 = vmatpush1.msra.mxu0 0.0
    %5108 = vmatprep.subr.mxu0 0.0
    %5109 = vmatpush1.msra.mxu0 0.0
    %5110 = vmatprep.subr.mxu0 0.0
    %5111 = vmatpush1.msra.mxu0 0.0
    %5112 = vmatprep.subr.mxu0 0.0
    %5113 = vmatpush1.msra.mxu0 0.0
    %5114 = vmatprep.subr.mxu0 0.0
    %5115 = vmatpush1.msra.mxu0 0.0
    %5116 = vmatprep.subr.mxu0 0.0
    %5117 = vmatpush1.msra.mxu0 0.0
    %5118 = vmatprep.subr.mxu0 0.0
    %5119 = vmatpush1.msra.mxu0 0.0
    %5120 = vmatprep.subr.mxu0 0.0
    %5121 = vmatpush1.msra.mxu0 0.0
    %5122 = vmatprep.subr.mxu0 0.0
    %5123 = vmatpush1.msra.mxu0 0.0
    %5124 = vmatprep.subr.mxu0 0.0
    %5125 = vmatpush1.msra.mxu0 0.0
    %5126 = vmatprep.subr.mxu0 0.0
    %5127 = vmatpush1.msra.mxu0 0.0
    %5128 = vmatprep.subr.mxu0 0.0
    %5129 = vmatpush1.msra.mxu0 0.0
    %5130 = vmatprep.subr.mxu0 0.0
    %5131 = vmatpush1.msra.mxu0 0.0
    %5132 = vmatprep.subr.mxu0 0.0
    %5133 = vmatpush1.msra.mxu0 0.0
    %5134 = vmatprep.subr.mxu0 0.0
    %5135 = vmatpush1.msra.mxu0 0.0
    %5136 = vmatprep.subr.mxu0 0.0
    %5137 = vmatpush1.msra.mxu0 0.0
    %5138 = vmatprep.subr.mxu0 0.0
    %5139 = vmatpush1.msra.mxu0 0.0
    %5140 = vmatprep.subr.mxu0 0.0
    %5141 = vmatpush1.msra.mxu0 0.0
    %5142 = vmatprep.subr.mxu0 0.0
    %5143 = vmatpush1.msra.mxu0 0.0
    %5144 = vmatprep.subr.mxu0 0.0
    %5145 = vmatpush1.msra.mxu0 0.0
    %5146 = vmatprep.subr.mxu0 0.0
    %5147 = vmatpush1.msra.mxu0 0.0
    %5148 = vmatprep.subr.mxu0 0.0
    %5149 = vmatpush1.msra.mxu0 0.0
    %5150 = vmatprep.subr.mxu0 0.0
    %5151 = vmatpush1.msra.mxu0 0.0
    %5152 = vmatprep.subr.mxu0 0.0
    %5153 = vmatpush1.msra.mxu0 0.0
    %5154 = vmatprep.subr.mxu0 0.0
    %5155 = vmatpush1.msra.mxu0 0.0
    %5156 = vmatprep.subr.mxu0 0.0
    %5157 = vmatpush1.msra.mxu0 0.0
    %5158 = vmatprep.subr.mxu0 0.0
    %5159 = vmatpush1.msra.mxu0 0.0
    %5160 = vmatprep.subr.mxu0 0.0
    %5161 = vmatpush1.msra.mxu0 0.0
    %5162 = vmatprep.subr.mxu0 0.0
    %5163 = vmatpush1.msra.mxu0 0.0
    %5164 = vmatprep.subr.mxu0 0.0
    %5165 = vmatpush1.msra.mxu0 0.0
    %5166 = vmatprep.mubr.f32.mxu0 0.0
    %5167 = vmatmul.mubr.f32.gmra.mrb[0].mxu0 %v4003
    %v5168 = vpop.f32.mrb[0].mxu0
    %v5169 = vadd.f32 0.0, %v5168
    %v5170 = vpop.f32.mrb[0].mxu0
    %v5171 = vadd.f32 0.0, %v5170
    %5172 = vdwg.mxu0
    %5173 = vmatprep.subr.mxu0 %v5097
    %5174 = vmatpush1.msra.mxu0 %v5096
    %5175 = vmatprep.subr.mxu0 0.0
    %5176 = vmatpush1.msra.mxu0 0.0
    %5177 = vmatprep.subr.mxu0 0.0
    %5178 = vmatpush1.msra.mxu0 0.0
    %5179 = vmatprep.subr.mxu0 0.0
    %5180 = vmatpush1.msra.mxu0 0.0
    %5181 = vmatprep.subr.mxu0 0.0
    %5182 = vmatpush1.msra.mxu0 0.0
    %5183 = vmatprep.subr.mxu0 0.0
    %5184 = vmatpush1.msra.mxu0 0.0
    %5185 = vmatprep.subr.mxu0 0.0
    %5186 = vmatpush1.msra.mxu0 0.0
    %5187 = vmatprep.subr.mxu0 0.0
    %5188 = vmatpush1.msra.mxu0 0.0
    %5189 = vmatprep.subr.mxu0 0.0
    %5190 = vmatpush1.msra.mxu0 0.0
    %5191 = vmatprep.subr.mxu0 0.0
    %5192 = vmatpush1.msra.mxu0 0.0
    %5193 = vmatprep.subr.mxu0 0.0
    %5194 = vmatpush1.msra.mxu0 0.0
    %5195 = vmatprep.subr.mxu0 0.0
    %5196 = vmatpush1.msra.mxu0 0.0
    %5197 = vmatprep.subr.mxu0 0.0
    %5198 = vmatpush1.msra.mxu0 0.0
    %5199 = vmatprep.subr.mxu0 0.0
    %5200 = vmatpush1.msra.mxu0 0.0
    %5201 = vmatprep.subr.mxu0 0.0
    %5202 = vmatpush1.msra.mxu0 0.0
    %5203 = vmatprep.subr.mxu0 0.0
    %5204 = vmatpush1.msra.mxu0 0.0
    %5205 = vmatprep.subr.mxu0 0.0
    %5206 = vmatpush1.msra.mxu0 0.0
    %5207 = vmatprep.subr.mxu0 0.0
    %5208 = vmatpush1.msra.mxu0 0.0
    %5209 = vmatprep.subr.mxu0 0.0
    %5210 = vmatpush1.msra.mxu0 0.0
    %5211 = vmatprep.subr.mxu0 0.0
    %5212 = vmatpush1.msra.mxu0 0.0
    %5213 = vmatprep.subr.mxu0 0.0
    %5214 = vmatpush1.msra.mxu0 0.0
    %5215 = vmatprep.subr.mxu0 0.0
    %5216 = vmatpush1.msra.mxu0 0.0
    %5217 = vmatprep.subr.mxu0 0.0
    %5218 = vmatpush1.msra.mxu0 0.0
    %5219 = vmatprep.subr.mxu0 0.0
    %5220 = vmatpush1.msra.mxu0 0.0
    %5221 = vmatprep.subr.mxu0 0.0
    %5222 = vmatpush1.msra.mxu0 0.0
    %5223 = vmatprep.subr.mxu0 0.0
    %5224 = vmatpush1.msra.mxu0 0.0
    %5225 = vmatprep.subr.mxu0 0.0
    %5226 = vmatpush1.msra.mxu0 0.0
    %5227 = vmatprep.subr.mxu0 0.0
    %5228 = vmatpush1.msra.mxu0 0.0
    %5229 = vmatprep.subr.mxu0 0.0
    %5230 = vmatpush1.msra.mxu0 0.0
    %5231 = vmatprep.subr.mxu0 0.0
    %5232 = vmatpush1.msra.mxu0 0.0
    %5233 = vmatprep.subr.mxu0 0.0
    %5234 = vmatpush1.msra.mxu0 0.0
    %5235 = vmatprep.subr.mxu0 0.0
    %5236 = vmatpush1.msra.mxu0 0.0
    %5237 = vmatprep.mubr.f32.mxu0 0.0
    %5238 = vmatmul.mubr.f32.gmra.mrb[0].mxu0 %v4229
    %v5239 = vpop.f32.mrb[0].mxu0
    %v5240 = vadd.f32 %v5169, %v5239
    %v5241 = vpop.f32.mrb[0].mxu0
    %v5242 = vadd.f32 %v5171, %v5241
    %5243 = vdwg.mxu0
    %v5244 = vadd.f32 %v266, %v5092
    %v5245 = vadd.f32 %v268, %v5094
    %v5246 = vadd.f32 %v5244, %v5240
    %v5247 = vadd.f32 %v5245, %v5242
    %v5248 = vmax.f32 %v5246, %v5247
    %v5249 = vld [vmem:[%s61] sm:$0xff]
    %v5250 = vld [vmem:[%s61 + $0x8] sm:$0xff]
    %v5251 = vld [vmem:[%s61 + $0x10] sm:$0xff]
    %v5252 = vld [vmem:[%s61 + $0x18] sm:$0xff]
    %v5253 = vld [vmem:[%s61 + $0x20] sm:$0xff]
    %v5254 = vld [vmem:[%s61 + $0x28] sm:$0xff]
    %v5255 = vld [vmem:[%s61 + $0x30] sm:$0xff]
    %v5256 = vld [vmem:[%s61 + $0x38] sm:$0xff]
    %v5257 = vld [vmem:[%s61 + $0x40] sm:$0xff]
    %v5258 = vld [vmem:[%s61 + $0x48] sm:$0xff]
    %v5259 = vld [vmem:[%s61 + $0x50] sm:$0xff]
    %v5260 = vld [vmem:[%s61 + $0x58] sm:$0xff]
    %v5261 = vld [vmem:[%s61 + $0x60] sm:$0xff]
    %v5262 = vld [vmem:[%s61 + $0x68] sm:$0xff]
    %v5263 = vld [vmem:[%s61 + $0x70] sm:$0xff]
    %v5264 = vld [vmem:[%s61 + $0x78] sm:$0xff]
    %5265 = vmatprep.subr.mxu0 0.0
    %5266 = vmatpush1.msra.mxu0 %v5249
    %5267 = vmatprep.subr.mxu0 0.0
    %5268 = vmatpush1.msra.mxu0 %v5250
    %5269 = vmatprep.subr.mxu0 0.0
    %5270 = vmatpush1.msra.mxu0 %v5251
    %5271 = vmatprep.subr.mxu0 0.0
    %5272 = vmatpush1.msra.mxu0 %v5252
    %5273 = vmatprep.subr.mxu0 0.0
    %5274 = vmatpush1.msra.mxu0 %v5253
    %5275 = vmatprep.subr.mxu0 0.0
    %5276 = vmatpush1.msra.mxu0 %v5254
    %5277 = vmatprep.subr.mxu0 0.0
    %5278 = vmatpush1.msra.mxu0 %v5255
    %5279 = vmatprep.subr.mxu0 0.0
    %5280 = vmatpush1.msra.mxu0 %v5256
    %5281 = vmatprep.subr.mxu0 0.0
    %5282 = vmatpush1.msra.mxu0 %v5257
    %5283 = vmatprep.subr.mxu0 0.0
    %5284 = vmatpush1.msra.mxu0 %v5258
    %5285 = vmatprep.subr.mxu0 0.0
    %5286 = vmatpush1.msra.mxu0 %v5259
    %5287 = vmatprep.subr.mxu0 0.0
    %5288 = vmatpush1.msra.mxu0 %v5260
    %5289 = vmatprep.subr.mxu0 0.0
    %5290 = vmatpush1.msra.mxu0 %v5261
    %5291 = vmatprep.subr.mxu0 0.0
    %5292 = vmatpush1.msra.mxu0 %v5262
    %5293 = vmatprep.subr.mxu0 0.0
    %5294 = vmatpush1.msra.mxu0 %v5263
    %5295 = vmatprep.subr.mxu0 0.0
    %5296 = vmatpush1.msra.mxu0 %v5264
    %5297 = vmatprep.subr.mxu0 0.0
    %5298 = vmatpush1.msra.mxu0 0.0
    %5299 = vmatprep.subr.mxu0 0.0
    %5300 = vmatpush1.msra.mxu0 0.0
    %5301 = vmatprep.subr.mxu0 0.0
    %5302 = vmatpush1.msra.mxu0 0.0
    %5303 = vmatprep.subr.mxu0 0.0
    %5304 = vmatpush1.msra.mxu0 0.0
    %5305 = vmatprep.subr.mxu0 0.0
    %5306 = vmatpush1.msra.mxu0 0.0
    %5307 = vmatprep.subr.mxu0 0.0
    %5308 = vmatpush1.msra.mxu0 0.0
    %5309 = vmatprep.subr.mxu0 0.0
    %5310 = vmatpush1.msra.mxu0 0.0
    %5311 = vmatprep.subr.mxu0 0.0
    %5312 = vmatpush1.msra.mxu0 0.0
    %5313 = vmatprep.subr.mxu0 0.0
    %5314 = vmatpush1.msra.mxu0 0.0
    %5315 = vmatprep.subr.mxu0 0.0
    %5316 = vmatpush1.msra.mxu0 0.0
    %5317 = vmatprep.subr.mxu0 0.0
    %5318 = vmatpush1.msra.mxu0 0.0
    %5319 = vmatprep.subr.mxu0 0.0
    %5320 = vmatpush1.msra.mxu0 0.0
    %5321 = vmatprep.subr.mxu0 0.0
    %5322 = vmatpush1.msra.mxu0 0.0
    %5323 = vmatprep.subr.mxu0 0.0
    %5324 = vmatpush1.msra.mxu0 0.0
    %5325 = vmatprep.subr.mxu0 0.0
    %5326 = vmatpush1.msra.mxu0 0.0
    %5327 = vmatprep.subr.mxu0 0.0
    %5328 = vmatpush1.msra.mxu0 0.0
    %5329 = vmatprep.mubr.f32.mxu0 0.0
    %5330 = vmatmul.mubr.f32.gmra.mrb[0].mxu0 %v5248
    %v5331 = vpop.f32.mrb[0].mxu0
    %v5332 = vadd.f32 0.0, %v5331
    %v5333 = vpop.f32.mrb[0].mxu0
    %5334 = vdwg.mxu0
    %5335 = vst [vmem:[#allocation5] sm:$0x3] %v5332
    %v5338 = vcombine.low %v4959, %v4960
    %v5340 = vunpack.c.l.s4 1983009808
    %v5341 = vunpack.c.0.s8 %v5340
    %v5342 = vlaneseq
    %v5343 = vshrl.u32 %v5342, 7
    %v5344 = vsub.s32 %v5341, %v5343
    %v5345 = vrot.slane %v5338, %v5344
    %5347 = vst [vmem:[#allocation6] sm:$0xf] %v5345
    %v5348 = vsel %vm2150, %v2271, %v2262
    %5350 = vst.msk [vmem:[#allocation8] sm:$0x3] %vm2153, %v5348
    %v5351 = vsel %vm2150, %v3930, %v3891
    %5353 = vst.msk [vmem:[#allocation9] sm:$0x3] %vm3546, %v5351
    // Predicated region
    $region130: #{decoder_step_pallas.1} parent=1 // pred_check
      _
    $region131: #{decoder_step_pallas.1} parent=1 // pred_check_branch
      %5355 = sbr.rel (0) target = $region133
    $region132: #{decoder_step_pallas.1} parent=1 // pred_region
      %s5357 = ssub.s32 32, 32
      %5358 = vsyncadd [#allocation3], %s5357
      %s5360 = sshll.u32 [#allocation5], 4
      %s5361 = int_to_ptr.vmem [resolvable:$true] %s5360
      %5363 = dma.vmem_to_hbm [thread:$0]  %s5361, 32, %s63, [#allocation3]
    $region133: #{decoder_step_pallas.1} parent=1 // pred_fallthru
      _
    // Predicated region
    $region134: #{decoder_step_pallas.1} parent=1 // pred_check
      _
    $region135: #{decoder_step_pallas.1} parent=1 // pred_check_branch
      %5365 = sbr.rel (0) target = $region137
    $region136: #{decoder_step_pallas.1} parent=1 // pred_region
      %s5367 = ssub.s32 64, 64
      %5368 = vsyncadd [#allocation7], %s5367
      %s5370 = sshll.u32 [#allocation6], 4
      %s5371 = int_to_ptr.vmem [resolvable:$true] %s5370
      %5373 = dma.vmem_to_hbm [thread:$0]  %s5371, 64, %s65, [#allocation7]
    $region137: #{decoder_step_pallas.1} parent=1 // pred_fallthru
      _
    // Predicated region
    $region138: #{decoder_step_pallas.1} parent=1 // pred_check
      _
    $region139: #{decoder_step_pallas.1} parent=1 // pred_check_branch
      %5375 = sbr.rel (0) target = $region141
    $region140: #{decoder_step_pallas.1} parent=1 // pred_region
      %s5377 = ssub.s32 32, 32
      %5378 = vsyncadd [#allocation7], %s5377
      %s5380 = sshll.u32 [#allocation8], 4
      %s5381 = int_to_ptr.vmem [resolvable:$true] %s5380
      %5383 = dma.vmem_to_hbm [thread:$0]  %s5381, 32, %s67, [#allocation7]
    $region141: #{decoder_step_pallas.1} parent=1 // pred_fallthru
      _
    // Predicated region
    $region142: #{decoder_step_pallas.1} parent=1 // pred_check
      _
    $region143: #{decoder_step_pallas.1} parent=1 // pred_check_branch
      %5385 = sbr.rel (0) target = $region145
    $region144: #{decoder_step_pallas.1} parent=1 // pred_region
      %s5387 = ssub.s32 32, 32
      %5388 = vsyncadd [#allocation10], %s5387
      %s5390 = sshll.u32 [#allocation9], 4
      %s5391 = int_to_ptr.vmem [resolvable:$true] %s5390
      %5393 = dma.vmem_to_hbm [thread:$0]  %s5391, 32, %s69, [#allocation10]
    $region145: #{decoder_step_pallas.1} parent=1 // pred_fallthru
      _
    // Predicated region
    $region146: #{decoder_step_pallas.1} parent=1 // pred_check
      _
    $region147: #{decoder_step_pallas.1} parent=1 // pred_check_branch
      %5395 = sbr.rel (0) target = $region149
    $region148: #{decoder_step_pallas.1} parent=1 // pred_region
      %5396 = dma.done [#allocation3], 32
    $region149: #{decoder_step_pallas.1} parent=1 // pred_fallthru
      _
    // Predicated region
    $region150: #{decoder_step_pallas.1} parent=1 // pred_check
      _
    $region151: #{decoder_step_pallas.1} parent=1 // pred_check_branch
      %5398 = sbr.rel (0) target = $region153
    $region152: #{decoder_step_pallas.1} parent=1 // pred_region
      %5399 = dma.done [#allocation7], 64
    $region153: #{decoder_step_pallas.1} parent=1 // pred_fallthru
      _
    // Predicated region
    $region154: #{decoder_step_pallas.1} parent=1 // pred_check
      _
    $region155: #{decoder_step_pallas.1} parent=1 // pred_check_branch
      %5401 = sbr.rel (0) target = $region157
    $region156: #{decoder_step_pallas.1} parent=1 // pred_region
      %5402 = dma.done [#allocation7], 32
    $region157: #{decoder_step_pallas.1} parent=1 // pred_fallthru
      _
    // Predicated region
    $region158: #{decoder_step_pallas.1} parent=1 // pred_check
      _
    $region159: #{decoder_step_pallas.1} parent=1 // pred_check_branch
      %5404 = sbr.rel (0) target = $region161
    $region160: #{decoder_step_pallas.1} parent=1 // pred_region
      %5405 = dma.done [#allocation10], 32
    $region161: #{decoder_step_pallas.1} parent=1 // pred_fallthru
      _
    %5406 = vsyncpa [#allocation3], 1
    %5407 = vsyncpa [#allocation7], 1
    %5408 = vsyncpa [#allocation10], 1
    %5409 = vsyncpa [#allocation4], 1

</llo_original>
